<compile_context>
chip_gen: v7x
topology: tpu7x:2x2x1
jax: 0.10.0
libtpu: 0.0.40
codegen_flags: <defaults>
</compile_context>

<pallas_src>
from functools import partial

import jax
import jax.numpy as jnp
from jax import lax
from jax.experimental import pallas as pl
from jax.experimental.pallas import tpu as pltpu

EPS = 1e-5          # nn.InstanceNorm3d default (affine=False -> no scale/shift)
NEG_SLOPE = 0.2     # nn.LeakyReLU(0.2)
LANE = 128


def _round_up(x, m):
    return (x + m - 1) // m * m


def _dense_layer_kernel(x_ref, w_ref, mask_ref, out_ref, col_ref, *,
                        sp_pad, off0_pad, shifts, inv_count, eps,
                        negative_slope):
    """One dense layer: Conv3d(k=3, p=1) + InstanceNorm3d + LeakyReLU.

    x_ref    : (1, Cin, Sp_ext) f32  -- lane-extended, padded-flat input
    w_ref    : (TC, 27*Cin)     f32  -- im2col-packed weights (tap-major)
    mask_ref : (1, Sp_pad)      f32  -- 1 at interior voxels, 0 at halo / lane pad
    out_ref  : (1, TC, Sp_ext)  f32  -- lane-extended output (zero margins)
    col_ref  : (27*Cin, Sp_pad) f32  -- im2col VMEM scratch (persists over grid)
    """
    cin = x_ref.shape[1]
    tc = out_ref.shape[1]

    # ---- im2col fill: once per batch index, reused across Cout tiles.
    @pl.when(pl.program_id(1) == 0)
    def _():
        xv = x_ref[0]                                       # (Cin, Sp_ext)
        for o, start in enumerate(shifts):                  # 27 static windows
            col_ref[o * cin:(o + 1) * cin, :] = xv[:, start:start + sp_pad]

    # ---- Conv3d as ONE MXU matmul with K = 27*Cin (accumulation on the MXU).
    y = jnp.dot(w_ref[...], col_ref[...],
                preferred_element_type=jnp.float32)          # (TC, Sp_pad)

    # ---- InstanceNorm3d (affine=False, biased var): two-pass stats over the
    #      interior voxels only (mask zeroes halo + lane padding).
    mask = mask_ref[...]                                     # (1, Sp_pad)
    mean = jnp.sum(y * mask, axis=1, keepdims=True) * inv_count
    centered = (y - mean) * mask
    var = jnp.sum(centered * centered, axis=1, keepdims=True) * inv_count
    yn = (y - mean) * lax.rsqrt(var + eps)

    # ---- LeakyReLU, re-zero halo/lane padding, emit a lane-extended output
    #      (three lane-dense stores: 128 | Sp_pad | 128 lanes).
    act = jnp.where(yn >= 0.0, yn, negative_slope * yn) * mask
    zeros_margin = jnp.zeros((tc, off0_pad), jnp.float32)
    out_ref[0, :, 0:off0_pad] = zeros_margin
    out_ref[0, :, off0_pad:off0_pad + sp_pad] = act
    out_ref[0, :, off0_pad + sp_pad:] = zeros_margin


def _dense_layer(inp_ext, weight, mask, *, spatial_dims, sp_pad, off0_pad,
                 eps, negative_slope):
    """inp_ext: (N, Cin, Sp_ext) lane-extended padded-flat features.
    Returns (N, Cout, Sp_ext), also lane-extended (zero margins / halo)."""
    N, cin, sp_ext = inp_ext.shape
    cout = weight.shape[0]
    D, H, W = spatial_dims
    Dp, Hp, Wp = D + 2, H + 2, W + 2

    # Tap (kd, kh, kw) reads lane window [start, start + Sp_pad) of the
    # extended input; the feature itself sits at lane offset off0_pad.
    shifts = tuple(off0_pad + (kd - 1) * Hp * Wp + (kh - 1) * Wp + (kw - 1)
                   for kd in range(3) for kh in range(3) for kw in range(3))

    # (Cout, Cin, 3, 3, 3) -> (Cout, 27*Cin); column = tap*Cin + c, matching
    # the im2col scratch row order.
    w_packed = jnp.transpose(weight, (0, 2, 3, 4, 1)).reshape(cout, 27 * cin)
    w_packed = w_packed.astype(jnp.float32)

    # One Cout tile at these sizes.  Per-channel stats make Cout tiling exact;
    # if tiled for bigger models, keep tc a multiple of 8 (sublane rule).
    tc = cout
    grid = (N, cout // tc)

    kernel = partial(_dense_layer_kernel, sp_pad=sp_pad, off0_pad=off0_pad,
                     shifts=shifts, inv_count=1.0 / float(D * H * W),
                     eps=eps, negative_slope=negative_slope)

    return pl.pallas_call(
        kernel,
        out_shape=jax.ShapeDtypeStruct((N, cout, sp_ext), jnp.float32),
        grid_spec=pltpu.PrefetchScalarGridSpec(
            num_scalar_prefetch=0,
            grid=grid,
            in_specs=[
                pl.BlockSpec((1, cin, sp_ext), lambda n, c: (n, 0, 0)),
                pl.BlockSpec((tc, 27 * cin), lambda n, c: (c, 0)),
                pl.BlockSpec((1, sp_pad), lambda n, c: (0, 0)),
            ],
            out_specs=pl.BlockSpec((1, tc, sp_ext), lambda n, c: (n, c, 0)),
            scratch_shapes=[pltpu.VMEM((27 * cin, sp_pad), jnp.float32)],
        ),
        compiler_params=pltpu.CompilerParams(
            # Batch axis "parallel" (feeds both v7x TensorCores when N >= 2);
            # the Cout-tile axis must stay "arbitrary": the im2col scratch
            # filled at c == 0 is reused by the following c steps.
            dimension_semantics=("parallel", "arbitrary"),
            # ~1 MiB live per step at these shapes; safe on every generation
            # (v7x has only 64 MiB physical VMEM per TensorCore).  For large
            # volumes add a spatial (lane) tile axis with an off0-lane halo,
            # sweep pl.Buffered on the x spec, and re-derive this per gen.
            vmem_limit_bytes=32 * 1024 * 1024,
        ),
    )(inp_ext, w_packed, mask)


def dense_block(x, weights, biases=None, *, eps=EPS, negative_slope=NEG_SLOPE):
    """DenseBlock.forward.  x: (N, C0, D, H, W) f32 -> NCDHW f32 with
    C0 + num_layers*growth_rate channels (torch.cat([x, out1, out2], dim=1)).

    `biases` is accepted for interface fidelity but unused: InstanceNorm3d
    with affine=False cancels the conv bias exactly."""
    del biases
    N, c0, D, H, W = x.shape
    Dp, Hp, Wp = D + 2, H + 2, W + 2
    sp = Dp * Hp * Wp
    sp_pad = _round_up(sp, LANE)            # lane-dense flattened padded volume
    off0 = Hp * Wp + Wp + 1                 # max |flat shift| of a conv tap
    off0_pad = _round_up(off0, LANE)        # lane-aligned halo extension
    sp_ext = sp_pad + 2 * off0_pad

    # Interior mask on the lane-padded flat padded volume (0 on halo + lane pad).
    mask = jnp.pad(jnp.ones((D, H, W), jnp.float32), 1).reshape(1, sp)
    mask = jnp.pad(mask, ((0, 0), (0, sp_pad - sp)))

    # x -> lane-extended padded-flat layout, done ONCE.  Every layer emits
    # this layout directly, so there is no per-layer pad in the loop below.
    x_pf = jnp.pad(x, ((0, 0), (0, 0), (1, 1), (1, 1), (1, 1))).reshape(N, c0, sp)
    x_ext = jnp.pad(x_pf, ((0, 0), (0, 0), (off0_pad, sp_ext - sp - off0_pad)))

    feats = [x_ext]
    for w in weights:
        inp = feats[0] if len(feats) == 1 else jnp.concatenate(feats, axis=1)
        feats.append(_dense_layer(inp, w, mask, spatial_dims=(D, H, W),
                                  sp_pad=sp_pad, off0_pad=off0_pad,
                                  eps=eps, negative_slope=negative_slope))

    full = jnp.concatenate(feats, axis=1)                    # (N, Ctot, Sp_ext)
    ctot = full.shape[1]
    vol = full[:, :, off0_pad:off0_pad + sp].reshape(N, ctot, Dp, Hp, Wp)
    return vol[:, :, 1:Dp - 1, 1:Hp - 1, 1:Wp - 1]           # drop halo -> NCDHW


def _reference(x, weights, biases, *, eps=EPS, negative_slope=NEG_SLOPE):
    """Pure-JAX reference of DenseBlock.forward (NCDHW, full f32 conv)."""
    feats = [x]
    for w, b in zip(weights, biases):
        inp = jnp.concatenate(feats, axis=1)
        y = lax.conv_general_dilated(
            inp, w, window_strides=(1, 1, 1),
            padding=((1, 1), (1, 1), (1, 1)),
            dimension_numbers=("NCDHW", "OIDHW", "NCDHW"),
            precision=lax.Precision.HIGHEST,
        ) + b[None, :, None, None, None]
        mean = y.mean(axis=(2, 3, 4), keepdims=True)
        var = ((y - mean) ** 2).mean(axis=(2, 3, 4), keepdims=True)
        yn = (y - mean) / jnp.sqrt(var + eps)
        feats.append(jnp.where(yn >= 0.0, yn, negative_slope * yn))
    return jnp.concatenate(feats, axis=1)


if __name__ == "__main__":
    N, in_channels, growth_rate, num_layers = 2, 4, 4, 2
    D = H = W = 8

    key = jax.random.PRNGKey(0)
    keys = jax.random.split(key, 1 + 2 * num_layers)
    x = jax.random.normal(keys[0], (N, in_channels, D, H, W), jnp.float32)

    weights, biases = [], []
    cin = in_channels
    for i in range(num_layers):
        w = jax.random.normal(keys[1 + 2 * i],
                              (growth_rate, cin, 3, 3, 3), jnp.float32) * 0.1
        b = jax.random.normal(keys[2 + 2 * i], (growth_rate,), jnp.float32) * 0.1
        weights.append(w)
        biases.append(b)
        cin += growth_rate

    out = jax.jit(dense_block)(x, weights, biases)
    out = jax.block_until_ready(out)

    assert out.shape == (N, in_channels + num_layers * growth_rate, D, H, W)

    # The kernel runs the conv as an f32 MXU matmul; the tolerance covers the
    # (generation-dependent) MXU f32 pass precision on top of the f32 reference.
    ref = _reference(x, weights, biases)
    assert jnp.allclose(out, ref, rtol=2e-2, atol=2e-2), "mismatch vs reference"

    print("KERNEL_OK")
</pallas_src>

<mosaic_0001>
module attributes {stable_mosaic.version = 11 : i64} {
  func.func @_dense_layer_kernel(%arg0: i32, %arg1: i32, %arg2: memref<1x4x1280xf32, #tpu.memory_space<vmem>>, %arg3: memref<4x108xf32, #tpu.memory_space<vmem>>, %arg4: memref<1x1024xf32, #tpu.memory_space<vmem>>, %arg5: memref<1x4x1280xf32, #tpu.memory_space<vmem>>, %arg6: memref<108x1024xf32, #tpu.memory_space<vmem>>) attributes {dimension_semantics = [#tpu.dimension_semantics<parallel>, #tpu.dimension_semantics<arbitrary>], iteration_bounds = array<i64: 2, 1>, scalar_prefetch = 0 : i64, scratch_operands = 1 : i64, tpu.core_type = #tpu.core_type<tc>, window_params = [{transform_indices = @transform_0, window_bounds = array<i64: 1, 4, 1280>}, {transform_indices = @transform_1, window_bounds = array<i64: 4, 108>}, {pipeline_mode = #tpu.pipeline_mode<synchronous>, transform_indices = @transform_2, window_bounds = array<i64: 1, 1024>}, {transform_indices = @transform_3, window_bounds = array<i64: 1, 4, 1280>}]} {
    %c0_i32 = arith.constant 0 : i32
    %0 = arith.cmpi eq, %arg1, %c0_i32 : i32
    %1 = arith.extui %0 : i1 to i32
    %c0_i32_0 = arith.constant 0 : i32
    %2 = arith.cmpi ne, %1, %c0_i32_0 : i32
    scf.if %2 {
      %c0_21 = arith.constant 0 : index
      %c0_22 = arith.constant 0 : index
      %c0_23 = arith.constant 0 : index
      %46 = vector.load %arg2[%c0_21, %c0_22, %c0_23] : memref<1x4x1280xf32, #tpu.memory_space<vmem>>, vector<1x4x1280xf32>
      %47 = vector.shape_cast %46 : vector<1x4x1280xf32> to vector<4x1280xf32>
      %48 = vector.extract_strided_slice %47 {offsets = [0, 17], sizes = [4, 1024], strides = [1, 1]} : vector<4x1280xf32> to vector<4x1024xf32>
      %c0_24 = arith.constant 0 : index
      %c0_25 = arith.constant 0 : index
      %49 = vector.load %arg6[%c0_24, %c0_25] : memref<108x1024xf32, #tpu.memory_space<vmem>>, vector<4x1024xf32>
      tpu.vector_store %arg6[%c0_24, %c0_25], %48 {strides = array<i32>} : memref<108x1024xf32, #tpu.memory_space<vmem>>, vector<4x1024xf32>,
      %50 = vector.extract_strided_slice %47 {offsets = [0, 18], sizes = [4, 1024], strides = [1, 1]} : vector<4x1280xf32> to vector<4x1024xf32>
      %c4 = arith.constant 4 : index
      %c0_26 = arith.constant 0 : index
      %51 = vector.load %arg6[%c4, %c0_26] : memref<108x1024xf32, #tpu.memory_space<vmem>>, vector<4x1024xf32>
      tpu.vector_store %arg6[%c4, %c0_26], %50 {strides = array<i32>} : memref<108x1024xf32, #tpu.memory_space<vmem>>, vector<4x1024xf32>,
      %52 = vector.extract_strided_slice %47 {offsets = [0, 19], sizes = [4, 1024], strides = [1, 1]} : vector<4x1280xf32> to vector<4x1024xf32>
      %c8 = arith.constant 8 : index
      %c0_27 = arith.constant 0 : index
      %53 = vector.load %arg6[%c8, %c0_27] : memref<108x1024xf32, #tpu.memory_space<vmem>>, vector<4x1024xf32>
      tpu.vector_store %arg6[%c8, %c0_27], %52 {strides = array<i32>} : memref<108x1024xf32, #tpu.memory_space<vmem>>, vector<4x1024xf32>,
      %54 = vector.extract_strided_slice %47 {offsets = [0, 27], sizes = [4, 1024], strides = [1, 1]} : vector<4x1280xf32> to vector<4x1024xf32>
      %c12 = arith.constant 12 : index
      %c0_28 = arith.constant 0 : index
      %55 = vector.load %arg6[%c12, %c0_28] : memref<108x1024xf32, #tpu.memory_space<vmem>>, vector<4x1024xf32>
      tpu.vector_store %arg6[%c12, %c0_28], %54 {strides = array<i32>} : memref<108x1024xf32, #tpu.memory_space<vmem>>, vector<4x1024xf32>,
      %56 = vector.extract_strided_slice %47 {offsets = [0, 28], sizes = [4, 1024], strides = [1, 1]} : vector<4x1280xf32> to vector<4x1024xf32>
      %c16 = arith.constant 16 : index
      %c0_29 = arith.constant 0 : index
      %57 = vector.load %arg6[%c16, %c0_29] : memref<108x1024xf32, #tpu.memory_space<vmem>>, vector<4x1024xf32>
      tpu.vector_store %arg6[%c16, %c0_29], %56 {strides = array<i32>} : memref<108x1024xf32, #tpu.memory_space<vmem>>, vector<4x1024xf32>,
      %58 = vector.extract_strided_slice %47 {offsets = [0, 29], sizes = [4, 1024], strides = [1, 1]} : vector<4x1280xf32> to vector<4x1024xf32>
      %c20 = arith.constant 20 : index
      %c0_30 = arith.constant 0 : index
      %59 = vector.load %arg6[%c20, %c0_30] : memref<108x1024xf32, #tpu.memory_space<vmem>>, vector<4x1024xf32>
      tpu.vector_store %arg6[%c20, %c0_30], %58 {strides = array<i32>} : memref<108x1024xf32, #tpu.memory_space<vmem>>, vector<4x1024xf32>,
      %60 = vector.extract_strided_slice %47 {offsets = [0, 37], sizes = [4, 1024], strides = [1, 1]} : vector<4x1280xf32> to vector<4x1024xf32>
      %c24 = arith.constant 24 : index
      %c0_31 = arith.constant 0 : index
      %61 = vector.load %arg6[%c24, %c0_31] : memref<108x1024xf32, #tpu.memory_space<vmem>>, vector<4x1024xf32>
      tpu.vector_store %arg6[%c24, %c0_31], %60 {strides = array<i32>} : memref<108x1024xf32, #tpu.memory_space<vmem>>, vector<4x1024xf32>,
      %62 = vector.extract_strided_slice %47 {offsets = [0, 38], sizes = [4, 1024], strides = [1, 1]} : vector<4x1280xf32> to vector<4x1024xf32>
      %c28 = arith.constant 28 : index
      %c0_32 = arith.constant 0 : index
      %63 = vector.load %arg6[%c28, %c0_32] : memref<108x1024xf32, #tpu.memory_space<vmem>>, vector<4x1024xf32>
      tpu.vector_store %arg6[%c28, %c0_32], %62 {strides = array<i32>} : memref<108x1024xf32, #tpu.memory_space<vmem>>, vector<4x1024xf32>,
      %64 = vector.extract_strided_slice %47 {offsets = [0, 39], sizes = [4, 1024], strides = [1, 1]} : vector<4x1280xf32> to vector<4x1024xf32>
      %c32 = arith.constant 32 : index
      %c0_33 = arith.constant 0 : index
      %65 = vector.load %arg6[%c32, %c0_33] : memref<108x1024xf32, #tpu.memory_space<vmem>>, vector<4x1024xf32>
      tpu.vector_store %arg6[%c32, %c0_33], %64 {strides = array<i32>} : memref<108x1024xf32, #tpu.memory_space<vmem>>, vector<4x1024xf32>,
      %66 = vector.extract_strided_slice %47 {offsets = [0, 117], sizes = [4, 1024], strides = [1, 1]} : vector<4x1280xf32> to vector<4x1024xf32>
      %c36 = arith.constant 36 : index
      %c0_34 = arith.constant 0 : index
      %67 = vector.load %arg6[%c36, %c0_34] : memref<108x1024xf32, #tpu.memory_space<vmem>>, vector<4x1024xf32>
      tpu.vector_store %arg6[%c36, %c0_34], %66 {strides = array<i32>} : memref<108x1024xf32, #tpu.memory_space<vmem>>, vector<4x1024xf32>,
      %68 = vector.extract_strided_slice %47 {offsets = [0, 118], sizes = [4, 1024], strides = [1, 1]} : vector<4x1280xf32> to vector<4x1024xf32>
      %c40 = arith.constant 40 : index
      %c0_35 = arith.constant 0 : index
      %69 = vector.load %arg6[%c40, %c0_35] : memref<108x1024xf32, #tpu.memory_space<vmem>>, vector<4x1024xf32>
      tpu.vector_store %arg6[%c40, %c0_35], %68 {strides = array<i32>} : memref<108x1024xf32, #tpu.memory_space<vmem>>, vector<4x1024xf32>,
      %70 = vector.extract_strided_slice %47 {offsets = [0, 119], sizes = [4, 1024], strides = [1, 1]} : vector<4x1280xf32> to vector<4x1024xf32>
      %c44 = arith.constant 44 : index
      %c0_36 = arith.constant 0 : index
      %71 = vector.load %arg6[%c44, %c0_36] : memref<108x1024xf32, #tpu.memory_space<vmem>>, vector<4x1024xf32>
      tpu.vector_store %arg6[%c44, %c0_36], %70 {strides = array<i32>} : memref<108x1024xf32, #tpu.memory_space<vmem>>, vector<4x1024xf32>,
      %72 = vector.extract_strided_slice %47 {offsets = [0, 127], sizes = [4, 1024], strides = [1, 1]} : vector<4x1280xf32> to vector<4x1024xf32>
      %c48 = arith.constant 48 : index
      %c0_37 = arith.constant 0 : index
      %73 = vector.load %arg6[%c48, %c0_37] : memref<108x1024xf32, #tpu.memory_space<vmem>>, vector<4x1024xf32>
      tpu.vector_store %arg6[%c48, %c0_37], %72 {strides = array<i32>} : memref<108x1024xf32, #tpu.memory_space<vmem>>, vector<4x1024xf32>,
      %74 = vector.extract_strided_slice %47 {offsets = [0, 128], sizes = [4, 1024], strides = [1, 1]} : vector<4x1280xf32> to vector<4x1024xf32>
      %c52 = arith.constant 52 : index
      %c0_38 = arith.constant 0 : index
      %75 = vector.load %arg6[%c52, %c0_38] : memref<108x1024xf32, #tpu.memory_space<vmem>>, vector<4x1024xf32>
      tpu.vector_store %arg6[%c52, %c0_38], %74 {strides = array<i32>} : memref<108x1024xf32, #tpu.memory_space<vmem>>, vector<4x1024xf32>,
      %76 = vector.extract_strided_slice %47 {offsets = [0, 129], sizes = [4, 1024], strides = [1, 1]} : vector<4x1280xf32> to vector<4x1024xf32>
      %c56 = arith.constant 56 : index
      %c0_39 = arith.constant 0 : index
      %77 = vector.load %arg6[%c56, %c0_39] : memref<108x1024xf32, #tpu.memory_space<vmem>>, vector<4x1024xf32>
      tpu.vector_store %arg6[%c56, %c0_39], %76 {strides = array<i32>} : memref<108x1024xf32, #tpu.memory_space<vmem>>, vector<4x1024xf32>,
      %78 = vector.extract_strided_slice %47 {offsets = [0, 137], sizes = [4, 1024], strides = [1, 1]} : vector<4x1280xf32> to vector<4x1024xf32>
      %c60 = arith.constant 60 : index
      %c0_40 = arith.constant 0 : index
      %79 = vector.load %arg6[%c60, %c0_40] : memref<108x1024xf32, #tpu.memory_space<vmem>>, vector<4x1024xf32>
      tpu.vector_store %arg6[%c60, %c0_40], %78 {strides = array<i32>} : memref<108x1024xf32, #tpu.memory_space<vmem>>, vector<4x1024xf32>,
      %80 = vector.extract_strided_slice %47 {offsets = [0, 138], sizes = [4, 1024], strides = [1, 1]} : vector<4x1280xf32> to vector<4x1024xf32>
      %c64 = arith.constant 64 : index
      %c0_41 = arith.constant 0 : index
      %81 = vector.load %arg6[%c64, %c0_41] : memref<108x1024xf32, #tpu.memory_space<vmem>>, vector<4x1024xf32>
      tpu.vector_store %arg6[%c64, %c0_41], %80 {strides = array<i32>} : memref<108x1024xf32, #tpu.memory_space<vmem>>, vector<4x1024xf32>,
      %82 = vector.extract_strided_slice %47 {offsets = [0, 139], sizes = [4, 1024], strides = [1, 1]} : vector<4x1280xf32> to vector<4x1024xf32>
      %c68 = arith.constant 68 : index
      %c0_42 = arith.constant 0 : index
      %83 = vector.load %arg6[%c68, %c0_42] : memref<108x1024xf32, #tpu.memory_space<vmem>>, vector<4x1024xf32>
      tpu.vector_store %arg6[%c68, %c0_42], %82 {strides = array<i32>} : memref<108x1024xf32, #tpu.memory_space<vmem>>, vector<4x1024xf32>,
      %84 = vector.extract_strided_slice %47 {offsets = [0, 217], sizes = [4, 1024], strides = [1, 1]} : vector<4x1280xf32> to vector<4x1024xf32>
      %c72 = arith.constant 72 : index
      %c0_43 = arith.constant 0 : index
      %85 = vector.load %arg6[%c72, %c0_43] : memref<108x1024xf32, #tpu.memory_space<vmem>>, vector<4x1024xf32>
      tpu.vector_store %arg6[%c72, %c0_43], %84 {strides = array<i32>} : memref<108x1024xf32, #tpu.memory_space<vmem>>, vector<4x1024xf32>,
      %86 = vector.extract_strided_slice %47 {offsets = [0, 218], sizes = [4, 1024], strides = [1, 1]} : vector<4x1280xf32> to vector<4x1024xf32>
      %c76 = arith.constant 76 : index
      %c0_44 = arith.constant 0 : index
      %87 = vector.load %arg6[%c76, %c0_44] : memref<108x1024xf32, #tpu.memory_space<vmem>>, vector<4x1024xf32>
      tpu.vector_store %arg6[%c76, %c0_44], %86 {strides = array<i32>} : memref<108x1024xf32, #tpu.memory_space<vmem>>, vector<4x1024xf32>,
      %88 = vector.extract_strided_slice %47 {offsets = [0, 219], sizes = [4, 1024], strides = [1, 1]} : vector<4x1280xf32> to vector<4x1024xf32>
      %c80 = arith.constant 80 : index
      %c0_45 = arith.constant 0 : index
      %89 = vector.load %arg6[%c80, %c0_45] : memref<108x1024xf32, #tpu.memory_space<vmem>>, vector<4x1024xf32>
      tpu.vector_store %arg6[%c80, %c0_45], %88 {strides = array<i32>} : memref<108x1024xf32, #tpu.memory_space<vmem>>, vector<4x1024xf32>,
      %90 = vector.extract_strided_slice %47 {offsets = [0, 227], sizes = [4, 1024], strides = [1, 1]} : vector<4x1280xf32> to vector<4x1024xf32>
      %c84 = arith.constant 84 : index
      %c0_46 = arith.constant 0 : index
      %91 = vector.load %arg6[%c84, %c0_46] : memref<108x1024xf32, #tpu.memory_space<vmem>>, vector<4x1024xf32>
      tpu.vector_store %arg6[%c84, %c0_46], %90 {strides = array<i32>} : memref<108x1024xf32, #tpu.memory_space<vmem>>, vector<4x1024xf32>,
      %92 = vector.extract_strided_slice %47 {offsets = [0, 228], sizes = [4, 1024], strides = [1, 1]} : vector<4x1280xf32> to vector<4x1024xf32>
      %c88 = arith.constant 88 : index
      %c0_47 = arith.constant 0 : index
      %93 = vector.load %arg6[%c88, %c0_47] : memref<108x1024xf32, #tpu.memory_space<vmem>>, vector<4x1024xf32>
      tpu.vector_store %arg6[%c88, %c0_47], %92 {strides = array<i32>} : memref<108x1024xf32, #tpu.memory_space<vmem>>, vector<4x1024xf32>,
      %94 = vector.extract_strided_slice %47 {offsets = [0, 229], sizes = [4, 1024], strides = [1, 1]} : vector<4x1280xf32> to vector<4x1024xf32>
      %c92 = arith.constant 92 : index
      %c0_48 = arith.constant 0 : index
      %95 = vector.load %arg6[%c92, %c0_48] : memref<108x1024xf32, #tpu.memory_space<vmem>>, vector<4x1024xf32>
      tpu.vector_store %arg6[%c92, %c0_48], %94 {strides = array<i32>} : memref<108x1024xf32, #tpu.memory_space<vmem>>, vector<4x1024xf32>,
      %96 = vector.extract_strided_slice %47 {offsets = [0, 237], sizes = [4, 1024], strides = [1, 1]} : vector<4x1280xf32> to vector<4x1024xf32>
      %c96 = arith.constant 96 : index
      %c0_49 = arith.constant 0 : index
      %97 = vector.load %arg6[%c96, %c0_49] : memref<108x1024xf32, #tpu.memory_space<vmem>>, vector<4x1024xf32>
      tpu.vector_store %arg6[%c96, %c0_49], %96 {strides = array<i32>} : memref<108x1024xf32, #tpu.memory_space<vmem>>, vector<4x1024xf32>,
      %98 = vector.extract_strided_slice %47 {offsets = [0, 238], sizes = [4, 1024], strides = [1, 1]} : vector<4x1280xf32> to vector<4x1024xf32>
      %c100 = arith.constant 100 : index
      %c0_50 = arith.constant 0 : index
      %99 = vector.load %arg6[%c100, %c0_50] : memref<108x1024xf32, #tpu.memory_space<vmem>>, vector<4x1024xf32>
      tpu.vector_store %arg6[%c100, %c0_50], %98 {strides = array<i32>} : memref<108x1024xf32, #tpu.memory_space<vmem>>, vector<4x1024xf32>,
      %100 = vector.extract_strided_slice %47 {offsets = [0, 239], sizes = [4, 1024], strides = [1, 1]} : vector<4x1280xf32> to vector<4x1024xf32>
      %c104 = arith.constant 104 : index
      %c0_51 = arith.constant 0 : index
      %101 = vector.load %arg6[%c104, %c0_51] : memref<108x1024xf32, #tpu.memory_space<vmem>>, vector<4x1024xf32>
      tpu.vector_store %arg6[%c104, %c0_51], %100 {strides = array<i32>} : memref<108x1024xf32, #tpu.memory_space<vmem>>, vector<4x1024xf32>,
    } else {
    }
    %c0 = arith.constant 0 : index
    %c0_1 = arith.constant 0 : index
    %3 = vector.load %arg3[%c0, %c0_1] : memref<4x108xf32, #tpu.memory_space<vmem>>, vector<4x108xf32>
    %c0_2 = arith.constant 0 : index
    %c0_3 = arith.constant 0 : index
    %4 = vector.load %arg6[%c0_2, %c0_3] : memref<108x1024xf32, #tpu.memory_space<vmem>>, vector<108x1024xf32>
    %cst = arith.constant dense<0.000000e+00> : vector<4x1024xf32>
    %5 = tpu.matmul %3, %4, %cst {dimension_numbers = #tpu.dot_dimension_numbers<[1], [0], [0], [1], [0, 0, 1, 1], [], []>} : vector<4x108xf32>, vector<108x1024xf32>, vector<4x1024xf32> -> vector<4x1024xf32>
    %c0_4 = arith.constant 0 : index
    %c0_5 = arith.constant 0 : index
    %6 = vector.load %arg4[%c0_4, %c0_5] : memref<1x1024xf32, #tpu.memory_space<vmem>>, vector<1x1024xf32>
    %7 = vector.broadcast %6 : vector<1x1024xf32> to vector<4x1024xf32>
    %8 = arith.mulf %5, %7 : vector<4x1024xf32>
    %cst_6 = arith.constant dense<0.000000e+00> : vector<4xf32>
    %9 = vector.multi_reduction <add>, %8, %cst_6 [1] : vector<4x1024xf32> to vector<4xf32>
    %10 = vector.shape_cast %9 : vector<4xf32> to vector<4x1xf32>
    %cst_7 = arith.constant 0.001953125 : f32
    %11 = vector.broadcast %cst_7 : f32 to vector<4x1xf32>
    %12 = arith.mulf %10, %11 : vector<4x1xf32>
    %13 = vector.broadcast %12 : vector<4x1xf32> to vector<4x1024xf32>
    %14 = arith.subf %5, %13 : vector<4x1024xf32>
    %15 = vector.broadcast %6 : vector<1x1024xf32> to vector<4x1024xf32>
    %16 = arith.mulf %14, %15 : vector<4x1024xf32>
    %17 = arith.mulf %16, %16 : vector<4x1024xf32>
    %cst_8 = arith.constant dense<0.000000e+00> : vector<4xf32>
    %18 = vector.multi_reduction <add>, %17, %cst_8 [1] : vector<4x1024xf32> to vector<4xf32>
    %19 = vector.shape_cast %18 : vector<4xf32> to vector<4x1xf32>
    %cst_9 = arith.constant 0.001953125 : f32
    %20 = vector.broadcast %cst_9 : f32 to vector<4x1xf32>
    %21 = arith.mulf %19, %20 : vector<4x1xf32>
    %22 = vector.broadcast %12 : vector<4x1xf32> to vector<4x1024xf32>
    %23 = arith.subf %5, %22 : vector<4x1024xf32>
    %cst_10 = arith.constant 9.99999974E-6 : f32
    %24 = vector.broadcast %cst_10 : f32 to vector<4x1xf32>
    %25 = arith.addf %21, %24 : vector<4x1xf32>
    %26 = math.rsqrt %25 : vector<4x1xf32>
    %27 = vector.broadcast %26 : vector<4x1xf32> to vector<4x1024xf32>
    %28 = arith.mulf %23, %27 : vector<4x1024xf32>
    %cst_11 = arith.constant 0.000000e+00 : f32
    %29 = vector.broadcast %cst_11 : f32 to vector<4x1024xf32>
    %30 = arith.cmpf oge, %28, %29 : vector<4x1024xf32>
    %cst_12 = arith.constant 2.000000e-01 : f32
    %31 = vector.broadcast %cst_12 : f32 to vector<4x1024xf32>
    %32 = arith.mulf %31, %28 : vector<4x1024xf32>
    %33 = arith.select %30, %28, %32 : vector<4x1024xi1>, vector<4x1024xf32>
    %34 = vector.broadcast %6 : vector<1x1024xf32> to vector<4x1024xf32>
    %35 = arith.mulf %33, %34 : vector<4x1024xf32>
    %cst_13 = arith.constant 0.000000e+00 : f32
    %36 = vector.broadcast %cst_13 : f32 to vector<4x128xf32>
    %c0_14 = arith.constant 0 : index
    %c0_15 = arith.constant 0 : index
    %c0_16 = arith.constant 0 : index
    %37 = vector.load %arg5[%c0_14, %c0_15, %c0_16] : memref<1x4x1280xf32, #tpu.memory_space<vmem>>, vector<1x4x128xf32>
    %38 = vector.shape_cast %37 : vector<1x4x128xf32> to vector<4x128xf32>
    %39 = vector.shape_cast %36 : vector<4x128xf32> to vector<1x4x128xf32>
    tpu.vector_store %arg5[%c0_14, %c0_15, %c0_16], %39 {strides = array<i32>} : memref<1x4x1280xf32, #tpu.memory_space<vmem>>, vector<1x4x128xf32>,
    %c0_17 = arith.constant 0 : index
    %c0_18 = arith.constant 0 : index
    %c128 = arith.constant 128 : index
    %40 = vector.load %arg5[%c0_17, %c0_18, %c128] : memref<1x4x1280xf32, #tpu.memory_space<vmem>>, vector<1x4x1024xf32>
    %41 = vector.shape_cast %40 : vector<1x4x1024xf32> to vector<4x1024xf32>
    %42 = vector.shape_cast %35 : vector<4x1024xf32> to vector<1x4x1024xf32>
    tpu.vector_store %arg5[%c0_17, %c0_18, %c128], %42 {strides = array<i32>} : memref<1x4x1280xf32, #tpu.memory_space<vmem>>, vector<1x4x1024xf32>,
    %c0_19 = arith.constant 0 : index
    %c0_20 = arith.constant 0 : index
    %c1152 = arith.constant 1152 : index
    %43 = vector.load %arg5[%c0_19, %c0_20, %c1152] : memref<1x4x1280xf32, #tpu.memory_space<vmem>>, vector<1x4x128xf32>
    %44 = vector.shape_cast %43 : vector<1x4x128xf32> to vector<4x128xf32>
    %45 = vector.shape_cast %36 : vector<4x128xf32> to vector<1x4x128xf32>
    tpu.vector_store %arg5[%c0_19, %c0_20, %c1152], %45 {strides = array<i32>} : memref<1x4x1280xf32, #tpu.memory_space<vmem>>, vector<1x4x128xf32>,
    return
  }
  func.func @transform_0(%arg0: i32, %arg1: i32) -> (i32, i32, i32) {
    %c0_i32 = arith.constant 0 : i32
    %c0_i32_0 = arith.constant 0 : i32
    %c0_i32_1 = arith.constant 0 : i32
    return %arg0, %c0_i32, %c0_i32_0 : i32, i32, i32
  }
  func.func @transform_1(%arg0: i32, %arg1: i32) -> (i32, i32) {
    %c0_i32 = arith.constant 0 : i32
    %c0_i32_0 = arith.constant 0 : i32
    return %arg1, %c0_i32 : i32, i32
  }
  func.func @transform_2(%arg0: i32, %arg1: i32) -> (i32, i32) {
    %c0_i32 = arith.constant 0 : i32
    %c0_i32_0 = arith.constant 0 : i32
    %c0_i32_1 = arith.constant 0 : i32
    return %c0_i32, %c0_i32_0 : i32, i32
  }
  func.func @transform_3(%arg0: i32, %arg1: i32) -> (i32, i32, i32) {
    %c0_i32 = arith.constant 0 : i32
    %c0_i32_0 = arith.constant 0 : i32
    return %arg0, %arg1, %c0_i32 : i32, i32, i32
  }
}

module attributes {stable_mosaic.version = 11 : i64} {
  func.func @_dense_layer_kernel(%arg0: i32, %arg1: i32, %arg2: memref<1x8x1280xf32, #tpu.memory_space<vmem>>, %arg3: memref<4x216xf32, #tpu.memory_space<vmem>>, %arg4: memref<1x1024xf32, #tpu.memory_space<vmem>>, %arg5: memref<1x4x1280xf32, #tpu.memory_space<vmem>>, %arg6: memref<216x1024xf32, #tpu.memory_space<vmem>>) attributes {dimension_semantics = [#tpu.dimension_semantics<parallel>, #tpu.dimension_semantics<arbitrary>], iteration_bounds = array<i64: 2, 1>, scalar_prefetch = 0 : i64, scratch_operands = 1 : i64, tpu.core_type = #tpu.core_type<tc>, window_params = [{transform_indices = @transform_0, window_bounds = array<i64: 1, 8, 1280>}, {transform_indices = @transform_1, window_bounds = array<i64: 4, 216>}, {pipeline_mode = #tpu.pipeline_mode<synchronous>, transform_indices = @transform_2, window_bounds = array<i64: 1, 1024>}, {transform_indices = @transform_3, window_bounds = array<i64: 1, 4, 1280>}]} {
    %c0_i32 = arith.constant 0 : i32
    %0 = arith.cmpi eq, %arg1, %c0_i32 : i32
    %1 = arith.extui %0 : i1 to i32
    %c0_i32_0 = arith.constant 0 : i32
    %2 = arith.cmpi ne, %1, %c0_i32_0 : i32
    scf.if %2 {
      %c0_21 = arith.constant 0 : index
      %c0_22 = arith.constant 0 : index
      %c0_23 = arith.constant 0 : index
      %46 = vector.load %arg2[%c0_21, %c0_22, %c0_23] : memref<1x8x1280xf32, #tpu.memory_space<vmem>>, vector<1x8x1280xf32>
      %47 = vector.shape_cast %46 : vector<1x8x1280xf32> to vector<8x1280xf32>
      %48 = vector.extract_strided_slice %47 {offsets = [0, 17], sizes = [8, 1024], strides = [1, 1]} : vector<8x1280xf32> to vector<8x1024xf32>
      %c0_24 = arith.constant 0 : index
      %c0_25 = arith.constant 0 : index
      %49 = vector.load %arg6[%c0_24, %c0_25] : memref<216x1024xf32, #tpu.memory_space<vmem>>, vector<8x1024xf32>
      tpu.vector_store %arg6[%c0_24, %c0_25], %48 {strides = array<i32>} : memref<216x1024xf32, #tpu.memory_space<vmem>>, vector<8x1024xf32>,
      %50 = vector.extract_strided_slice %47 {offsets = [0, 18], sizes = [8, 1024], strides = [1, 1]} : vector<8x1280xf32> to vector<8x1024xf32>
      %c8 = arith.constant 8 : index
      %c0_26 = arith.constant 0 : index
      %51 = vector.load %arg6[%c8, %c0_26] : memref<216x1024xf32, #tpu.memory_space<vmem>>, vector<8x1024xf32>
      tpu.vector_store %arg6[%c8, %c0_26], %50 {strides = array<i32>} : memref<216x1024xf32, #tpu.memory_space<vmem>>, vector<8x1024xf32>,
      %52 = vector.extract_strided_slice %47 {offsets = [0, 19], sizes = [8, 1024], strides = [1, 1]} : vector<8x1280xf32> to vector<8x1024xf32>
      %c16 = arith.constant 16 : index
      %c0_27 = arith.constant 0 : index
      %53 = vector.load %arg6[%c16, %c0_27] : memref<216x1024xf32, #tpu.memory_space<vmem>>, vector<8x1024xf32>
      tpu.vector_store %arg6[%c16, %c0_27], %52 {strides = array<i32>} : memref<216x1024xf32, #tpu.memory_space<vmem>>, vector<8x1024xf32>,
      %54 = vector.extract_strided_slice %47 {offsets = [0, 27], sizes = [8, 1024], strides = [1, 1]} : vector<8x1280xf32> to vector<8x1024xf32>
      %c24 = arith.constant 24 : index
      %c0_28 = arith.constant 0 : index
      %55 = vector.load %arg6[%c24, %c0_28] : memref<216x1024xf32, #tpu.memory_space<vmem>>, vector<8x1024xf32>
      tpu.vector_store %arg6[%c24, %c0_28], %54 {strides = array<i32>} : memref<216x1024xf32, #tpu.memory_space<vmem>>, vector<8x1024xf32>,
      %56 = vector.extract_strided_slice %47 {offsets = [0, 28], sizes = [8, 1024], strides = [1, 1]} : vector<8x1280xf32> to vector<8x1024xf32>
      %c32 = arith.constant 32 : index
      %c0_29 = arith.constant 0 : index
      %57 = vector.load %arg6[%c32, %c0_29] : memref<216x1024xf32, #tpu.memory_space<vmem>>, vector<8x1024xf32>
      tpu.vector_store %arg6[%c32, %c0_29], %56 {strides = array<i32>} : memref<216x1024xf32, #tpu.memory_space<vmem>>, vector<8x1024xf32>,
      %58 = vector.extract_strided_slice %47 {offsets = [0, 29], sizes = [8, 1024], strides = [1, 1]} : vector<8x1280xf32> to vector<8x1024xf32>
      %c40 = arith.constant 40 : index
      %c0_30 = arith.constant 0 : index
      %59 = vector.load %arg6[%c40, %c0_30] : memref<216x1024xf32, #tpu.memory_space<vmem>>, vector<8x1024xf32>
      tpu.vector_store %arg6[%c40, %c0_30], %58 {strides = array<i32>} : memref<216x1024xf32, #tpu.memory_space<vmem>>, vector<8x1024xf32>,
      %60 = vector.extract_strided_slice %47 {offsets = [0, 37], sizes = [8, 1024], strides = [1, 1]} : vector<8x1280xf32> to vector<8x1024xf32>
      %c48 = arith.constant 48 : index
      %c0_31 = arith.constant 0 : index
      %61 = vector.load %arg6[%c48, %c0_31] : memref<216x1024xf32, #tpu.memory_space<vmem>>, vector<8x1024xf32>
      tpu.vector_store %arg6[%c48, %c0_31], %60 {strides = array<i32>} : memref<216x1024xf32, #tpu.memory_space<vmem>>, vector<8x1024xf32>,
      %62 = vector.extract_strided_slice %47 {offsets = [0, 38], sizes = [8, 1024], strides = [1, 1]} : vector<8x1280xf32> to vector<8x1024xf32>
      %c56 = arith.constant 56 : index
      %c0_32 = arith.constant 0 : index
      %63 = vector.load %arg6[%c56, %c0_32] : memref<216x1024xf32, #tpu.memory_space<vmem>>, vector<8x1024xf32>
      tpu.vector_store %arg6[%c56, %c0_32], %62 {strides = array<i32>} : memref<216x1024xf32, #tpu.memory_space<vmem>>, vector<8x1024xf32>,
      %64 = vector.extract_strided_slice %47 {offsets = [0, 39], sizes = [8, 1024], strides = [1, 1]} : vector<8x1280xf32> to vector<8x1024xf32>
      %c64 = arith.constant 64 : index
      %c0_33 = arith.constant 0 : index
      %65 = vector.load %arg6[%c64, %c0_33] : memref<216x1024xf32, #tpu.memory_space<vmem>>, vector<8x1024xf32>
      tpu.vector_store %arg6[%c64, %c0_33], %64 {strides = array<i32>} : memref<216x1024xf32, #tpu.memory_space<vmem>>, vector<8x1024xf32>,
      %66 = vector.extract_strided_slice %47 {offsets = [0, 117], sizes = [8, 1024], strides = [1, 1]} : vector<8x1280xf32> to vector<8x1024xf32>
      %c72 = arith.constant 72 : index
      %c0_34 = arith.constant 0 : index
      %67 = vector.load %arg6[%c72, %c0_34] : memref<216x1024xf32, #tpu.memory_space<vmem>>, vector<8x1024xf32>
      tpu.vector_store %arg6[%c72, %c0_34], %66 {strides = array<i32>} : memref<216x1024xf32, #tpu.memory_space<vmem>>, vector<8x1024xf32>,
      %68 = vector.extract_strided_slice %47 {offsets = [0, 118], sizes = [8, 1024], strides = [1, 1]} : vector<8x1280xf32> to vector<8x1024xf32>
      %c80 = arith.constant 80 : index
      %c0_35 = arith.constant 0 : index
      %69 = vector.load %arg6[%c80, %c0_35] : memref<216x1024xf32, #tpu.memory_space<vmem>>, vector<8x1024xf32>
      tpu.vector_store %arg6[%c80, %c0_35], %68 {strides = array<i32>} : memref<216x1024xf32, #tpu.memory_space<vmem>>, vector<8x1024xf32>,
      %70 = vector.extract_strided_slice %47 {offsets = [0, 119], sizes = [8, 1024], strides = [1, 1]} : vector<8x1280xf32> to vector<8x1024xf32>
      %c88 = arith.constant 88 : index
      %c0_36 = arith.constant 0 : index
      %71 = vector.load %arg6[%c88, %c0_36] : memref<216x1024xf32, #tpu.memory_space<vmem>>, vector<8x1024xf32>
      tpu.vector_store %arg6[%c88, %c0_36], %70 {strides = array<i32>} : memref<216x1024xf32, #tpu.memory_space<vmem>>, vector<8x1024xf32>,
      %72 = vector.extract_strided_slice %47 {offsets = [0, 127], sizes = [8, 1024], strides = [1, 1]} : vector<8x1280xf32> to vector<8x1024xf32>
      %c96 = arith.constant 96 : index
      %c0_37 = arith.constant 0 : index
      %73 = vector.load %arg6[%c96, %c0_37] : memref<216x1024xf32, #tpu.memory_space<vmem>>, vector<8x1024xf32>
      tpu.vector_store %arg6[%c96, %c0_37], %72 {strides = array<i32>} : memref<216x1024xf32, #tpu.memory_space<vmem>>, vector<8x1024xf32>,
      %74 = vector.extract_strided_slice %47 {offsets = [0, 128], sizes = [8, 1024], strides = [1, 1]} : vector<8x1280xf32> to vector<8x1024xf32>
      %c104 = arith.constant 104 : index
      %c0_38 = arith.constant 0 : index
      %75 = vector.load %arg6[%c104, %c0_38] : memref<216x1024xf32, #tpu.memory_space<vmem>>, vector<8x1024xf32>
      tpu.vector_store %arg6[%c104, %c0_38], %74 {strides = array<i32>} : memref<216x1024xf32, #tpu.memory_space<vmem>>, vector<8x1024xf32>,
      %76 = vector.extract_strided_slice %47 {offsets = [0, 129], sizes = [8, 1024], strides = [1, 1]} : vector<8x1280xf32> to vector<8x1024xf32>
      %c112 = arith.constant 112 : index
      %c0_39 = arith.constant 0 : index
      %77 = vector.load %arg6[%c112, %c0_39] : memref<216x1024xf32, #tpu.memory_space<vmem>>, vector<8x1024xf32>
      tpu.vector_store %arg6[%c112, %c0_39], %76 {strides = array<i32>} : memref<216x1024xf32, #tpu.memory_space<vmem>>, vector<8x1024xf32>,
      %78 = vector.extract_strided_slice %47 {offsets = [0, 137], sizes = [8, 1024], strides = [1, 1]} : vector<8x1280xf32> to vector<8x1024xf32>
      %c120 = arith.constant 120 : index
      %c0_40 = arith.constant 0 : index
      %79 = vector.load %arg6[%c120, %c0_40] : memref<216x1024xf32, #tpu.memory_space<vmem>>, vector<8x1024xf32>
      tpu.vector_store %arg6[%c120, %c0_40], %78 {strides = array<i32>} : memref<216x1024xf32, #tpu.memory_space<vmem>>, vector<8x1024xf32>,
      %80 = vector.extract_strided_slice %47 {offsets = [0, 138], sizes = [8, 1024], strides = [1, 1]} : vector<8x1280xf32> to vector<8x1024xf32>
      %c128_41 = arith.constant 128 : index
      %c0_42 = arith.constant 0 : index
      %81 = vector.load %arg6[%c128_41, %c0_42] : memref<216x1024xf32, #tpu.memory_space<vmem>>, vector<8x1024xf32>
      tpu.vector_store %arg6[%c128_41, %c0_42], %80 {strides = array<i32>} : memref<216x1024xf32, #tpu.memory_space<vmem>>, vector<8x1024xf32>,
      %82 = vector.extract_strided_slice %47 {offsets = [0, 139], sizes = [8, 1024], strides = [1, 1]} : vector<8x1280xf32> to vector<8x1024xf32>
      %c136 = arith.constant 136 : index
      %c0_43 = arith.constant 0 : index
      %83 = vector.load %arg6[%c136, %c0_43] : memref<216x1024xf32, #tpu.memory_space<vmem>>, vector<8x1024xf32>
      tpu.vector_store %arg6[%c136, %c0_43], %82 {strides = array<i32>} : memref<216x1024xf32, #tpu.memory_space<vmem>>, vector<8x1024xf32>,
      %84 = vector.extract_strided_slice %47 {offsets = [0, 217], sizes = [8, 1024], strides = [1, 1]} : vector<8x1280xf32> to vector<8x1024xf32>
      %c144 = arith.constant 144 : index
      %c0_44 = arith.constant 0 : index
      %85 = vector.load %arg6[%c144, %c0_44] : memref<216x1024xf32, #tpu.memory_space<vmem>>, vector<8x1024xf32>
      tpu.vector_store %arg6[%c144, %c0_44], %84 {strides = array<i32>} : memref<216x1024xf32, #tpu.memory_space<vmem>>, vector<8x1024xf32>,
      %86 = vector.extract_strided_slice %47 {offsets = [0, 218], sizes = [8, 1024], strides = [1, 1]} : vector<8x1280xf32> to vector<8x1024xf32>
      %c152 = arith.constant 152 : index
      %c0_45 = arith.constant 0 : index
      %87 = vector.load %arg6[%c152, %c0_45] : memref<216x1024xf32, #tpu.memory_space<vmem>>, vector<8x1024xf32>
      tpu.vector_store %arg6[%c152, %c0_45], %86 {strides = array<i32>} : memref<216x1024xf32, #tpu.memory_space<vmem>>, vector<8x1024xf32>,
      %88 = vector.extract_strided_slice %47 {offsets = [0, 219], sizes = [8, 1024], strides = [1, 1]} : vector<8x1280xf32> to vector<8x1024xf32>
      %c160 = arith.constant 160 : index
      %c0_46 = arith.constant 0 : index
      %89 = vector.load %arg6[%c160, %c0_46] : memref<216x1024xf32, #tpu.memory_space<vmem>>, vector<8x1024xf32>
      tpu.vector_store %arg6[%c160, %c0_46], %88 {strides = array<i32>} : memref<216x1024xf32, #tpu.memory_space<vmem>>, vector<8x1024xf32>,
      %90 = vector.extract_strided_slice %47 {offsets = [0, 227], sizes = [8, 1024], strides = [1, 1]} : vector<8x1280xf32> to vector<8x1024xf32>
      %c168 = arith.constant 168 : index
      %c0_47 = arith.constant 0 : index
      %91 = vector.load %arg6[%c168, %c0_47] : memref<216x1024xf32, #tpu.memory_space<vmem>>, vector<8x1024xf32>
      tpu.vector_store %arg6[%c168, %c0_47], %90 {strides = array<i32>} : memref<216x1024xf32, #tpu.memory_space<vmem>>, vector<8x1024xf32>,
      %92 = vector.extract_strided_slice %47 {offsets = [0, 228], sizes = [8, 1024], strides = [1, 1]} : vector<8x1280xf32> to vector<8x1024xf32>
      %c176 = arith.constant 176 : index
      %c0_48 = arith.constant 0 : index
      %93 = vector.load %arg6[%c176, %c0_48] : memref<216x1024xf32, #tpu.memory_space<vmem>>, vector<8x1024xf32>
      tpu.vector_store %arg6[%c176, %c0_48], %92 {strides = array<i32>} : memref<216x1024xf32, #tpu.memory_space<vmem>>, vector<8x1024xf32>,
      %94 = vector.extract_strided_slice %47 {offsets = [0, 229], sizes = [8, 1024], strides = [1, 1]} : vector<8x1280xf32> to vector<8x1024xf32>
      %c184 = arith.constant 184 : index
      %c0_49 = arith.constant 0 : index
      %95 = vector.load %arg6[%c184, %c0_49] : memref<216x1024xf32, #tpu.memory_space<vmem>>, vector<8x1024xf32>
      tpu.vector_store %arg6[%c184, %c0_49], %94 {strides = array<i32>} : memref<216x1024xf32, #tpu.memory_space<vmem>>, vector<8x1024xf32>,
      %96 = vector.extract_strided_slice %47 {offsets = [0, 237], sizes = [8, 1024], strides = [1, 1]} : vector<8x1280xf32> to vector<8x1024xf32>
      %c192 = arith.constant 192 : index
      %c0_50 = arith.constant 0 : index
      %97 = vector.load %arg6[%c192, %c0_50] : memref<216x1024xf32, #tpu.memory_space<vmem>>, vector<8x1024xf32>
      tpu.vector_store %arg6[%c192, %c0_50], %96 {strides = array<i32>} : memref<216x1024xf32, #tpu.memory_space<vmem>>, vector<8x1024xf32>,
      %98 = vector.extract_strided_slice %47 {offsets = [0, 238], sizes = [8, 1024], strides = [1, 1]} : vector<8x1280xf32> to vector<8x1024xf32>
      %c200 = arith.constant 200 : index
      %c0_51 = arith.constant 0 : index
      %99 = vector.load %arg6[%c200, %c0_51] : memref<216x1024xf32, #tpu.memory_space<vmem>>, vector<8x1024xf32>
      tpu.vector_store %arg6[%c200, %c0_51], %98 {strides = array<i32>} : memref<216x1024xf32, #tpu.memory_space<vmem>>, vector<8x1024xf32>,
      %100 = vector.extract_strided_slice %47 {offsets = [0, 239], sizes = [8, 1024], strides = [1, 1]} : vector<8x1280xf32> to vector<8x1024xf32>
      %c208 = arith.constant 208 : index
      %c0_52 = arith.constant 0 : index
      %101 = vector.load %arg6[%c208, %c0_52] : memref<216x1024xf32, #tpu.memory_space<vmem>>, vector<8x1024xf32>
      tpu.vector_store %arg6[%c208, %c0_52], %100 {strides = array<i32>} : memref<216x1024xf32, #tpu.memory_space<vmem>>, vector<8x1024xf32>,
    } else {
    }
    %c0 = arith.constant 0 : index
    %c0_1 = arith.constant 0 : index
    %3 = vector.load %arg3[%c0, %c0_1] : memref<4x216xf32, #tpu.memory_space<vmem>>, vector<4x216xf32>
    %c0_2 = arith.constant 0 : index
    %c0_3 = arith.constant 0 : index
    %4 = vector.load %arg6[%c0_2, %c0_3] : memref<216x1024xf32, #tpu.memory_space<vmem>>, vector<216x1024xf32>
    %cst = arith.constant dense<0.000000e+00> : vector<4x1024xf32>
    %5 = tpu.matmul %3, %4, %cst {dimension_numbers = #tpu.dot_dimension_numbers<[1], [0], [0], [1], [0, 0, 1, 1], [], []>} : vector<4x216xf32>, vector<216x1024xf32>, vector<4x1024xf32> -> vector<4x1024xf32>
    %c0_4 = arith.constant 0 : index
    %c0_5 = arith.constant 0 : index
    %6 = vector.load %arg4[%c0_4, %c0_5] : memref<1x1024xf32, #tpu.memory_space<vmem>>, vector<1x1024xf32>
    %7 = vector.broadcast %6 : vector<1x1024xf32> to vector<4x1024xf32>
    %8 = arith.mulf %5, %7 : vector<4x1024xf32>
    %cst_6 = arith.constant dense<0.000000e+00> : vector<4xf32>
    %9 = vector.multi_reduction <add>, %8, %cst_6 [1] : vector<4x1024xf32> to vector<4xf32>
    %10 = vector.shape_cast %9 : vector<4xf32> to vector<4x1xf32>
    %cst_7 = arith.constant 0.001953125 : f32
    %11 = vector.broadcast %cst_7 : f32 to vector<4x1xf32>
    %12 = arith.mulf %10, %11 : vector<4x1xf32>
    %13 = vector.broadcast %12 : vector<4x1xf32> to vector<4x1024xf32>
    %14 = arith.subf %5, %13 : vector<4x1024xf32>
    %15 = vector.broadcast %6 : vector<1x1024xf32> to vector<4x1024xf32>
    %16 = arith.mulf %14, %15 : vector<4x1024xf32>
    %17 = arith.mulf %16, %16 : vector<4x1024xf32>
    %cst_8 = arith.constant dense<0.000000e+00> : vector<4xf32>
    %18 = vector.multi_reduction <add>, %17, %cst_8 [1] : vector<4x1024xf32> to vector<4xf32>
    %19 = vector.shape_cast %18 : vector<4xf32> to vector<4x1xf32>
    %cst_9 = arith.constant 0.001953125 : f32
    %20 = vector.broadcast %cst_9 : f32 to vector<4x1xf32>
    %21 = arith.mulf %19, %20 : vector<4x1xf32>
    %22 = vector.broadcast %12 : vector<4x1xf32> to vector<4x1024xf32>
    %23 = arith.subf %5, %22 : vector<4x1024xf32>
    %cst_10 = arith.constant 9.99999974E-6 : f32
    %24 = vector.broadcast %cst_10 : f32 to vector<4x1xf32>
    %25 = arith.addf %21, %24 : vector<4x1xf32>
    %26 = math.rsqrt %25 : vector<4x1xf32>
    %27 = vector.broadcast %26 : vector<4x1xf32> to vector<4x1024xf32>
    %28 = arith.mulf %23, %27 : vector<4x1024xf32>
    %cst_11 = arith.constant 0.000000e+00 : f32
    %29 = vector.broadcast %cst_11 : f32 to vector<4x1024xf32>
    %30 = arith.cmpf oge, %28, %29 : vector<4x1024xf32>
    %cst_12 = arith.constant 2.000000e-01 : f32
    %31 = vector.broadcast %cst_12 : f32 to vector<4x1024xf32>
    %32 = arith.mulf %31, %28 : vector<4x1024xf32>
    %33 = arith.select %30, %28, %32 : vector<4x1024xi1>, vector<4x1024xf32>
    %34 = vector.broadcast %6 : vector<1x1024xf32> to vector<4x1024xf32>
    %35 = arith.mulf %33, %34 : vector<4x1024xf32>
    %cst_13 = arith.constant 0.000000e+00 : f32
    %36 = vector.broadcast %cst_13 : f32 to vector<4x128xf32>
    %c0_14 = arith.constant 0 : index
    %c0_15 = arith.constant 0 : index
    %c0_16 = arith.constant 0 : index
    %37 = vector.load %arg5[%c0_14, %c0_15, %c0_16] : memref<1x4x1280xf32, #tpu.memory_space<vmem>>, vector<1x4x128xf32>
    %38 = vector.shape_cast %37 : vector<1x4x128xf32> to vector<4x128xf32>
    %39 = vector.shape_cast %36 : vector<4x128xf32> to vector<1x4x128xf32>
    tpu.vector_store %arg5[%c0_14, %c0_15, %c0_16], %39 {strides = array<i32>} : memref<1x4x1280xf32, #tpu.memory_space<vmem>>, vector<1x4x128xf32>,
    %c0_17 = arith.constant 0 : index
    %c0_18 = arith.constant 0 : index
    %c128 = arith.constant 128 : index
    %40 = vector.load %arg5[%c0_17, %c0_18, %c128] : memref<1x4x1280xf32, #tpu.memory_space<vmem>>, vector<1x4x1024xf32>
    %41 = vector.shape_cast %40 : vector<1x4x1024xf32> to vector<4x1024xf32>
    %42 = vector.shape_cast %35 : vector<4x1024xf32> to vector<1x4x1024xf32>
    tpu.vector_store %arg5[%c0_17, %c0_18, %c128], %42 {strides = array<i32>} : memref<1x4x1280xf32, #tpu.memory_space<vmem>>, vector<1x4x1024xf32>,
    %c0_19 = arith.constant 0 : index
    %c0_20 = arith.constant 0 : index
    %c1152 = arith.constant 1152 : index
    %43 = vector.load %arg5[%c0_19, %c0_20, %c1152] : memref<1x4x1280xf32, #tpu.memory_space<vmem>>, vector<1x4x128xf32>
    %44 = vector.shape_cast %43 : vector<1x4x128xf32> to vector<4x128xf32>
    %45 = vector.shape_cast %36 : vector<4x128xf32> to vector<1x4x128xf32>
    tpu.vector_store %arg5[%c0_19, %c0_20, %c1152], %45 {strides = array<i32>} : memref<1x4x1280xf32, #tpu.memory_space<vmem>>, vector<1x4x128xf32>,
    return
  }
  func.func @transform_0(%arg0: i32, %arg1: i32) -> (i32, i32, i32) {
    %c0_i32 = arith.constant 0 : i32
    %c0_i32_0 = arith.constant 0 : i32
    %c0_i32_1 = arith.constant 0 : i32
    return %arg0, %c0_i32, %c0_i32_0 : i32, i32, i32
  }
  func.func @transform_1(%arg0: i32, %arg1: i32) -> (i32, i32) {
    %c0_i32 = arith.constant 0 : i32
    %c0_i32_0 = arith.constant 0 : i32
    return %arg1, %c0_i32 : i32, i32
  }
  func.func @transform_2(%arg0: i32, %arg1: i32) -> (i32, i32) {
    %c0_i32 = arith.constant 0 : i32
    %c0_i32_0 = arith.constant 0 : i32
    %c0_i32_1 = arith.constant 0 : i32
    return %c0_i32, %c0_i32_0 : i32, i32
  }
  func.func @transform_3(%arg0: i32, %arg1: i32) -> (i32, i32, i32) {
    %c0_i32 = arith.constant 0 : i32
    %c0_i32_0 = arith.constant 0 : i32
    return %arg0, %arg1, %c0_i32 : i32, i32, i32
  }
}

</mosaic_0001>

<llo_original>
// kernel: dense_block.2
$region0: #{dense_block.2}
  #allocation0 [shape = 'u32[]', space=smem, size = 0x4, offset = 0x4, fixed_abs, tag = 'smem constant byte address 0x4 - core index']
  #allocation1 [shape = 'u32[144,128]{1,0:T(1,128)}', space=vmem, size = 0x12000, scoped, tag = 'internal scratch']
  #allocation2 [shape = 'f32[108,1024]{1,0:T(8,128)}', space=vmem, size = 0x70000, scoped, tag = 'scratch operand']
  %s0 = inlined_call_operand.vmem [shape: f32[2,4,1280], index: 0, kind: input, shape index: {}]
  %s1 = inlined_call_operand.vmem [shape: f32[4,108], index: 1, kind: input, shape index: {}]
  %s2 = inlined_call_operand.vmem [shape: f32[1,1024], index: 2, kind: input, shape index: {}]
  %s3 = inlined_call_operand.vmem [shape: f32[2,4,1280], index: 3, kind: output, shape index: {}]
  %s4 = sld [smem:[#allocation0]]
  $region49: #{dense_block.2} parent=0
    _
  %s6 = ssub.s32 1, %s4
  %s7 = scalar_select 0, %s6, %s4
  loop: start=0, step=1, limit=4
  $region2: #{dense_block.2} parent=0 // loop_pre_header
    _
  $region3: #{dense_block.2} parent=0 // loop_header
    %s9 = sphi 0, %s13
    %p10 = scmp.ge.s32.totalorder %s9, 4
    %s16 = sphi 0, %s28
    %s17 = sphi 0, %s24
    %s18 = sphi 0, %s16
    %s19 = sphi 0, %s17
    %s20 = sphi 0, %s18
    %s21 = sphi 0, %s19
    %s31 = sphi 0, %s33
    %s34 = sphi 0, %s31
    %s35 = sphi 0, %s34
    %s51 = sphi 0, %s35
    %s57 = sphi 0, %s59
    %s60 = sphi 0, %s57
    %s61 = sphi 0, %s60
    %s77 = sphi 0, %s61
    %s81 = sphi 0, %s81
    %s83 = sphi 0, %s81
    %s84 = sphi 0, %s83
    %s98 = sphi 0, %s84
    %s106 = sphi 0, %s108
    %s109 = sphi 0, %s106
    %s110 = sphi 0, %s109
    %s126 = sphi 0, %s110
  $region4: #{dense_block.2} parent=0 // loop_header_branch
    %12 = sbr.rel (%p10) target = $region8
  $region5: #{dense_block.2} parent=0 // loop_body
    %s14 = ssub.s32 %s9, 1
    %s15 = ssub.s32 %s9, 2
    %s22 = sadd.s32 1, %s17
    %p23 = scmp.ge.s32.totalorder %s22, 1
    %s24 = scalar_select %p23, 0, %s22
    %s25 = sadd.s32 1, %s16
    %s26 = scalar_select %p23, %s25, %s16
    %p27 = scmp.ge.s32.totalorder %s26, 2
    %s28 = scalar_select %p27, 0, %s26
    %s29 = ssub.s32 %s16, %s28
    %p30 = scmp.eq.s32.totalorder %s29, 0
    %s32 = sadd.s32 %s31, 1
    %s33 = scalar_select %p30, %s31, %s32
    %p36 = pneg %p30
    %p37 = scmp.eq.s32.totalorder %s9, 1
    %p38 = por %p36, %p37
    %p39 = scmp.ne.s32.totalorder %s31, %s34
    %p40 = scmp.eq.s32.totalorder %s9, 0
    %p41 = por %p39, %p40
    %p42 = scmp.ne.s32.totalorder %s31, %s34
    %p43 = scmp.eq.s32.totalorder %s14, 1
    %p44 = por %p42, %p43
    %p45 = scmp.ne.s32.totalorder %s34, %s35
    %p46 = scmp.eq.s32.totalorder %s14, 0
    %p47 = por %p45, %p46
    %p48 = scmp.ne.s32.totalorder %s34, %s35
    %p49 = scmp.eq.s32.totalorder %s15, 1
    %p50 = por %p48, %p49
    %p52 = scmp.ne.s32.totalorder %s35, %s51
    %p53 = scmp.eq.s32.totalorder %s15, 0
    %p54 = por %p52, %p53
    %s55 = ssub.s32 %s17, %s24
    %p56 = scmp.eq.s32.totalorder %s55, 0
    %s58 = sadd.s32 %s57, 1
    %s59 = scalar_select %p56, %s57, %s58
    %p62 = pneg %p56
    %p63 = scmp.eq.s32.totalorder %s9, 1
    %p64 = por %p62, %p63
    %p65 = scmp.ne.s32.totalorder %s57, %s60
    %p66 = scmp.eq.s32.totalorder %s9, 0
    %p67 = por %p65, %p66
    %p68 = scmp.ne.s32.totalorder %s57, %s60
    %p69 = scmp.eq.s32.totalorder %s14, 1
    %p70 = por %p68, %p69
    %p71 = scmp.ne.s32.totalorder %s60, %s61
    %p72 = scmp.eq.s32.totalorder %s14, 0
    %p73 = por %p71, %p72
    %p74 = scmp.ne.s32.totalorder %s60, %s61
    %p75 = scmp.eq.s32.totalorder %s15, 1
    %p76 = por %p74, %p75
    %p78 = scmp.ne.s32.totalorder %s61, %s77
    %p79 = scmp.eq.s32.totalorder %s15, 0
    %p80 = por %p78, %p79
    %s82 = sadd.s32 %s81, 1
    %p85 = scmp.eq.s32.totalorder %s9, 1
    %p86 = scmp.ne.s32.totalorder %s81, %s83
    %p87 = scmp.eq.s32.totalorder %s9, 0
    %p88 = por %p86, %p87
    %p89 = scmp.ne.s32.totalorder %s81, %s83
    %p90 = scmp.eq.s32.totalorder %s14, 1
    %p91 = por %p89, %p90
    %p92 = scmp.ne.s32.totalorder %s83, %s84
    %p93 = scmp.eq.s32.totalorder %s14, 0
    %p94 = por %p92, %p93
    %p95 = scmp.ne.s32.totalorder %s83, %s84
    %p96 = scmp.eq.s32.totalorder %s15, 1
    %p97 = por %p95, %p96
    %p99 = scmp.ne.s32.totalorder %s84, %s98
    %p100 = scmp.eq.s32.totalorder %s15, 0
    %p101 = por %p99, %p100
    %s102 = ssub.s32 %s16, %s28
    %s103 = ssub.s32 %s17, %s24
    %s104 = sor.u32 %s102, %s103
    %p105 = scmp.eq.s32.totalorder %s104, 0
    %s107 = sadd.s32 %s106, 1
    %s108 = scalar_select %p105, %s106, %s107
    %p111 = pneg %p105
    %p112 = scmp.eq.s32.totalorder %s9, 1
    %p113 = por %p111, %p112
    %p114 = scmp.ne.s32.totalorder %s106, %s109
    %p115 = scmp.eq.s32.totalorder %s9, 0
    %p116 = por %p114, %p115
    %p117 = scmp.ne.s32.totalorder %s106, %s109
    %p118 = scmp.eq.s32.totalorder %s14, 1
    %p119 = por %p117, %p118
    %p120 = scmp.ne.s32.totalorder %s109, %s110
    %p121 = scmp.eq.s32.totalorder %s14, 0
    %p122 = por %p120, %p121
    %p123 = scmp.ne.s32.totalorder %s109, %s110
    %p124 = scmp.eq.s32.totalorder %s15, 1
    %p125 = por %p123, %p124
    %p127 = scmp.ne.s32.totalorder %s110, %s126
    %p128 = scmp.eq.s32.totalorder %s15, 0
    %p129 = por %p127, %p128
    %p130 = scmp.le.s32.totalorder 1, %s9
    %p131 = scmp.lt.s32.totalorder %s9, 3
    %p132 = pnand %p130, %p131
    %p133 = pneg %p132
    // Predicated region
    $region9: #{dense_block.2} parent=5 // pred_check
      _
    $region10: #{dense_block.2} parent=5 // pred_check_branch
      %135 = sbr.rel (%p132) target = $region12
    $region11: #{dense_block.2} parent=5 // pred_region
      %s136 = ssub.s32 %s9, 1
      // Predicated region
      $region13: #{dense_block.2} parent=11 // pred_check
        %p137 = pneg %p73
      $region14: #{dense_block.2} parent=11 // pred_check_branch
        %139 = sbr.rel (%p137) target = $region16
      $region15: #{dense_block.2} parent=11 // pred_region
        %p140 = scmp.lt.s32.totalorder %s19, 0
        %s141 = scalar_select %p140, %s19, 0
        %s142 = smul.addr %s141, 4
        %s143 = scalar_lea.vmem %s1, %s142
      $region16: #{dense_block.2} parent=11 // pred_fallthru
        _
      // Predicated region
      $region17: #{dense_block.2} parent=11 // pred_check
        %p144 = pneg %p94
      $region18: #{dense_block.2} parent=11 // pred_check_branch
        %146 = sbr.rel (%p144) target = $region20
      $region19: #{dense_block.2} parent=11 // pred_region
        _
      $region20: #{dense_block.2} parent=11 // pred_fallthru
        _
    $region12: #{dense_block.2} parent=5 // pred_fallthru
      _
    %p147 = scmp.lt.s32.totalorder %s9, 2
    // Predicated region
    $region21: #{dense_block.2} parent=5 // pred_check
      %p148 = pneg %p147
    $region22: #{dense_block.2} parent=5 // pred_check_branch
      %150 = sbr.rel (%p148) target = $region24
    $region23: #{dense_block.2} parent=5 // pred_region
      // Predicated region
      $region25: #{dense_block.2} parent=23 // pred_check
        %p151 = pneg %p41
      $region26: #{dense_block.2} parent=23 // pred_check_branch
        %153 = sbr.rel (%p151) target = $region28
      $region27: #{dense_block.2} parent=23 // pred_region
        %p154 = scmp.lt.s32.totalorder %s16, 1
        %s155 = scalar_select %p154, %s16, 1
        %s156 = smul.addr %s155, 10
        %s157 = smul.addr %s156, 4
        %s158 = scalar_lea.vmem %s0, %s157
      $region28: #{dense_block.2} parent=23 // pred_fallthru
        _
    $region24: #{dense_block.2} parent=5 // pred_fallthru
      _
    %p159 = scmp.le.s32.totalorder 1, %s9
    %p160 = scmp.lt.s32.totalorder %s9, 3
    %p161 = pnand %p159, %p160
    %p162 = pneg %p161
    // Predicated region
    $region29: #{dense_block.2} parent=5 // pred_check
      _
    $region30: #{dense_block.2} parent=5 // pred_check_branch
      %164 = sbr.rel (%p161) target = $region32
    $region31: #{dense_block.2} parent=5 // pred_region
      %s165 = ssub.s32 %s9, 1
      %p166 = scmp.lt.s32.totalorder %s18, 1
      %s167 = scalar_select %p166, %s18, 1
      %s168 = smul.addr %s167, 10
      %s169 = smul.addr %s168, 4
      %s170 = scalar_lea.vmem %s0, %s169
      %p171 = pneg %p47
      %p172 = pneg %p44
      %p173 = scmp.lt.s32.totalorder %s19, 0
      %s174 = scalar_select %p173, %s19, 0
      %s175 = smul.addr %s174, 4
      %s176 = scalar_lea.vmem %s1, %s175
      %p177 = pneg %p73
      %p178 = pneg %p70
      %p179 = pneg %p94
      %p180 = pneg %p91
      %p181 = pneg %p122
      %p182 = pneg %p119
      %p183 = scmp.lt.s32.totalorder %s18, 1
      %s184 = scalar_select %p183, %s18, 1
      %p185 = scmp.lt.s32.totalorder %s19, 0
      %s186 = scalar_select %p185, %s19, 0
      %s187 = smul.addr %s186, 10
      %s188 = smul.addr %s184, 10
      %s189 = sadd.s32 %s187, %s188
      %s190 = smul.addr %s189, 4
      %s191 = scalar_lea.vmem %s3, %s190
      %p192 = scmp.lt.s32.totalorder %s18, 1
      %s193 = scalar_select %p192, %s18, 1
      %s194 = smul.addr %s193, 10
      %s195 = smul.addr %s194, 4
      %s196 = scalar_lea.vmem %s0, %s195
      %p197 = scmp.lt.s32.totalorder %s19, 0
      %s198 = scalar_select %p197, %s19, 0
      %s199 = smul.addr %s198, 4
      %s200 = scalar_lea.vmem %s1, %s199
      %p201 = scmp.lt.s32.totalorder %s18, 1
      %s202 = scalar_select %p201, %s18, 1
      %p203 = scmp.lt.s32.totalorder %s19, 0
      %s204 = scalar_select %p203, %s19, 0
      %s205 = smul.addr %s204, 10
      %s206 = smul.addr %s202, 10
      %s207 = sadd.s32 %s205, %s206
      %s208 = smul.addr %s207, 4
      %s209 = scalar_lea.vmem %s3, %s208
      %p210 = scmp.eq.s32.totalorder %s19, 0
      // Predicated region
      $region33: #{dense_block.2} parent=31 // pred_check
        %p211 = pneg %p210
      $region34: #{dense_block.2} parent=31 // pred_check_branch
        %213 = sbr.rel (%p211) target = $region36
      $region35: #{dense_block.2} parent=31 // pred_region
        %v214 = vld [vmem:[%s196] sm:$0xff]
        %v215 = vld [vmem:[%s196 + $0x8] sm:$0xff]
        %v216 = vld [vmem:[%s196 + $0x10] sm:$0xff]
        %v217 = vld [vmem:[%s196 + $0x18] sm:$0xff]
        %v218 = vld [vmem:[%s196 + $0x20] sm:$0xff]
        %v224 = vcombine.high %v214, %v214
        %v225 = vcombine.high %v215, %v215
        %v226 = vcombine.high %v216, %v216
        %v227 = vcombine.high %v217, %v217
        %228 = vrot.lane.b32.xlu0 %v214, 111
        %v229 = vpop.permute.xlu0 %228
        %230 = vrot.lane.b32.xlu0 %v224, 111
        %v231 = vpop.permute.xlu0 %230
        %232 = vrot.lane.b32.xlu0 %v215, 111
        %v233 = vpop.permute.xlu0 %232
        %234 = vrot.lane.b32.xlu0 %v225, 111
        %v235 = vpop.permute.xlu0 %234
        %236 = vrot.lane.b32.xlu0 %v216, 111
        %v237 = vpop.permute.xlu0 %236
        %238 = vrot.lane.b32.xlu0 %v226, 111
        %v239 = vpop.permute.xlu0 %238
        %240 = vrot.lane.b32.xlu0 %v217, 111
        %v241 = vpop.permute.xlu0 %240
        %242 = vrot.lane.b32.xlu0 %v227, 111
        %v243 = vpop.permute.xlu0 %242
        %244 = vrot.lane.b32.xlu0 %v218, 111
        %v245 = vpop.permute.xlu0 %244
        %vm246 = vcmask 908288
        %v247 = vsel %vm246, %v229, %v231
        %v248 = vsel %vm246, %v231, %v233
        %v249 = vsel %vm246, %v233, %v235
        %v250 = vsel %vm246, %v235, %v237
        %v251 = vsel %vm246, %v237, %v239
        %v252 = vsel %vm246, %v239, %v241
        %v253 = vsel %vm246, %v241, %v243
        %v254 = vsel %vm246, %v243, %v245
        %263 = vst [vmem:[#allocation2] sm:$0xf] %v247
        %264 = vst [vmem:[#allocation2 + $0x8] sm:$0xf] %v248
        %265 = vst [vmem:[#allocation2 + $0x10] sm:$0xf] %v249
        %266 = vst [vmem:[#allocation2 + $0x18] sm:$0xf] %v250
        %267 = vst [vmem:[#allocation2 + $0x20] sm:$0xf] %v251
        %268 = vst [vmem:[#allocation2 + $0x28] sm:$0xf] %v252
        %269 = vst [vmem:[#allocation2 + $0x30] sm:$0xf] %v253
        %270 = vst [vmem:[#allocation2 + $0x38] sm:$0xf] %v254
        %v271 = vcombine.low %v214, %v214
        %v272 = vcombine.low %v215, %v215
        %v273 = vcombine.low %v216, %v216
        %v274 = vcombine.low %v217, %v217
        %v275 = vcombine.low %v218, %v218
        %276 = vrot.lane.b32.xlu0 %v271, 110
        %v277 = vpop.permute.xlu0 %276
        %278 = vrot.lane.b32.xlu0 %v214, 110
        %v279 = vpop.permute.xlu0 %278
        %280 = vrot.lane.b32.xlu0 %v272, 110
        %v281 = vpop.permute.xlu0 %280
        %282 = vrot.lane.b32.xlu0 %v215, 110
        %v283 = vpop.permute.xlu0 %282
        %284 = vrot.lane.b32.xlu0 %v273, 110
        %v285 = vpop.permute.xlu0 %284
        %286 = vrot.lane.b32.xlu0 %v216, 110
        %v287 = vpop.permute.xlu0 %286
        %288 = vrot.lane.b32.xlu0 %v274, 110
        %v289 = vpop.permute.xlu0 %288
        %290 = vrot.lane.b32.xlu0 %v217, 110
        %v291 = vpop.permute.xlu0 %290
        %292 = vrot.lane.b32.xlu0 %v275, 110
        %v293 = vpop.permute.xlu0 %292
        %vm294 = vcmask 900096
        %v295 = vsel %vm294, %v277, %v279
        %v296 = vsel %vm294, %v279, %v281
        %v297 = vsel %vm294, %v281, %v283
        %v298 = vsel %vm294, %v283, %v285
        %v299 = vsel %vm294, %v285, %v287
        %v300 = vsel %vm294, %v287, %v289
        %v301 = vsel %vm294, %v289, %v291
        %v302 = vsel %vm294, %v291, %v293
        %311 = vst [vmem:[#allocation2] sm:$0xf0] %v295
        %312 = vst [vmem:[#allocation2 + $0x8] sm:$0xf0] %v296
        %313 = vst [vmem:[#allocation2 + $0x10] sm:$0xf0] %v297
        %314 = vst [vmem:[#allocation2 + $0x18] sm:$0xf0] %v298
        %315 = vst [vmem:[#allocation2 + $0x20] sm:$0xf0] %v299
        %316 = vst [vmem:[#allocation2 + $0x28] sm:$0xf0] %v300
        %317 = vst [vmem:[#allocation2 + $0x30] sm:$0xf0] %v301
        %318 = vst [vmem:[#allocation2 + $0x38] sm:$0xf0] %v302
        %319 = vrot.lane.b32.xlu0 %v214, 109
        %v320 = vpop.permute.xlu0 %319
        %321 = vrot.lane.b32.xlu0 %v224, 109
        %v322 = vpop.permute.xlu0 %321
        %323 = vrot.lane.b32.xlu0 %v215, 109
        %v324 = vpop.permute.xlu0 %323
        %325 = vrot.lane.b32.xlu0 %v225, 109
        %v326 = vpop.permute.xlu0 %325
        %327 = vrot.lane.b32.xlu0 %v216, 109
        %v328 = vpop.permute.xlu0 %327
        %329 = vrot.lane.b32.xlu0 %v226, 109
        %v330 = vpop.permute.xlu0 %329
        %331 = vrot.lane.b32.xlu0 %v217, 109
        %v332 = vpop.permute.xlu0 %331
        %333 = vrot.lane.b32.xlu0 %v227, 109
        %v334 = vpop.permute.xlu0 %333
        %335 = vrot.lane.b32.xlu0 %v218, 109
        %v336 = vpop.permute.xlu0 %335
        %vm337 = vcmask 891904
        %v338 = vsel %vm337, %v320, %v322
        %v339 = vsel %vm337, %v322, %v324
        %v340 = vsel %vm337, %v324, %v326
        %v341 = vsel %vm337, %v326, %v328
        %v342 = vsel %vm337, %v328, %v330
        %v343 = vsel %vm337, %v330, %v332
        %v344 = vsel %vm337, %v332, %v334
        %v345 = vsel %vm337, %v334, %v336
        %354 = vst [vmem:[#allocation2 + $0x40] sm:$0xf] %v338
        %355 = vst [vmem:[#allocation2 + $0x48] sm:$0xf] %v339
        %356 = vst [vmem:[#allocation2 + $0x50] sm:$0xf] %v340
        %357 = vst [vmem:[#allocation2 + $0x58] sm:$0xf] %v341
        %358 = vst [vmem:[#allocation2 + $0x60] sm:$0xf] %v342
        %359 = vst [vmem:[#allocation2 + $0x68] sm:$0xf] %v343
        %360 = vst [vmem:[#allocation2 + $0x70] sm:$0xf] %v344
        %361 = vst [vmem:[#allocation2 + $0x78] sm:$0xf] %v345
        %362 = vrot.lane.b32.xlu0 %v271, 101
        %v363 = vpop.permute.xlu0 %362
        %364 = vrot.lane.b32.xlu0 %v214, 101
        %v365 = vpop.permute.xlu0 %364
        %366 = vrot.lane.b32.xlu0 %v272, 101
        %v367 = vpop.permute.xlu0 %366
        %368 = vrot.lane.b32.xlu0 %v215, 101
        %v369 = vpop.permute.xlu0 %368
        %370 = vrot.lane.b32.xlu0 %v273, 101
        %v371 = vpop.permute.xlu0 %370
        %372 = vrot.lane.b32.xlu0 %v216, 101
        %v373 = vpop.permute.xlu0 %372
        %374 = vrot.lane.b32.xlu0 %v274, 101
        %v375 = vpop.permute.xlu0 %374
        %376 = vrot.lane.b32.xlu0 %v217, 101
        %v377 = vpop.permute.xlu0 %376
        %378 = vrot.lane.b32.xlu0 %v275, 101
        %v379 = vpop.permute.xlu0 %378
        %vm380 = vcmask 826368
        %v381 = vsel %vm380, %v363, %v365
        %v382 = vsel %vm380, %v365, %v367
        %v383 = vsel %vm380, %v367, %v369
        %v384 = vsel %vm380, %v369, %v371
        %v385 = vsel %vm380, %v371, %v373
        %v386 = vsel %vm380, %v373, %v375
        %v387 = vsel %vm380, %v375, %v377
        %v388 = vsel %vm380, %v377, %v379
        %397 = vst [vmem:[#allocation2 + $0x40] sm:$0xf0] %v381
        %398 = vst [vmem:[#allocation2 + $0x48] sm:$0xf0] %v382
        %399 = vst [vmem:[#allocation2 + $0x50] sm:$0xf0] %v383
        %400 = vst [vmem:[#allocation2 + $0x58] sm:$0xf0] %v384
        %401 = vst [vmem:[#allocation2 + $0x60] sm:$0xf0] %v385
        %402 = vst [vmem:[#allocation2 + $0x68] sm:$0xf0] %v386
        %403 = vst [vmem:[#allocation2 + $0x70] sm:$0xf0] %v387
        %404 = vst [vmem:[#allocation2 + $0x78] sm:$0xf0] %v388
        %405 = vrot.lane.b32.xlu0 %v214, 100
        %v406 = vpop.permute.xlu0 %405
        %407 = vrot.lane.b32.xlu0 %v224, 100
        %v408 = vpop.permute.xlu0 %407
        %409 = vrot.lane.b32.xlu0 %v215, 100
        %v410 = vpop.permute.xlu0 %409
        %411 = vrot.lane.b32.xlu0 %v225, 100
        %v412 = vpop.permute.xlu0 %411
        %413 = vrot.lane.b32.xlu0 %v216, 100
        %v414 = vpop.permute.xlu0 %413
        %415 = vrot.lane.b32.xlu0 %v226, 100
        %v416 = vpop.permute.xlu0 %415
        %417 = vrot.lane.b32.xlu0 %v217, 100
        %v418 = vpop.permute.xlu0 %417
        %419 = vrot.lane.b32.xlu0 %v227, 100
        %v420 = vpop.permute.xlu0 %419
        %421 = vrot.lane.b32.xlu0 %v218, 100
        %v422 = vpop.permute.xlu0 %421
        %vm423 = vcmask 818176
        %v424 = vsel %vm423, %v406, %v408
        %v425 = vsel %vm423, %v408, %v410
        %v426 = vsel %vm423, %v410, %v412
        %v427 = vsel %vm423, %v412, %v414
        %v428 = vsel %vm423, %v414, %v416
        %v429 = vsel %vm423, %v416, %v418
        %v430 = vsel %vm423, %v418, %v420
        %v431 = vsel %vm423, %v420, %v422
        %440 = vst [vmem:[#allocation2 + $0x80] sm:$0xf] %v424
        %441 = vst [vmem:[#allocation2 + $0x88] sm:$0xf] %v425
        %442 = vst [vmem:[#allocation2 + $0x90] sm:$0xf] %v426
        %443 = vst [vmem:[#allocation2 + $0x98] sm:$0xf] %v427
        %444 = vst [vmem:[#allocation2 + $0xa0] sm:$0xf] %v428
        %445 = vst [vmem:[#allocation2 + $0xa8] sm:$0xf] %v429
        %446 = vst [vmem:[#allocation2 + $0xb0] sm:$0xf] %v430
        %447 = vst [vmem:[#allocation2 + $0xb8] sm:$0xf] %v431
        %448 = vrot.lane.b32.xlu0 %v271, 99
        %v449 = vpop.permute.xlu0 %448
        %450 = vrot.lane.b32.xlu0 %v214, 99
        %v451 = vpop.permute.xlu0 %450
        %452 = vrot.lane.b32.xlu0 %v272, 99
        %v453 = vpop.permute.xlu0 %452
        %454 = vrot.lane.b32.xlu0 %v215, 99
        %v455 = vpop.permute.xlu0 %454
        %456 = vrot.lane.b32.xlu0 %v273, 99
        %v457 = vpop.permute.xlu0 %456
        %458 = vrot.lane.b32.xlu0 %v216, 99
        %v459 = vpop.permute.xlu0 %458
        %460 = vrot.lane.b32.xlu0 %v274, 99
        %v461 = vpop.permute.xlu0 %460
        %462 = vrot.lane.b32.xlu0 %v217, 99
        %v463 = vpop.permute.xlu0 %462
        %464 = vrot.lane.b32.xlu0 %v275, 99
        %v465 = vpop.permute.xlu0 %464
        %vm466 = vcmask 809984
        %v467 = vsel %vm466, %v449, %v451
        %v468 = vsel %vm466, %v451, %v453
        %v469 = vsel %vm466, %v453, %v455
        %v470 = vsel %vm466, %v455, %v457
        %v471 = vsel %vm466, %v457, %v459
        %v472 = vsel %vm466, %v459, %v461
        %v473 = vsel %vm466, %v461, %v463
        %v474 = vsel %vm466, %v463, %v465
        %483 = vst [vmem:[#allocation2 + $0x80] sm:$0xf0] %v467
        %484 = vst [vmem:[#allocation2 + $0x88] sm:$0xf0] %v468
        %485 = vst [vmem:[#allocation2 + $0x90] sm:$0xf0] %v469
        %486 = vst [vmem:[#allocation2 + $0x98] sm:$0xf0] %v470
        %487 = vst [vmem:[#allocation2 + $0xa0] sm:$0xf0] %v471
        %488 = vst [vmem:[#allocation2 + $0xa8] sm:$0xf0] %v472
        %489 = vst [vmem:[#allocation2 + $0xb0] sm:$0xf0] %v473
        %490 = vst [vmem:[#allocation2 + $0xb8] sm:$0xf0] %v474
        %491 = vrot.lane.b32.xlu0 %v214, 91
        %v492 = vpop.permute.xlu0 %491
        %493 = vrot.lane.b32.xlu0 %v224, 91
        %v494 = vpop.permute.xlu0 %493
        %495 = vrot.lane.b32.xlu0 %v215, 91
        %v496 = vpop.permute.xlu0 %495
        %497 = vrot.lane.b32.xlu0 %v225, 91
        %v498 = vpop.permute.xlu0 %497
        %499 = vrot.lane.b32.xlu0 %v216, 91
        %v500 = vpop.permute.xlu0 %499
        %501 = vrot.lane.b32.xlu0 %v226, 91
        %v502 = vpop.permute.xlu0 %501
        %503 = vrot.lane.b32.xlu0 %v217, 91
        %v504 = vpop.permute.xlu0 %503
        %505 = vrot.lane.b32.xlu0 %v227, 91
        %v506 = vpop.permute.xlu0 %505
        %507 = vrot.lane.b32.xlu0 %v218, 91
        %v508 = vpop.permute.xlu0 %507
        %vm509 = vcmask 744448
        %v510 = vsel %vm509, %v492, %v494
        %v511 = vsel %vm509, %v494, %v496
        %v512 = vsel %vm509, %v496, %v498
        %v513 = vsel %vm509, %v498, %v500
        %v514 = vsel %vm509, %v500, %v502
        %v515 = vsel %vm509, %v502, %v504
        %v516 = vsel %vm509, %v504, %v506
        %v517 = vsel %vm509, %v506, %v508
        %526 = vst [vmem:[#allocation2 + $0xc0] sm:$0xf] %v510
        %527 = vst [vmem:[#allocation2 + $0xc8] sm:$0xf] %v511
        %528 = vst [vmem:[#allocation2 + $0xd0] sm:$0xf] %v512
        %529 = vst [vmem:[#allocation2 + $0xd8] sm:$0xf] %v513
        %530 = vst [vmem:[#allocation2 + $0xe0] sm:$0xf] %v514
        %531 = vst [vmem:[#allocation2 + $0xe8] sm:$0xf] %v515
        %532 = vst [vmem:[#allocation2 + $0xf0] sm:$0xf] %v516
        %533 = vst [vmem:[#allocation2 + $0xf8] sm:$0xf] %v517
        %534 = vrot.lane.b32.xlu0 %v271, 90
        %v535 = vpop.permute.xlu0 %534
        %536 = vrot.lane.b32.xlu0 %v214, 90
        %v537 = vpop.permute.xlu0 %536
        %538 = vrot.lane.b32.xlu0 %v272, 90
        %v539 = vpop.permute.xlu0 %538
        %540 = vrot.lane.b32.xlu0 %v215, 90
        %v541 = vpop.permute.xlu0 %540
        %542 = vrot.lane.b32.xlu0 %v273, 90
        %v543 = vpop.permute.xlu0 %542
        %544 = vrot.lane.b32.xlu0 %v216, 90
        %v545 = vpop.permute.xlu0 %544
        %546 = vrot.lane.b32.xlu0 %v274, 90
        %v547 = vpop.permute.xlu0 %546
        %548 = vrot.lane.b32.xlu0 %v217, 90
        %v549 = vpop.permute.xlu0 %548
        %550 = vrot.lane.b32.xlu0 %v275, 90
        %v551 = vpop.permute.xlu0 %550
        %vm552 = vcmask 736256
        %v553 = vsel %vm552, %v535, %v537
        %v554 = vsel %vm552, %v537, %v539
        %v555 = vsel %vm552, %v539, %v541
        %v556 = vsel %vm552, %v541, %v543
        %v557 = vsel %vm552, %v543, %v545
        %v558 = vsel %vm552, %v545, %v547
        %v559 = vsel %vm552, %v547, %v549
        %v560 = vsel %vm552, %v549, %v551
        %569 = vst [vmem:[#allocation2 + $0xc0] sm:$0xf0] %v553
        %570 = vst [vmem:[#allocation2 + $0xc8] sm:$0xf0] %v554
        %571 = vst [vmem:[#allocation2 + $0xd0] sm:$0xf0] %v555
        %572 = vst [vmem:[#allocation2 + $0xd8] sm:$0xf0] %v556
        %573 = vst [vmem:[#allocation2 + $0xe0] sm:$0xf0] %v557
        %574 = vst [vmem:[#allocation2 + $0xe8] sm:$0xf0] %v558
        %575 = vst [vmem:[#allocation2 + $0xf0] sm:$0xf0] %v559
        %576 = vst [vmem:[#allocation2 + $0xf8] sm:$0xf0] %v560
        %577 = vrot.lane.b32.xlu0 %v214, 89
        %v578 = vpop.permute.xlu0 %577
        %579 = vrot.lane.b32.xlu0 %v224, 89
        %v580 = vpop.permute.xlu0 %579
        %581 = vrot.lane.b32.xlu0 %v215, 89
        %v582 = vpop.permute.xlu0 %581
        %583 = vrot.lane.b32.xlu0 %v225, 89
        %v584 = vpop.permute.xlu0 %583
        %585 = vrot.lane.b32.xlu0 %v216, 89
        %v586 = vpop.permute.xlu0 %585
        %587 = vrot.lane.b32.xlu0 %v226, 89
        %v588 = vpop.permute.xlu0 %587
        %589 = vrot.lane.b32.xlu0 %v217, 89
        %v590 = vpop.permute.xlu0 %589
        %591 = vrot.lane.b32.xlu0 %v227, 89
        %v592 = vpop.permute.xlu0 %591
        %593 = vrot.lane.b32.xlu0 %v218, 89
        %v594 = vpop.permute.xlu0 %593
        %vm595 = vcmask 728064
        %v596 = vsel %vm595, %v578, %v580
        %v597 = vsel %vm595, %v580, %v582
        %v598 = vsel %vm595, %v582, %v584
        %v599 = vsel %vm595, %v584, %v586
        %v600 = vsel %vm595, %v586, %v588
        %v601 = vsel %vm595, %v588, %v590
        %v602 = vsel %vm595, %v590, %v592
        %v603 = vsel %vm595, %v592, %v594
        %612 = vst [vmem:[#allocation2 + $0x100] sm:$0xf] %v596
        %613 = vst [vmem:[#allocation2 + $0x108] sm:$0xf] %v597
        %614 = vst [vmem:[#allocation2 + $0x110] sm:$0xf] %v598
        %615 = vst [vmem:[#allocation2 + $0x118] sm:$0xf] %v599
        %616 = vst [vmem:[#allocation2 + $0x120] sm:$0xf] %v600
        %617 = vst [vmem:[#allocation2 + $0x128] sm:$0xf] %v601
        %618 = vst [vmem:[#allocation2 + $0x130] sm:$0xf] %v602
        %619 = vst [vmem:[#allocation2 + $0x138] sm:$0xf] %v603
        %620 = vrot.lane.b32.xlu0 %v271, 11
        %v621 = vpop.permute.xlu0 %620
        %622 = vrot.lane.b32.xlu0 %v214, 11
        %v623 = vpop.permute.xlu0 %622
        %624 = vrot.lane.b32.xlu0 %v272, 11
        %v625 = vpop.permute.xlu0 %624
        %626 = vrot.lane.b32.xlu0 %v215, 11
        %v627 = vpop.permute.xlu0 %626
        %628 = vrot.lane.b32.xlu0 %v273, 11
        %v629 = vpop.permute.xlu0 %628
        %630 = vrot.lane.b32.xlu0 %v216, 11
        %v631 = vpop.permute.xlu0 %630
        %632 = vrot.lane.b32.xlu0 %v274, 11
        %v633 = vpop.permute.xlu0 %632
        %634 = vrot.lane.b32.xlu0 %v217, 11
        %v635 = vpop.permute.xlu0 %634
        %636 = vrot.lane.b32.xlu0 %v275, 11
        %v637 = vpop.permute.xlu0 %636
        %vm638 = vcmask 89088
        %v639 = vsel %vm638, %v621, %v623
        %v640 = vsel %vm638, %v623, %v625
        %v641 = vsel %vm638, %v625, %v627
        %v642 = vsel %vm638, %v627, %v629
        %v643 = vsel %vm638, %v629, %v631
        %v644 = vsel %vm638, %v631, %v633
        %v645 = vsel %vm638, %v633, %v635
        %v646 = vsel %vm638, %v635, %v637
        %655 = vst [vmem:[#allocation2 + $0x100] sm:$0xf0] %v639
        %656 = vst [vmem:[#allocation2 + $0x108] sm:$0xf0] %v640
        %657 = vst [vmem:[#allocation2 + $0x110] sm:$0xf0] %v641
        %658 = vst [vmem:[#allocation2 + $0x118] sm:$0xf0] %v642
        %659 = vst [vmem:[#allocation2 + $0x120] sm:$0xf0] %v643
        %660 = vst [vmem:[#allocation2 + $0x128] sm:$0xf0] %v644
        %661 = vst [vmem:[#allocation2 + $0x130] sm:$0xf0] %v645
        %662 = vst [vmem:[#allocation2 + $0x138] sm:$0xf0] %v646
        %663 = vrot.lane.b32.xlu0 %v214, 10
        %v664 = vpop.permute.xlu0 %663
        %665 = vrot.lane.b32.xlu0 %v224, 10
        %v666 = vpop.permute.xlu0 %665
        %667 = vrot.lane.b32.xlu0 %v215, 10
        %v668 = vpop.permute.xlu0 %667
        %669 = vrot.lane.b32.xlu0 %v225, 10
        %v670 = vpop.permute.xlu0 %669
        %671 = vrot.lane.b32.xlu0 %v216, 10
        %v672 = vpop.permute.xlu0 %671
        %673 = vrot.lane.b32.xlu0 %v226, 10
        %v674 = vpop.permute.xlu0 %673
        %675 = vrot.lane.b32.xlu0 %v217, 10
        %v676 = vpop.permute.xlu0 %675
        %677 = vrot.lane.b32.xlu0 %v227, 10
        %v678 = vpop.permute.xlu0 %677
        %679 = vrot.lane.b32.xlu0 %v218, 10
        %v680 = vpop.permute.xlu0 %679
        %vm681 = vcmask 80896
        %v682 = vsel %vm681, %v664, %v666
        %v683 = vsel %vm681, %v666, %v668
        %v684 = vsel %vm681, %v668, %v670
        %v685 = vsel %vm681, %v670, %v672
        %v686 = vsel %vm681, %v672, %v674
        %v687 = vsel %vm681, %v674, %v676
        %v688 = vsel %vm681, %v676, %v678
        %v689 = vsel %vm681, %v678, %v680
        %698 = vst [vmem:[#allocation2 + $0x140] sm:$0xf] %v682
        %699 = vst [vmem:[#allocation2 + $0x148] sm:$0xf] %v683
        %700 = vst [vmem:[#allocation2 + $0x150] sm:$0xf] %v684
        %701 = vst [vmem:[#allocation2 + $0x158] sm:$0xf] %v685
        %702 = vst [vmem:[#allocation2 + $0x160] sm:$0xf] %v686
        %703 = vst [vmem:[#allocation2 + $0x168] sm:$0xf] %v687
        %704 = vst [vmem:[#allocation2 + $0x170] sm:$0xf] %v688
        %705 = vst [vmem:[#allocation2 + $0x178] sm:$0xf] %v689
        %706 = vrot.lane.b32.xlu0 %v271, 9
        %v707 = vpop.permute.xlu0 %706
        %708 = vrot.lane.b32.xlu0 %v214, 9
        %v709 = vpop.permute.xlu0 %708
        %710 = vrot.lane.b32.xlu0 %v272, 9
        %v711 = vpop.permute.xlu0 %710
        %712 = vrot.lane.b32.xlu0 %v215, 9
        %v713 = vpop.permute.xlu0 %712
        %714 = vrot.lane.b32.xlu0 %v273, 9
        %v715 = vpop.permute.xlu0 %714
        %716 = vrot.lane.b32.xlu0 %v216, 9
        %v717 = vpop.permute.xlu0 %716
        %718 = vrot.lane.b32.xlu0 %v274, 9
        %v719 = vpop.permute.xlu0 %718
        %720 = vrot.lane.b32.xlu0 %v217, 9
        %v721 = vpop.permute.xlu0 %720
        %722 = vrot.lane.b32.xlu0 %v275, 9
        %v723 = vpop.permute.xlu0 %722
        %vm724 = vcmask 72704
        %v725 = vsel %vm724, %v707, %v709
        %v726 = vsel %vm724, %v709, %v711
        %v727 = vsel %vm724, %v711, %v713
        %v728 = vsel %vm724, %v713, %v715
        %v729 = vsel %vm724, %v715, %v717
        %v730 = vsel %vm724, %v717, %v719
        %v731 = vsel %vm724, %v719, %v721
        %v732 = vsel %vm724, %v721, %v723
        %741 = vst [vmem:[#allocation2 + $0x140] sm:$0xf0] %v725
        %742 = vst [vmem:[#allocation2 + $0x148] sm:$0xf0] %v726
        %743 = vst [vmem:[#allocation2 + $0x150] sm:$0xf0] %v727
        %744 = vst [vmem:[#allocation2 + $0x158] sm:$0xf0] %v728
        %745 = vst [vmem:[#allocation2 + $0x160] sm:$0xf0] %v729
        %746 = vst [vmem:[#allocation2 + $0x168] sm:$0xf0] %v730
        %747 = vst [vmem:[#allocation2 + $0x170] sm:$0xf0] %v731
        %748 = vst [vmem:[#allocation2 + $0x178] sm:$0xf0] %v732
        %749 = vrot.lane.b32.xlu0 %v214, 1
        %v750 = vpop.permute.xlu0 %749
        %751 = vrot.lane.b32.xlu0 %v224, 1
        %v752 = vpop.permute.xlu0 %751
        %753 = vrot.lane.b32.xlu0 %v215, 1
        %v754 = vpop.permute.xlu0 %753
        %755 = vrot.lane.b32.xlu0 %v225, 1
        %v756 = vpop.permute.xlu0 %755
        %757 = vrot.lane.b32.xlu0 %v216, 1
        %v758 = vpop.permute.xlu0 %757
        %759 = vrot.lane.b32.xlu0 %v226, 1
        %v760 = vpop.permute.xlu0 %759
        %761 = vrot.lane.b32.xlu0 %v217, 1
        %v762 = vpop.permute.xlu0 %761
        %763 = vrot.lane.b32.xlu0 %v227, 1
        %v764 = vpop.permute.xlu0 %763
        %765 = vrot.lane.b32.xlu0 %v218, 1
        %v766 = vpop.permute.xlu0 %765
        %vm767 = vcmask 7168
        %v768 = vsel %vm767, %v750, %v752
        %v769 = vsel %vm767, %v752, %v754
        %v770 = vsel %vm767, %v754, %v756
        %v771 = vsel %vm767, %v756, %v758
        %v772 = vsel %vm767, %v758, %v760
        %v773 = vsel %vm767, %v760, %v762
        %v774 = vsel %vm767, %v762, %v764
        %v775 = vsel %vm767, %v764, %v766
        %784 = vst [vmem:[#allocation2 + $0x180] sm:$0xf] %v768
        %785 = vst [vmem:[#allocation2 + $0x188] sm:$0xf] %v769
        %786 = vst [vmem:[#allocation2 + $0x190] sm:$0xf] %v770
        %787 = vst [vmem:[#allocation2 + $0x198] sm:$0xf] %v771
        %788 = vst [vmem:[#allocation2 + $0x1a0] sm:$0xf] %v772
        %789 = vst [vmem:[#allocation2 + $0x1a8] sm:$0xf] %v773
        %790 = vst [vmem:[#allocation2 + $0x1b0] sm:$0xf] %v774
        %791 = vst [vmem:[#allocation2 + $0x1b8] sm:$0xf] %v775
        %796 = vst [vmem:[#allocation2 + $0x180] sm:$0xf0] %v214
        %797 = vst [vmem:[#allocation2 + $0x188] sm:$0xf0] %v272
        %798 = vst [vmem:[#allocation2 + $0x190] sm:$0xf0] %v215
        %799 = vst [vmem:[#allocation2 + $0x198] sm:$0xf0] %v273
        %800 = vst [vmem:[#allocation2 + $0x1a0] sm:$0xf0] %v216
        %801 = vst [vmem:[#allocation2 + $0x1a8] sm:$0xf0] %v274
        %802 = vst [vmem:[#allocation2 + $0x1b0] sm:$0xf0] %v217
        %803 = vst [vmem:[#allocation2 + $0x1b8] sm:$0xf0] %v275
        %v804 = vcombine.high %v218, %v218
        %805 = vrot.lane.b32.xlu0 %v224, 127
        %v806 = vpop.permute.xlu0 %805
        %807 = vrot.lane.b32.xlu0 %v215, 127
        %v808 = vpop.permute.xlu0 %807
        %809 = vrot.lane.b32.xlu0 %v225, 127
        %v810 = vpop.permute.xlu0 %809
        %811 = vrot.lane.b32.xlu0 %v216, 127
        %v812 = vpop.permute.xlu0 %811
        %813 = vrot.lane.b32.xlu0 %v226, 127
        %v814 = vpop.permute.xlu0 %813
        %815 = vrot.lane.b32.xlu0 %v217, 127
        %v816 = vpop.permute.xlu0 %815
        %817 = vrot.lane.b32.xlu0 %v227, 127
        %v818 = vpop.permute.xlu0 %817
        %819 = vrot.lane.b32.xlu0 %v218, 127
        %v820 = vpop.permute.xlu0 %819
        %821 = vrot.lane.b32.xlu0 %v804, 127
        %v822 = vpop.permute.xlu0 %821
        %vm823 = vcmask 1039360
        %v824 = vsel %vm823, %v806, %v808
        %v825 = vsel %vm823, %v808, %v810
        %v826 = vsel %vm823, %v810, %v812
        %v827 = vsel %vm823, %v812, %v814
        %v828 = vsel %vm823, %v814, %v816
        %v829 = vsel %vm823, %v816, %v818
        %v830 = vsel %vm823, %v818, %v820
        %v831 = vsel %vm823, %v820, %v822
        %840 = vst [vmem:[#allocation2 + $0x1c0] sm:$0xf] %v824
        %841 = vst [vmem:[#allocation2 + $0x1c8] sm:$0xf] %v825
        %842 = vst [vmem:[#allocation2 + $0x1d0] sm:$0xf] %v826
        %843 = vst [vmem:[#allocation2 + $0x1d8] sm:$0xf] %v827
        %844 = vst [vmem:[#allocation2 + $0x1e0] sm:$0xf] %v828
        %845 = vst [vmem:[#allocation2 + $0x1e8] sm:$0xf] %v829
        %846 = vst [vmem:[#allocation2 + $0x1f0] sm:$0xf] %v830
        %847 = vst [vmem:[#allocation2 + $0x1f8] sm:$0xf] %v831
        %848 = vrot.lane.b32.xlu0 %v214, 119
        %v849 = vpop.permute.xlu0 %848
        %850 = vrot.lane.b32.xlu0 %v272, 119
        %v851 = vpop.permute.xlu0 %850
        %852 = vrot.lane.b32.xlu0 %v215, 119
        %v853 = vpop.permute.xlu0 %852
        %854 = vrot.lane.b32.xlu0 %v273, 119
        %v855 = vpop.permute.xlu0 %854
        %856 = vrot.lane.b32.xlu0 %v216, 119
        %v857 = vpop.permute.xlu0 %856
        %858 = vrot.lane.b32.xlu0 %v274, 119
        %v859 = vpop.permute.xlu0 %858
        %860 = vrot.lane.b32.xlu0 %v217, 119
        %v861 = vpop.permute.xlu0 %860
        %862 = vrot.lane.b32.xlu0 %v275, 119
        %v863 = vpop.permute.xlu0 %862
        %864 = vrot.lane.b32.xlu0 %v218, 119
        %v865 = vpop.permute.xlu0 %864
        %vm866 = vcmask 973824
        %v867 = vsel %vm866, %v849, %v851
        %v868 = vsel %vm866, %v851, %v853
        %v869 = vsel %vm866, %v853, %v855
        %v870 = vsel %vm866, %v855, %v857
        %v871 = vsel %vm866, %v857, %v859
        %v872 = vsel %vm866, %v859, %v861
        %v873 = vsel %vm866, %v861, %v863
        %v874 = vsel %vm866, %v863, %v865
        %883 = vst [vmem:[#allocation2 + $0x1c0] sm:$0xf0] %v867
        %884 = vst [vmem:[#allocation2 + $0x1c8] sm:$0xf0] %v868
        %885 = vst [vmem:[#allocation2 + $0x1d0] sm:$0xf0] %v869
        %886 = vst [vmem:[#allocation2 + $0x1d8] sm:$0xf0] %v870
        %887 = vst [vmem:[#allocation2 + $0x1e0] sm:$0xf0] %v871
        %888 = vst [vmem:[#allocation2 + $0x1e8] sm:$0xf0] %v872
        %889 = vst [vmem:[#allocation2 + $0x1f0] sm:$0xf0] %v873
        %890 = vst [vmem:[#allocation2 + $0x1f8] sm:$0xf0] %v874
        %891 = vrot.lane.b32.xlu0 %v224, 118
        %v892 = vpop.permute.xlu0 %891
        %893 = vrot.lane.b32.xlu0 %v215, 118
        %v894 = vpop.permute.xlu0 %893
        %895 = vrot.lane.b32.xlu0 %v225, 118
        %v896 = vpop.permute.xlu0 %895
        %897 = vrot.lane.b32.xlu0 %v216, 118
        %v898 = vpop.permute.xlu0 %897
        %899 = vrot.lane.b32.xlu0 %v226, 118
        %v900 = vpop.permute.xlu0 %899
        %901 = vrot.lane.b32.xlu0 %v217, 118
        %v902 = vpop.permute.xlu0 %901
        %903 = vrot.lane.b32.xlu0 %v227, 118
        %v904 = vpop.permute.xlu0 %903
        %905 = vrot.lane.b32.xlu0 %v218, 118
        %v906 = vpop.permute.xlu0 %905
        %907 = vrot.lane.b32.xlu0 %v804, 118
        %v908 = vpop.permute.xlu0 %907
        %vm909 = vcmask 965632
        %v910 = vsel %vm909, %v892, %v894
        %v911 = vsel %vm909, %v894, %v896
        %v912 = vsel %vm909, %v896, %v898
        %v913 = vsel %vm909, %v898, %v900
        %v914 = vsel %vm909, %v900, %v902
        %v915 = vsel %vm909, %v902, %v904
        %v916 = vsel %vm909, %v904, %v906
        %v917 = vsel %vm909, %v906, %v908
        %926 = vst [vmem:[#allocation2 + $0x200] sm:$0xf] %v910
        %927 = vst [vmem:[#allocation2 + $0x208] sm:$0xf] %v911
        %928 = vst [vmem:[#allocation2 + $0x210] sm:$0xf] %v912
        %929 = vst [vmem:[#allocation2 + $0x218] sm:$0xf] %v913
        %930 = vst [vmem:[#allocation2 + $0x220] sm:$0xf] %v914
        %931 = vst [vmem:[#allocation2 + $0x228] sm:$0xf] %v915
        %932 = vst [vmem:[#allocation2 + $0x230] sm:$0xf] %v916
        %933 = vst [vmem:[#allocation2 + $0x238] sm:$0xf] %v917
        %934 = vrot.lane.b32.xlu0 %v214, 117
        %v935 = vpop.permute.xlu0 %934
        %936 = vrot.lane.b32.xlu0 %v272, 117
        %v937 = vpop.permute.xlu0 %936
        %938 = vrot.lane.b32.xlu0 %v215, 117
        %v939 = vpop.permute.xlu0 %938
        %940 = vrot.lane.b32.xlu0 %v273, 117
        %v941 = vpop.permute.xlu0 %940
        %942 = vrot.lane.b32.xlu0 %v216, 117
        %v943 = vpop.permute.xlu0 %942
        %944 = vrot.lane.b32.xlu0 %v274, 117
        %v945 = vpop.permute.xlu0 %944
        %946 = vrot.lane.b32.xlu0 %v217, 117
        %v947 = vpop.permute.xlu0 %946
        %948 = vrot.lane.b32.xlu0 %v275, 117
        %v949 = vpop.permute.xlu0 %948
        %950 = vrot.lane.b32.xlu0 %v218, 117
        %v951 = vpop.permute.xlu0 %950
        %vm952 = vcmask 957440
        %v953 = vsel %vm952, %v935, %v937
        %v954 = vsel %vm952, %v937, %v939
        %v955 = vsel %vm952, %v939, %v941
        %v956 = vsel %vm952, %v941, %v943
        %v957 = vsel %vm952, %v943, %v945
        %v958 = vsel %vm952, %v945, %v947
        %v959 = vsel %vm952, %v947, %v949
        %v960 = vsel %vm952, %v949, %v951
        %969 = vst [vmem:[#allocation2 + $0x200] sm:$0xf0] %v953
        %970 = vst [vmem:[#allocation2 + $0x208] sm:$0xf0] %v954
        %971 = vst [vmem:[#allocation2 + $0x210] sm:$0xf0] %v955
        %972 = vst [vmem:[#allocation2 + $0x218] sm:$0xf0] %v956
        %973 = vst [vmem:[#allocation2 + $0x220] sm:$0xf0] %v957
        %974 = vst [vmem:[#allocation2 + $0x228] sm:$0xf0] %v958
        %975 = vst [vmem:[#allocation2 + $0x230] sm:$0xf0] %v959
        %976 = vst [vmem:[#allocation2 + $0x238] sm:$0xf0] %v960
        %977 = vrot.lane.b32.xlu0 %v224, 39
        %v978 = vpop.permute.xlu0 %977
        %979 = vrot.lane.b32.xlu0 %v215, 39
        %v980 = vpop.permute.xlu0 %979
        %981 = vrot.lane.b32.xlu0 %v225, 39
        %v982 = vpop.permute.xlu0 %981
        %983 = vrot.lane.b32.xlu0 %v216, 39
        %v984 = vpop.permute.xlu0 %983
        %985 = vrot.lane.b32.xlu0 %v226, 39
        %v986 = vpop.permute.xlu0 %985
        %987 = vrot.lane.b32.xlu0 %v217, 39
        %v988 = vpop.permute.xlu0 %987
        %989 = vrot.lane.b32.xlu0 %v227, 39
        %v990 = vpop.permute.xlu0 %989
        %991 = vrot.lane.b32.xlu0 %v218, 39
        %v992 = vpop.permute.xlu0 %991
        %993 = vrot.lane.b32.xlu0 %v804, 39
        %v994 = vpop.permute.xlu0 %993
        %vm995 = vcmask 318464
        %v996 = vsel %vm995, %v978, %v980
        %v997 = vsel %vm995, %v980, %v982
        %v998 = vsel %vm995, %v982, %v984
        %v999 = vsel %vm995, %v984, %v986
        %v1000 = vsel %vm995, %v986, %v988
        %v1001 = vsel %vm995, %v988, %v990
        %v1002 = vsel %vm995, %v990, %v992
        %v1003 = vsel %vm995, %v992, %v994
        %1012 = vst [vmem:[#allocation2 + $0x240] sm:$0xf] %v996
        %1013 = vst [vmem:[#allocation2 + $0x248] sm:$0xf] %v997
        %1014 = vst [vmem:[#allocation2 + $0x250] sm:$0xf] %v998
        %1015 = vst [vmem:[#allocation2 + $0x258] sm:$0xf] %v999
        %1016 = vst [vmem:[#allocation2 + $0x260] sm:$0xf] %v1000
        %1017 = vst [vmem:[#allocation2 + $0x268] sm:$0xf] %v1001
        %1018 = vst [vmem:[#allocation2 + $0x270] sm:$0xf] %v1002
        %1019 = vst [vmem:[#allocation2 + $0x278] sm:$0xf] %v1003
        %1020 = vrot.lane.b32.xlu0 %v214, 38
        %v1021 = vpop.permute.xlu0 %1020
        %1022 = vrot.lane.b32.xlu0 %v272, 38
        %v1023 = vpop.permute.xlu0 %1022
        %1024 = vrot.lane.b32.xlu0 %v215, 38
        %v1025 = vpop.permute.xlu0 %1024
        %1026 = vrot.lane.b32.xlu0 %v273, 38
        %v1027 = vpop.permute.xlu0 %1026
        %1028 = vrot.lane.b32.xlu0 %v216, 38
        %v1029 = vpop.permute.xlu0 %1028
        %1030 = vrot.lane.b32.xlu0 %v274, 38
        %v1031 = vpop.permute.xlu0 %1030
        %1032 = vrot.lane.b32.xlu0 %v217, 38
        %v1033 = vpop.permute.xlu0 %1032
        %1034 = vrot.lane.b32.xlu0 %v275, 38
        %v1035 = vpop.permute.xlu0 %1034
        %1036 = vrot.lane.b32.xlu0 %v218, 38
        %v1037 = vpop.permute.xlu0 %1036
        %vm1038 = vcmask 310272
        %v1039 = vsel %vm1038, %v1021, %v1023
        %v1040 = vsel %vm1038, %v1023, %v1025
        %v1041 = vsel %vm1038, %v1025, %v1027
        %v1042 = vsel %vm1038, %v1027, %v1029
        %v1043 = vsel %vm1038, %v1029, %v1031
        %v1044 = vsel %vm1038, %v1031, %v1033
        %v1045 = vsel %vm1038, %v1033, %v1035
        %v1046 = vsel %vm1038, %v1035, %v1037
        %1055 = vst [vmem:[#allocation2 + $0x240] sm:$0xf0] %v1039
        %1056 = vst [vmem:[#allocation2 + $0x248] sm:$0xf0] %v1040
        %1057 = vst [vmem:[#allocation2 + $0x250] sm:$0xf0] %v1041
        %1058 = vst [vmem:[#allocation2 + $0x258] sm:$0xf0] %v1042
        %1059 = vst [vmem:[#allocation2 + $0x260] sm:$0xf0] %v1043
        %1060 = vst [vmem:[#allocation2 + $0x268] sm:$0xf0] %v1044
        %1061 = vst [vmem:[#allocation2 + $0x270] sm:$0xf0] %v1045
        %1062 = vst [vmem:[#allocation2 + $0x278] sm:$0xf0] %v1046
        %1063 = vrot.lane.b32.xlu0 %v224, 37
        %v1064 = vpop.permute.xlu0 %1063
        %1065 = vrot.lane.b32.xlu0 %v215, 37
        %v1066 = vpop.permute.xlu0 %1065
        %1067 = vrot.lane.b32.xlu0 %v225, 37
        %v1068 = vpop.permute.xlu0 %1067
        %1069 = vrot.lane.b32.xlu0 %v216, 37
        %v1070 = vpop.permute.xlu0 %1069
        %1071 = vrot.lane.b32.xlu0 %v226, 37
        %v1072 = vpop.permute.xlu0 %1071
        %1073 = vrot.lane.b32.xlu0 %v217, 37
        %v1074 = vpop.permute.xlu0 %1073
        %1075 = vrot.lane.b32.xlu0 %v227, 37
        %v1076 = vpop.permute.xlu0 %1075
        %1077 = vrot.lane.b32.xlu0 %v218, 37
        %v1078 = vpop.permute.xlu0 %1077
        %1079 = vrot.lane.b32.xlu0 %v804, 37
        %v1080 = vpop.permute.xlu0 %1079
        %vm1081 = vcmask 302080
        %v1082 = vsel %vm1081, %v1064, %v1066
        %v1083 = vsel %vm1081, %v1066, %v1068
        %v1084 = vsel %vm1081, %v1068, %v1070
        %v1085 = vsel %vm1081, %v1070, %v1072
        %v1086 = vsel %vm1081, %v1072, %v1074
        %v1087 = vsel %vm1081, %v1074, %v1076
        %v1088 = vsel %vm1081, %v1076, %v1078
        %v1089 = vsel %vm1081, %v1078, %v1080
        %1098 = vst [vmem:[#allocation2 + $0x280] sm:$0xf] %v1082
        %1099 = vst [vmem:[#allocation2 + $0x288] sm:$0xf] %v1083
        %1100 = vst [vmem:[#allocation2 + $0x290] sm:$0xf] %v1084
        %1101 = vst [vmem:[#allocation2 + $0x298] sm:$0xf] %v1085
        %1102 = vst [vmem:[#allocation2 + $0x2a0] sm:$0xf] %v1086
        %1103 = vst [vmem:[#allocation2 + $0x2a8] sm:$0xf] %v1087
        %1104 = vst [vmem:[#allocation2 + $0x2b0] sm:$0xf] %v1088
        %1105 = vst [vmem:[#allocation2 + $0x2b8] sm:$0xf] %v1089
        %1106 = vrot.lane.b32.xlu0 %v214, 29
        %v1107 = vpop.permute.xlu0 %1106
        %1108 = vrot.lane.b32.xlu0 %v272, 29
        %v1109 = vpop.permute.xlu0 %1108
        %1110 = vrot.lane.b32.xlu0 %v215, 29
        %v1111 = vpop.permute.xlu0 %1110
        %1112 = vrot.lane.b32.xlu0 %v273, 29
        %v1113 = vpop.permute.xlu0 %1112
        %1114 = vrot.lane.b32.xlu0 %v216, 29
        %v1115 = vpop.permute.xlu0 %1114
        %1116 = vrot.lane.b32.xlu0 %v274, 29
        %v1117 = vpop.permute.xlu0 %1116
        %1118 = vrot.lane.b32.xlu0 %v217, 29
        %v1119 = vpop.permute.xlu0 %1118
        %1120 = vrot.lane.b32.xlu0 %v275, 29
        %v1121 = vpop.permute.xlu0 %1120
        %1122 = vrot.lane.b32.xlu0 %v218, 29
        %v1123 = vpop.permute.xlu0 %1122
        %vm1124 = vcmask 236544
        %v1125 = vsel %vm1124, %v1107, %v1109
        %v1126 = vsel %vm1124, %v1109, %v1111
        %v1127 = vsel %vm1124, %v1111, %v1113
        %v1128 = vsel %vm1124, %v1113, %v1115
        %v1129 = vsel %vm1124, %v1115, %v1117
        %v1130 = vsel %vm1124, %v1117, %v1119
        %v1131 = vsel %vm1124, %v1119, %v1121
        %v1132 = vsel %vm1124, %v1121, %v1123
        %1141 = vst [vmem:[#allocation2 + $0x280] sm:$0xf0] %v1125
        %1142 = vst [vmem:[#allocation2 + $0x288] sm:$0xf0] %v1126
        %1143 = vst [vmem:[#allocation2 + $0x290] sm:$0xf0] %v1127
        %1144 = vst [vmem:[#allocation2 + $0x298] sm:$0xf0] %v1128
        %1145 = vst [vmem:[#allocation2 + $0x2a0] sm:$0xf0] %v1129
        %1146 = vst [vmem:[#allocation2 + $0x2a8] sm:$0xf0] %v1130
        %1147 = vst [vmem:[#allocation2 + $0x2b0] sm:$0xf0] %v1131
        %1148 = vst [vmem:[#allocation2 + $0x2b8] sm:$0xf0] %v1132
        %1149 = vrot.lane.b32.xlu0 %v224, 28
        %v1150 = vpop.permute.xlu0 %1149
        %1151 = vrot.lane.b32.xlu0 %v215, 28
        %v1152 = vpop.permute.xlu0 %1151
        %1153 = vrot.lane.b32.xlu0 %v225, 28
        %v1154 = vpop.permute.xlu0 %1153
        %1155 = vrot.lane.b32.xlu0 %v216, 28
        %v1156 = vpop.permute.xlu0 %1155
        %1157 = vrot.lane.b32.xlu0 %v226, 28
        %v1158 = vpop.permute.xlu0 %1157
        %1159 = vrot.lane.b32.xlu0 %v217, 28
        %v1160 = vpop.permute.xlu0 %1159
        %1161 = vrot.lane.b32.xlu0 %v227, 28
        %v1162 = vpop.permute.xlu0 %1161
        %1163 = vrot.lane.b32.xlu0 %v218, 28
        %v1164 = vpop.permute.xlu0 %1163
        %1165 = vrot.lane.b32.xlu0 %v804, 28
        %v1166 = vpop.permute.xlu0 %1165
        %vm1167 = vcmask 228352
        %v1168 = vsel %vm1167, %v1150, %v1152
        %v1169 = vsel %vm1167, %v1152, %v1154
        %v1170 = vsel %vm1167, %v1154, %v1156
        %v1171 = vsel %vm1167, %v1156, %v1158
        %v1172 = vsel %vm1167, %v1158, %v1160
        %v1173 = vsel %vm1167, %v1160, %v1162
        %v1174 = vsel %vm1167, %v1162, %v1164
        %v1175 = vsel %vm1167, %v1164, %v1166
        %1184 = vst [vmem:[#allocation2 + $0x2c0] sm:$0xf] %v1168
        %1185 = vst [vmem:[#allocation2 + $0x2c8] sm:$0xf] %v1169
        %1186 = vst [vmem:[#allocation2 + $0x2d0] sm:$0xf] %v1170
        %1187 = vst [vmem:[#allocation2 + $0x2d8] sm:$0xf] %v1171
        %1188 = vst [vmem:[#allocation2 + $0x2e0] sm:$0xf] %v1172
        %1189 = vst [vmem:[#allocation2 + $0x2e8] sm:$0xf] %v1173
        %1190 = vst [vmem:[#allocation2 + $0x2f0] sm:$0xf] %v1174
        %1191 = vst [vmem:[#allocation2 + $0x2f8] sm:$0xf] %v1175
        %1192 = vrot.lane.b32.xlu0 %v214, 27
        %v1193 = vpop.permute.xlu0 %1192
        %1194 = vrot.lane.b32.xlu0 %v272, 27
        %v1195 = vpop.permute.xlu0 %1194
        %1196 = vrot.lane.b32.xlu0 %v215, 27
        %v1197 = vpop.permute.xlu0 %1196
        %1198 = vrot.lane.b32.xlu0 %v273, 27
        %v1199 = vpop.permute.xlu0 %1198
        %1200 = vrot.lane.b32.xlu0 %v216, 27
        %v1201 = vpop.permute.xlu0 %1200
        %1202 = vrot.lane.b32.xlu0 %v274, 27
        %v1203 = vpop.permute.xlu0 %1202
        %1204 = vrot.lane.b32.xlu0 %v217, 27
        %v1205 = vpop.permute.xlu0 %1204
        %1206 = vrot.lane.b32.xlu0 %v275, 27
        %v1207 = vpop.permute.xlu0 %1206
        %1208 = vrot.lane.b32.xlu0 %v218, 27
        %v1209 = vpop.permute.xlu0 %1208
        %vm1210 = vcmask 220160
        %v1211 = vsel %vm1210, %v1193, %v1195
        %v1212 = vsel %vm1210, %v1195, %v1197
        %v1213 = vsel %vm1210, %v1197, %v1199
        %v1214 = vsel %vm1210, %v1199, %v1201
        %v1215 = vsel %vm1210, %v1201, %v1203
        %v1216 = vsel %vm1210, %v1203, %v1205
        %v1217 = vsel %vm1210, %v1205, %v1207
        %v1218 = vsel %vm1210, %v1207, %v1209
        %1227 = vst [vmem:[#allocation2 + $0x2c0] sm:$0xf0] %v1211
        %1228 = vst [vmem:[#allocation2 + $0x2c8] sm:$0xf0] %v1212
        %1229 = vst [vmem:[#allocation2 + $0x2d0] sm:$0xf0] %v1213
        %1230 = vst [vmem:[#allocation2 + $0x2d8] sm:$0xf0] %v1214
        %1231 = vst [vmem:[#allocation2 + $0x2e0] sm:$0xf0] %v1215
        %1232 = vst [vmem:[#allocation2 + $0x2e8] sm:$0xf0] %v1216
        %1233 = vst [vmem:[#allocation2 + $0x2f0] sm:$0xf0] %v1217
        %1234 = vst [vmem:[#allocation2 + $0x2f8] sm:$0xf0] %v1218
        %1235 = vrot.lane.b32.xlu0 %v224, 19
        %v1236 = vpop.permute.xlu0 %1235
        %1237 = vrot.lane.b32.xlu0 %v215, 19
        %v1238 = vpop.permute.xlu0 %1237
        %1239 = vrot.lane.b32.xlu0 %v225, 19
        %v1240 = vpop.permute.xlu0 %1239
        %1241 = vrot.lane.b32.xlu0 %v216, 19
        %v1242 = vpop.permute.xlu0 %1241
        %1243 = vrot.lane.b32.xlu0 %v226, 19
        %v1244 = vpop.permute.xlu0 %1243
        %1245 = vrot.lane.b32.xlu0 %v217, 19
        %v1246 = vpop.permute.xlu0 %1245
        %1247 = vrot.lane.b32.xlu0 %v227, 19
        %v1248 = vpop.permute.xlu0 %1247
        %1249 = vrot.lane.b32.xlu0 %v218, 19
        %v1250 = vpop.permute.xlu0 %1249
        %1251 = vrot.lane.b32.xlu0 %v804, 19
        %v1252 = vpop.permute.xlu0 %1251
        %vm1253 = vcmask 154624
        %v1254 = vsel %vm1253, %v1236, %v1238
        %v1255 = vsel %vm1253, %v1238, %v1240
        %v1256 = vsel %vm1253, %v1240, %v1242
        %v1257 = vsel %vm1253, %v1242, %v1244
        %v1258 = vsel %vm1253, %v1244, %v1246
        %v1259 = vsel %vm1253, %v1246, %v1248
        %v1260 = vsel %vm1253, %v1248, %v1250
        %v1261 = vsel %vm1253, %v1250, %v1252
        %1270 = vst [vmem:[#allocation2 + $0x300] sm:$0xf] %v1254
        %1271 = vst [vmem:[#allocation2 + $0x308] sm:$0xf] %v1255
        %1272 = vst [vmem:[#allocation2 + $0x310] sm:$0xf] %v1256
        %1273 = vst [vmem:[#allocation2 + $0x318] sm:$0xf] %v1257
        %1274 = vst [vmem:[#allocation2 + $0x320] sm:$0xf] %v1258
        %1275 = vst [vmem:[#allocation2 + $0x328] sm:$0xf] %v1259
        %1276 = vst [vmem:[#allocation2 + $0x330] sm:$0xf] %v1260
        %1277 = vst [vmem:[#allocation2 + $0x338] sm:$0xf] %v1261
        %1278 = vrot.lane.b32.xlu0 %v214, 18
        %v1279 = vpop.permute.xlu0 %1278
        %1280 = vrot.lane.b32.xlu0 %v272, 18
        %v1281 = vpop.permute.xlu0 %1280
        %1282 = vrot.lane.b32.xlu0 %v215, 18
        %v1283 = vpop.permute.xlu0 %1282
        %1284 = vrot.lane.b32.xlu0 %v273, 18
        %v1285 = vpop.permute.xlu0 %1284
        %1286 = vrot.lane.b32.xlu0 %v216, 18
        %v1287 = vpop.permute.xlu0 %1286
        %1288 = vrot.lane.b32.xlu0 %v274, 18
        %v1289 = vpop.permute.xlu0 %1288
        %1290 = vrot.lane.b32.xlu0 %v217, 18
        %v1291 = vpop.permute.xlu0 %1290
        %1292 = vrot.lane.b32.xlu0 %v275, 18
        %v1293 = vpop.permute.xlu0 %1292
        %1294 = vrot.lane.b32.xlu0 %v218, 18
        %v1295 = vpop.permute.xlu0 %1294
        %vm1296 = vcmask 146432
        %v1297 = vsel %vm1296, %v1279, %v1281
        %v1298 = vsel %vm1296, %v1281, %v1283
        %v1299 = vsel %vm1296, %v1283, %v1285
        %v1300 = vsel %vm1296, %v1285, %v1287
        %v1301 = vsel %vm1296, %v1287, %v1289
        %v1302 = vsel %vm1296, %v1289, %v1291
        %v1303 = vsel %vm1296, %v1291, %v1293
        %v1304 = vsel %vm1296, %v1293, %v1295
        %1313 = vst [vmem:[#allocation2 + $0x300] sm:$0xf0] %v1297
        %1314 = vst [vmem:[#allocation2 + $0x308] sm:$0xf0] %v1298
        %1315 = vst [vmem:[#allocation2 + $0x310] sm:$0xf0] %v1299
        %1316 = vst [vmem:[#allocation2 + $0x318] sm:$0xf0] %v1300
        %1317 = vst [vmem:[#allocation2 + $0x320] sm:$0xf0] %v1301
        %1318 = vst [vmem:[#allocation2 + $0x328] sm:$0xf0] %v1302
        %1319 = vst [vmem:[#allocation2 + $0x330] sm:$0xf0] %v1303
        %1320 = vst [vmem:[#allocation2 + $0x338] sm:$0xf0] %v1304
        %1321 = vrot.lane.b32.xlu0 %v224, 17
        %v1322 = vpop.permute.xlu0 %1321
        %1323 = vrot.lane.b32.xlu0 %v215, 17
        %v1324 = vpop.permute.xlu0 %1323
        %1325 = vrot.lane.b32.xlu0 %v225, 17
        %v1326 = vpop.permute.xlu0 %1325
        %1327 = vrot.lane.b32.xlu0 %v216, 17
        %v1328 = vpop.permute.xlu0 %1327
        %1329 = vrot.lane.b32.xlu0 %v226, 17
        %v1330 = vpop.permute.xlu0 %1329
        %1331 = vrot.lane.b32.xlu0 %v217, 17
        %v1332 = vpop.permute.xlu0 %1331
        %1333 = vrot.lane.b32.xlu0 %v227, 17
        %v1334 = vpop.permute.xlu0 %1333
        %1335 = vrot.lane.b32.xlu0 %v218, 17
        %v1336 = vpop.permute.xlu0 %1335
        %1337 = vrot.lane.b32.xlu0 %v804, 17
        %v1338 = vpop.permute.xlu0 %1337
        %vm1339 = vcmask 138240
        %v1340 = vsel %vm1339, %v1322, %v1324
        %v1341 = vsel %vm1339, %v1324, %v1326
        %v1342 = vsel %vm1339, %v1326, %v1328
        %v1343 = vsel %vm1339, %v1328, %v1330
        %v1344 = vsel %vm1339, %v1330, %v1332
        %v1345 = vsel %vm1339, %v1332, %v1334
        %v1346 = vsel %vm1339, %v1334, %v1336
        %v1347 = vsel %vm1339, %v1336, %v1338
        %1356 = vst [vmem:[#allocation2 + $0x340] sm:$0xf] %v1340
        %1357 = vst [vmem:[#allocation2 + $0x348] sm:$0xf] %v1341
        %1358 = vst [vmem:[#allocation2 + $0x350] sm:$0xf] %v1342
        %1359 = vst [vmem:[#allocation2 + $0x358] sm:$0xf] %v1343
        %1360 = vst [vmem:[#allocation2 + $0x360] sm:$0xf] %v1344
        %1361 = vst [vmem:[#allocation2 + $0x368] sm:$0xf] %v1345
        %1362 = vst [vmem:[#allocation2 + $0x370] sm:$0xf] %v1346
        %1363 = vst [vmem:[#allocation2 + $0x378] sm:$0xf] %v1347
      $region36: #{dense_block.2} parent=31 // pred_fallthru
        _
      %v1364 = vld [vmem:[%s200] sm:$0xf]
      %v1365 = vld [vmem:[#allocation2] sm:$0xff]
      %v1366 = vld [vmem:[#allocation2 + $0x8] sm:$0xff]
      %v1367 = vld [vmem:[#allocation2 + $0x10] sm:$0xff]
      %v1368 = vld [vmem:[#allocation2 + $0x18] sm:$0xff]
      %v1369 = vld [vmem:[#allocation2 + $0x20] sm:$0xff]
      %v1370 = vld [vmem:[#allocation2 + $0x28] sm:$0xff]
      %v1371 = vld [vmem:[#allocation2 + $0x30] sm:$0xff]
      %v1372 = vld [vmem:[#allocation2 + $0x38] sm:$0xff]
      %v1373 = vld [vmem:[#allocation2 + $0x40] sm:$0xff]
      %v1374 = vld [vmem:[#allocation2 + $0x48] sm:$0xff]
      %v1375 = vld [vmem:[#allocation2 + $0x50] sm:$0xff]
      %v1376 = vld [vmem:[#allocation2 + $0x58] sm:$0xff]
      %v1377 = vld [vmem:[#allocation2 + $0x60] sm:$0xff]
      %v1378 = vld [vmem:[#allocation2 + $0x68] sm:$0xff]
      %v1379 = vld [vmem:[#allocation2 + $0x70] sm:$0xff]
      %v1380 = vld [vmem:[#allocation2 + $0x78] sm:$0xff]
      %v1381 = vld [vmem:[#allocation2 + $0x80] sm:$0xff]
      %v1382 = vld [vmem:[#allocation2 + $0x88] sm:$0xff]
      %v1383 = vld [vmem:[#allocation2 + $0x90] sm:$0xff]
      %v1384 = vld [vmem:[#allocation2 + $0x98] sm:$0xff]
      %v1385 = vld [vmem:[#allocation2 + $0xa0] sm:$0xff]
      %v1386 = vld [vmem:[#allocation2 + $0xa8] sm:$0xff]
      %v1387 = vld [vmem:[#allocation2 + $0xb0] sm:$0xff]
      %v1388 = vld [vmem:[#allocation2 + $0xb8] sm:$0xff]
      %v1389 = vld [vmem:[#allocation2 + $0xc0] sm:$0xff]
      %v1390 = vld [vmem:[#allocation2 + $0xc8] sm:$0xff]
      %v1391 = vld [vmem:[#allocation2 + $0xd0] sm:$0xff]
      %v1392 = vld [vmem:[#allocation2 + $0xd8] sm:$0xff]
      %v1393 = vld [vmem:[#allocation2 + $0xe0] sm:$0xff]
      %v1394 = vld [vmem:[#allocation2 + $0xe8] sm:$0xff]
      %v1395 = vld [vmem:[#allocation2 + $0xf0] sm:$0xff]
      %v1396 = vld [vmem:[#allocation2 + $0xf8] sm:$0xff]
      %v1397 = vld [vmem:[#allocation2 + $0x100] sm:$0xff]
      %v1398 = vld [vmem:[#allocation2 + $0x108] sm:$0xff]
      %v1399 = vld [vmem:[#allocation2 + $0x110] sm:$0xff]
      %v1400 = vld [vmem:[#allocation2 + $0x118] sm:$0xff]
      %v1401 = vld [vmem:[#allocation2 + $0x120] sm:$0xff]
      %v1402 = vld [vmem:[#allocation2 + $0x128] sm:$0xff]
      %v1403 = vld [vmem:[#allocation2 + $0x130] sm:$0xff]
      %v1404 = vld [vmem:[#allocation2 + $0x138] sm:$0xff]
      %v1405 = vld [vmem:[#allocation2 + $0x140] sm:$0xff]
      %v1406 = vld [vmem:[#allocation2 + $0x148] sm:$0xff]
      %v1407 = vld [vmem:[#allocation2 + $0x150] sm:$0xff]
      %v1408 = vld [vmem:[#allocation2 + $0x158] sm:$0xff]
      %v1409 = vld [vmem:[#allocation2 + $0x160] sm:$0xff]
      %v1410 = vld [vmem:[#allocation2 + $0x168] sm:$0xff]
      %v1411 = vld [vmem:[#allocation2 + $0x170] sm:$0xff]
      %v1412 = vld [vmem:[#allocation2 + $0x178] sm:$0xff]
      %v1413 = vld [vmem:[#allocation2 + $0x180] sm:$0xff]
      %v1414 = vld [vmem:[#allocation2 + $0x188] sm:$0xff]
      %v1415 = vld [vmem:[#allocation2 + $0x190] sm:$0xff]
      %v1416 = vld [vmem:[#allocation2 + $0x198] sm:$0xff]
      %v1417 = vld [vmem:[#allocation2 + $0x1a0] sm:$0xff]
      %v1418 = vld [vmem:[#allocation2 + $0x1a8] sm:$0xff]
      %v1419 = vld [vmem:[#allocation2 + $0x1b0] sm:$0xff]
      %v1420 = vld [vmem:[#allocation2 + $0x1b8] sm:$0xff]
      %v1421 = vld [vmem:[#allocation2 + $0x1c0] sm:$0xff]
      %v1422 = vld [vmem:[#allocation2 + $0x1c8] sm:$0xff]
      %v1423 = vld [vmem:[#allocation2 + $0x1d0] sm:$0xff]
      %v1424 = vld [vmem:[#allocation2 + $0x1d8] sm:$0xff]
      %v1425 = vld [vmem:[#allocation2 + $0x1e0] sm:$0xff]
      %v1426 = vld [vmem:[#allocation2 + $0x1e8] sm:$0xff]
      %v1427 = vld [vmem:[#allocation2 + $0x1f0] sm:$0xff]
      %v1428 = vld [vmem:[#allocation2 + $0x1f8] sm:$0xff]
      %v1429 = vld [vmem:[#allocation2 + $0x200] sm:$0xff]
      %v1430 = vld [vmem:[#allocation2 + $0x208] sm:$0xff]
      %v1431 = vld [vmem:[#allocation2 + $0x210] sm:$0xff]
      %v1432 = vld [vmem:[#allocation2 + $0x218] sm:$0xff]
      %v1433 = vld [vmem:[#allocation2 + $0x220] sm:$0xff]
      %v1434 = vld [vmem:[#allocation2 + $0x228] sm:$0xff]
      %v1435 = vld [vmem:[#allocation2 + $0x230] sm:$0xff]
      %v1436 = vld [vmem:[#allocation2 + $0x238] sm:$0xff]
      %v1437 = vld [vmem:[#allocation2 + $0x240] sm:$0xff]
      %v1438 = vld [vmem:[#allocation2 + $0x248] sm:$0xff]
      %v1439 = vld [vmem:[#allocation2 + $0x250] sm:$0xff]
      %v1440 = vld [vmem:[#allocation2 + $0x258] sm:$0xff]
      %v1441 = vld [vmem:[#allocation2 + $0x260] sm:$0xff]
      %v1442 = vld [vmem:[#allocation2 + $0x268] sm:$0xff]
      %v1443 = vld [vmem:[#allocation2 + $0x270] sm:$0xff]
      %v1444 = vld [vmem:[#allocation2 + $0x278] sm:$0xff]
      %v1445 = vld [vmem:[#allocation2 + $0x280] sm:$0xff]
      %v1446 = vld [vmem:[#allocation2 + $0x288] sm:$0xff]
      %v1447 = vld [vmem:[#allocation2 + $0x290] sm:$0xff]
      %v1448 = vld [vmem:[#allocation2 + $0x298] sm:$0xff]
      %v1449 = vld [vmem:[#allocation2 + $0x2a0] sm:$0xff]
      %v1450 = vld [vmem:[#allocation2 + $0x2a8] sm:$0xff]
      %v1451 = vld [vmem:[#allocation2 + $0x2b0] sm:$0xff]
      %v1452 = vld [vmem:[#allocation2 + $0x2b8] sm:$0xff]
      %v1453 = vld [vmem:[#allocation2 + $0x2c0] sm:$0xff]
      %v1454 = vld [vmem:[#allocation2 + $0x2c8] sm:$0xff]
      %v1455 = vld [vmem:[#allocation2 + $0x2d0] sm:$0xff]
      %v1456 = vld [vmem:[#allocation2 + $0x2d8] sm:$0xff]
      %v1457 = vld [vmem:[#allocation2 + $0x2e0] sm:$0xff]
      %v1458 = vld [vmem:[#allocation2 + $0x2e8] sm:$0xff]
      %v1459 = vld [vmem:[#allocation2 + $0x2f0] sm:$0xff]
      %v1460 = vld [vmem:[#allocation2 + $0x2f8] sm:$0xff]
      %v1461 = vld [vmem:[#allocation2 + $0x300] sm:$0xff]
      %v1462 = vld [vmem:[#allocation2 + $0x308] sm:$0xff]
      %v1463 = vld [vmem:[#allocation2 + $0x310] sm:$0xff]
      %v1464 = vld [vmem:[#allocation2 + $0x318] sm:$0xff]
      %v1465 = vld [vmem:[#allocation2 + $0x320] sm:$0xff]
      %v1466 = vld [vmem:[#allocation2 + $0x328] sm:$0xff]
      %v1467 = vld [vmem:[#allocation2 + $0x330] sm:$0xff]
      %v1468 = vld [vmem:[#allocation2 + $0x338] sm:$0xff]
      %v1469 = vld [vmem:[#allocation2 + $0x340] sm:$0xf]
      %v1470 = vld [vmem:[#allocation2 + $0x348] sm:$0xf]
      %v1471 = vld [vmem:[#allocation2 + $0x350] sm:$0xf]
      %v1472 = vld [vmem:[#allocation2 + $0x358] sm:$0xf]
      %v1473 = vld [vmem:[#allocation2 + $0x360] sm:$0xf]
      %v1474 = vld [vmem:[#allocation2 + $0x368] sm:$0xf]
      %v1475 = vld [vmem:[#allocation2 + $0x370] sm:$0xf]
      %v1476 = vld [vmem:[#allocation2 + $0x378] sm:$0xf]
      %vm1477 = vcmask 883712
      %v1479 = vsel %vm1477, %v1364, 0
      %vm1481 = vcmask 1043456
      %v1483 = vsel %vm1481, %v1469, 0
      %v1486 = vsel %vm1481, %v1470, 0
      %v1489 = vsel %vm1481, %v1471, 0
      %v1492 = vsel %vm1481, %v1472, 0
      %v1495 = vsel %vm1481, %v1473, 0
      %v1498 = vsel %vm1481, %v1474, 0
      %v1501 = vsel %vm1481, %v1475, 0
      %v1504 = vsel %vm1481, %v1476, 0
      %1506 = vmatprep.subr.mxu0 %v1366
      %1507 = vmatpush1.msra.mxu0 %v1365
      %1508 = vmatprep.subr.mxu0 %v1374
      %1509 = vmatpush1.msra.mxu0 %v1373
      %1510 = vmatprep.subr.mxu0 %v1382
      %1511 = vmatpush1.msra.mxu0 %v1381
      %1512 = vmatprep.subr.mxu0 %v1390
      %1513 = vmatpush1.msra.mxu0 %v1389
      %1514 = vmatprep.subr.mxu0 %v1398
      %1515 = vmatpush1.msra.mxu0 %v1397
      %1516 = vmatprep.subr.mxu0 %v1406
      %1517 = vmatpush1.msra.mxu0 %v1405
      %1518 = vmatprep.subr.mxu0 %v1414
      %1519 = vmatpush1.msra.mxu0 %v1413
      %1520 = vmatprep.subr.mxu0 %v1422
      %1521 = vmatpush1.msra.mxu0 %v1421
      %1522 = vmatprep.subr.mxu0 %v1430
      %1523 = vmatpush1.msra.mxu0 %v1429
      %1524 = vmatprep.subr.mxu0 %v1438
      %1525 = vmatpush1.msra.mxu0 %v1437
      %1526 = vmatprep.subr.mxu0 %v1446
      %1527 = vmatpush1.msra.mxu0 %v1445
      %1528 = vmatprep.subr.mxu0 %v1454
      %1529 = vmatpush1.msra.mxu0 %v1453
      %1530 = vmatprep.subr.mxu0 %v1462
      %1531 = vmatpush1.msra.mxu0 %v1461
      %1532 = vmatprep.subr.mxu0 %v1486
      %1533 = vmatpush1.msra.mxu0 %v1483
      %1534 = vmatprep.subr.mxu0 0.0
      %1535 = vmatpush1.msra.mxu0 0.0
      %1536 = vmatprep.subr.mxu0 0.0
      %1537 = vmatpush1.msra.mxu0 0.0
      %1538 = vmatprep.subr.mxu0 0.0
      %1539 = vmatpush1.msra.mxu0 0.0
      %1540 = vmatprep.subr.mxu0 0.0
      %1541 = vmatpush1.msra.mxu0 0.0
      %1542 = vmatprep.subr.mxu0 0.0
      %1543 = vmatpush1.msra.mxu0 0.0
      %1544 = vmatprep.subr.mxu0 0.0
      %1545 = vmatpush1.msra.mxu0 0.0
      %1546 = vmatprep.subr.mxu0 0.0
      %1547 = vmatpush1.msra.mxu0 0.0
      %1548 = vmatprep.subr.mxu0 0.0
      %1549 = vmatpush1.msra.mxu0 0.0
      %1550 = vmatprep.subr.mxu0 0.0
      %1551 = vmatpush1.msra.mxu0 0.0
      %1552 = vmatprep.subr.mxu0 0.0
      %1553 = vmatpush1.msra.mxu0 0.0
      %1554 = vmatprep.subr.mxu0 0.0
      %1555 = vmatpush1.msra.mxu0 0.0
      %1556 = vmatprep.subr.mxu0 0.0
      %1557 = vmatpush1.msra.mxu0 0.0
      %1558 = vmatprep.subr.mxu0 0.0
      %1559 = vmatpush1.msra.mxu0 0.0
      %1560 = vmatprep.subr.mxu0 0.0
      %1561 = vmatpush1.msra.mxu0 0.0
      %1562 = vmatprep.subr.mxu0 0.0
      %1563 = vmatpush1.msra.mxu0 0.0
      %1564 = vmatprep.subr.mxu0 0.0
      %1565 = vmatpush1.msra.mxu0 0.0
      %1566 = vmatprep.subr.mxu0 0.0
      %1567 = vmatpush1.msra.mxu0 0.0
      %1568 = vmatprep.subr.mxu0 0.0
      %1569 = vmatpush1.msra.mxu0 0.0
      %1570 = vmatprep.mubr.f32.mxu0 0.0
      %1571 = vmatmul.mubr.f32.gmra.mrb[0].mxu0 %v1479
      %v1572 = vpop.f32.mrb[0].mxu0
      %v1573 = vadd.f32 0.0, %v1572
      %v1574 = vpop.f32.mrb[0].mxu0
      %v1575 = vadd.f32 0.0, %v1574
      %1576 = vdwg.mxu0
      %1577 = vmatprep.subr.mxu0 %v1368
      %1578 = vmatpush1.msra.mxu0 %v1367
      %1579 = vmatprep.subr.mxu0 %v1376
      %1580 = vmatpush1.msra.mxu0 %v1375
      %1581 = vmatprep.subr.mxu0 %v1384
      %1582 = vmatpush1.msra.mxu0 %v1383
      %1583 = vmatprep.subr.mxu0 %v1392
      %1584 = vmatpush1.msra.mxu0 %v1391
      %1585 = vmatprep.subr.mxu0 %v1400
      %1586 = vmatpush1.msra.mxu0 %v1399
      %1587 = vmatprep.subr.mxu0 %v1408
      %1588 = vmatpush1.msra.mxu0 %v1407
      %1589 = vmatprep.subr.mxu0 %v1416
      %1590 = vmatpush1.msra.mxu0 %v1415
      %1591 = vmatprep.subr.mxu0 %v1424
      %1592 = vmatpush1.msra.mxu0 %v1423
      %1593 = vmatprep.subr.mxu0 %v1432
      %1594 = vmatpush1.msra.mxu0 %v1431
      %1595 = vmatprep.subr.mxu0 %v1440
      %1596 = vmatpush1.msra.mxu0 %v1439
      %1597 = vmatprep.subr.mxu0 %v1448
      %1598 = vmatpush1.msra.mxu0 %v1447
      %1599 = vmatprep.subr.mxu0 %v1456
      %1600 = vmatpush1.msra.mxu0 %v1455
      %1601 = vmatprep.subr.mxu0 %v1464
      %1602 = vmatpush1.msra.mxu0 %v1463
      %1603 = vmatprep.subr.mxu0 %v1492
      %1604 = vmatpush1.msra.mxu0 %v1489
      %1605 = vmatprep.subr.mxu0 0.0
      %1606 = vmatpush1.msra.mxu0 0.0
      %1607 = vmatprep.subr.mxu0 0.0
      %1608 = vmatpush1.msra.mxu0 0.0
      %1609 = vmatprep.subr.mxu0 0.0
      %1610 = vmatpush1.msra.mxu0 0.0
      %1611 = vmatprep.subr.mxu0 0.0
      %1612 = vmatpush1.msra.mxu0 0.0
      %1613 = vmatprep.subr.mxu0 0.0
      %1614 = vmatpush1.msra.mxu0 0.0
      %1615 = vmatprep.subr.mxu0 0.0
      %1616 = vmatpush1.msra.mxu0 0.0
      %1617 = vmatprep.subr.mxu0 0.0
      %1618 = vmatpush1.msra.mxu0 0.0
      %1619 = vmatprep.subr.mxu0 0.0
      %1620 = vmatpush1.msra.mxu0 0.0
      %1621 = vmatprep.subr.mxu0 0.0
      %1622 = vmatpush1.msra.mxu0 0.0
      %1623 = vmatprep.subr.mxu0 0.0
      %1624 = vmatpush1.msra.mxu0 0.0
      %1625 = vmatprep.subr.mxu0 0.0
      %1626 = vmatpush1.msra.mxu0 0.0
      %1627 = vmatprep.subr.mxu0 0.0
      %1628 = vmatpush1.msra.mxu0 0.0
      %1629 = vmatprep.subr.mxu0 0.0
      %1630 = vmatpush1.msra.mxu0 0.0
      %1631 = vmatprep.subr.mxu0 0.0
      %1632 = vmatpush1.msra.mxu0 0.0
      %1633 = vmatprep.subr.mxu0 0.0
      %1634 = vmatpush1.msra.mxu0 0.0
      %1635 = vmatprep.subr.mxu0 0.0
      %1636 = vmatpush1.msra.mxu0 0.0
      %1637 = vmatprep.subr.mxu0 0.0
      %1638 = vmatpush1.msra.mxu0 0.0
      %1639 = vmatprep.subr.mxu0 0.0
      %1640 = vmatpush1.msra.mxu0 0.0
      %1641 = vmatprep.mubr.f32.mxu0 0.0
      %1642 = vmatmul.mubr.f32.gmra.mrb[0].mxu0 %v1479
      %v1643 = vpop.f32.mrb[0].mxu0
      %v1644 = vadd.f32 0.0, %v1643
      %v1645 = vpop.f32.mrb[0].mxu0
      %v1646 = vadd.f32 0.0, %v1645
      %1647 = vdwg.mxu0
      %1648 = vmatprep.subr.mxu0 %v1370
      %1649 = vmatpush1.msra.mxu0 %v1369
      %1650 = vmatprep.subr.mxu0 %v1378
      %1651 = vmatpush1.msra.mxu0 %v1377
      %1652 = vmatprep.subr.mxu0 %v1386
      %1653 = vmatpush1.msra.mxu0 %v1385
      %1654 = vmatprep.subr.mxu0 %v1394
      %1655 = vmatpush1.msra.mxu0 %v1393
      %1656 = vmatprep.subr.mxu0 %v1402
      %1657 = vmatpush1.msra.mxu0 %v1401
      %1658 = vmatprep.subr.mxu0 %v1410
      %1659 = vmatpush1.msra.mxu0 %v1409
      %1660 = vmatprep.subr.mxu0 %v1418
      %1661 = vmatpush1.msra.mxu0 %v1417
      %1662 = vmatprep.subr.mxu0 %v1426
      %1663 = vmatpush1.msra.mxu0 %v1425
      %1664 = vmatprep.subr.mxu0 %v1434
      %1665 = vmatpush1.msra.mxu0 %v1433
      %1666 = vmatprep.subr.mxu0 %v1442
      %1667 = vmatpush1.msra.mxu0 %v1441
      %1668 = vmatprep.subr.mxu0 %v1450
      %1669 = vmatpush1.msra.mxu0 %v1449
      %1670 = vmatprep.subr.mxu0 %v1458
      %1671 = vmatpush1.msra.mxu0 %v1457
      %1672 = vmatprep.subr.mxu0 %v1466
      %1673 = vmatpush1.msra.mxu0 %v1465
      %1674 = vmatprep.subr.mxu0 %v1498
      %1675 = vmatpush1.msra.mxu0 %v1495
      %1676 = vmatprep.subr.mxu0 0.0
      %1677 = vmatpush1.msra.mxu0 0.0
      %1678 = vmatprep.subr.mxu0 0.0
      %1679 = vmatpush1.msra.mxu0 0.0
      %1680 = vmatprep.subr.mxu0 0.0
      %1681 = vmatpush1.msra.mxu0 0.0
      %1682 = vmatprep.subr.mxu0 0.0
      %1683 = vmatpush1.msra.mxu0 0.0
      %1684 = vmatprep.subr.mxu0 0.0
      %1685 = vmatpush1.msra.mxu0 0.0
      %1686 = vmatprep.subr.mxu0 0.0
      %1687 = vmatpush1.msra.mxu0 0.0
      %1688 = vmatprep.subr.mxu0 0.0
      %1689 = vmatpush1.msra.mxu0 0.0
      %1690 = vmatprep.subr.mxu0 0.0
      %1691 = vmatpush1.msra.mxu0 0.0
      %1692 = vmatprep.subr.mxu0 0.0
      %1693 = vmatpush1.msra.mxu0 0.0
      %1694 = vmatprep.subr.mxu0 0.0
      %1695 = vmatpush1.msra.mxu0 0.0
      %1696 = vmatprep.subr.mxu0 0.0
      %1697 = vmatpush1.msra.mxu0 0.0
      %1698 = vmatprep.subr.mxu0 0.0
      %1699 = vmatpush1.msra.mxu0 0.0
      %1700 = vmatprep.subr.mxu0 0.0
      %1701 = vmatpush1.msra.mxu0 0.0
      %1702 = vmatprep.subr.mxu0 0.0
      %1703 = vmatpush1.msra.mxu0 0.0
      %1704 = vmatprep.subr.mxu0 0.0
      %1705 = vmatpush1.msra.mxu0 0.0
      %1706 = vmatprep.subr.mxu0 0.0
      %1707 = vmatpush1.msra.mxu0 0.0
      %1708 = vmatprep.subr.mxu0 0.0
      %1709 = vmatpush1.msra.mxu0 0.0
      %1710 = vmatprep.subr.mxu0 0.0
      %1711 = vmatpush1.msra.mxu0 0.0
      %1712 = vmatprep.mubr.f32.mxu0 0.0
      %1713 = vmatmul.mubr.f32.gmra.mrb[0].mxu0 %v1479
      %v1714 = vpop.f32.mrb[0].mxu0
      %v1715 = vadd.f32 0.0, %v1714
      %v1716 = vpop.f32.mrb[0].mxu0
      %v1717 = vadd.f32 0.0, %v1716
      %1718 = vdwg.mxu0
      %1719 = vmatprep.subr.mxu0 %v1372
      %1720 = vmatpush1.msra.mxu0 %v1371
      %1721 = vmatprep.subr.mxu0 %v1380
      %1722 = vmatpush1.msra.mxu0 %v1379
      %1723 = vmatprep.subr.mxu0 %v1388
      %1724 = vmatpush1.msra.mxu0 %v1387
      %1725 = vmatprep.subr.mxu0 %v1396
      %1726 = vmatpush1.msra.mxu0 %v1395
      %1727 = vmatprep.subr.mxu0 %v1404
      %1728 = vmatpush1.msra.mxu0 %v1403
      %1729 = vmatprep.subr.mxu0 %v1412
      %1730 = vmatpush1.msra.mxu0 %v1411
      %1731 = vmatprep.subr.mxu0 %v1420
      %1732 = vmatpush1.msra.mxu0 %v1419
      %1733 = vmatprep.subr.mxu0 %v1428
      %1734 = vmatpush1.msra.mxu0 %v1427
      %1735 = vmatprep.subr.mxu0 %v1436
      %1736 = vmatpush1.msra.mxu0 %v1435
      %1737 = vmatprep.subr.mxu0 %v1444
      %1738 = vmatpush1.msra.mxu0 %v1443
      %1739 = vmatprep.subr.mxu0 %v1452
      %1740 = vmatpush1.msra.mxu0 %v1451
      %1741 = vmatprep.subr.mxu0 %v1460
      %1742 = vmatpush1.msra.mxu0 %v1459
      %1743 = vmatprep.subr.mxu0 %v1468
      %1744 = vmatpush1.msra.mxu0 %v1467
      %1745 = vmatprep.subr.mxu0 %v1504
      %1746 = vmatpush1.msra.mxu0 %v1501
      %1747 = vmatprep.subr.mxu0 0.0
      %1748 = vmatpush1.msra.mxu0 0.0
      %1749 = vmatprep.subr.mxu0 0.0
      %1750 = vmatpush1.msra.mxu0 0.0
      %1751 = vmatprep.subr.mxu0 0.0
      %1752 = vmatpush1.msra.mxu0 0.0
      %1753 = vmatprep.subr.mxu0 0.0
      %1754 = vmatpush1.msra.mxu0 0.0
      %1755 = vmatprep.subr.mxu0 0.0
      %1756 = vmatpush1.msra.mxu0 0.0
      %1757 = vmatprep.subr.mxu0 0.0
      %1758 = vmatpush1.msra.mxu0 0.0
      %1759 = vmatprep.subr.mxu0 0.0
      %1760 = vmatpush1.msra.mxu0 0.0
      %1761 = vmatprep.subr.mxu0 0.0
      %1762 = vmatpush1.msra.mxu0 0.0
      %1763 = vmatprep.subr.mxu0 0.0
      %1764 = vmatpush1.msra.mxu0 0.0
      %1765 = vmatprep.subr.mxu0 0.0
      %1766 = vmatpush1.msra.mxu0 0.0
      %1767 = vmatprep.subr.mxu0 0.0
      %1768 = vmatpush1.msra.mxu0 0.0
      %1769 = vmatprep.subr.mxu0 0.0
      %1770 = vmatpush1.msra.mxu0 0.0
      %1771 = vmatprep.subr.mxu0 0.0
      %1772 = vmatpush1.msra.mxu0 0.0
      %1773 = vmatprep.subr.mxu0 0.0
      %1774 = vmatpush1.msra.mxu0 0.0
      %1775 = vmatprep.subr.mxu0 0.0
      %1776 = vmatpush1.msra.mxu0 0.0
      %1777 = vmatprep.subr.mxu0 0.0
      %1778 = vmatpush1.msra.mxu0 0.0
      %1779 = vmatprep.subr.mxu0 0.0
      %1780 = vmatpush1.msra.mxu0 0.0
      %1781 = vmatprep.subr.mxu0 0.0
      %1782 = vmatpush1.msra.mxu0 0.0
      %1783 = vmatprep.mubr.f32.mxu0 0.0
      %1784 = vmatmul.mubr.f32.gmra.mrb[0].mxu0 %v1479
      %v1785 = vpop.f32.mrb[0].mxu0
      %v1786 = vadd.f32 0.0, %v1785
      %v1787 = vpop.f32.mrb[0].mxu0
      %v1788 = vadd.f32 0.0, %v1787
      %1789 = vdwg.mxu0
      %v1790 = vld [vmem:[%s2] sm:$0xff]
      %v1792 = vlaneseq
      %v1793 = vshrl.u32 %v1792, 7
      %v1794 = vsub.s32 0, %v1793
      %v1795 = vrot.slane %v1790, %v1794
      %v1796 = vlaneseq
      %v1797 = vshrl.u32 %v1796, 7
      %v1798 = vsub.s32 1, %v1797
      %v1799 = vrot.slane %v1790, %v1798
      %v1800 = vlaneseq
      %v1801 = vshrl.u32 %v1800, 7
      %v1802 = vsub.s32 2, %v1801
      %v1803 = vrot.slane %v1790, %v1802
      %v1804 = vlaneseq
      %v1805 = vshrl.u32 %v1804, 7
      %v1806 = vsub.s32 3, %v1805
      %v1807 = vrot.slane %v1790, %v1806
      %v1808 = vlaneseq
      %v1809 = vshrl.u32 %v1808, 7
      %v1810 = vsub.s32 4, %v1809
      %v1811 = vrot.slane %v1790, %v1810
      %v1812 = vlaneseq
      %v1813 = vshrl.u32 %v1812, 7
      %v1814 = vsub.s32 5, %v1813
      %v1815 = vrot.slane %v1790, %v1814
      %v1816 = vlaneseq
      %v1817 = vshrl.u32 %v1816, 7
      %v1818 = vsub.s32 6, %v1817
      %v1819 = vrot.slane %v1790, %v1818
      %v1820 = vlaneseq
      %v1821 = vshrl.u32 %v1820, 7
      %v1822 = vsub.s32 7, %v1821
      %v1823 = vrot.slane %v1790, %v1822
      %v1832 = vmul.f32 %v1573, %v1795
      %v1833 = vmul.f32 %v1575, %v1799
      %v1834 = vmul.f32 %v1644, %v1803
      %v1835 = vmul.f32 %v1646, %v1807
      %v1836 = vmul.f32 %v1715, %v1811
      %v1837 = vmul.f32 %v1717, %v1815
      %v1838 = vmul.f32 %v1786, %v1819
      %v1839 = vmul.f32 %v1788, %v1823
      %v1840 = vsel %vm1481, %v1832, 0.0
      %v1841 = vsel %vm1481, %v1833, 0.0
      %v1842 = vadd.f32 %v1840, %v1841
      %v1843 = vsel %vm1481, %v1834, 0.0
      %v1844 = vadd.f32 %v1842, %v1843
      %v1845 = vsel %vm1481, %v1835, 0.0
      %v1846 = vadd.f32 %v1844, %v1845
      %v1847 = vsel %vm1481, %v1836, 0.0
      %v1848 = vadd.f32 %v1846, %v1847
      %v1849 = vsel %vm1481, %v1837, 0.0
      %v1850 = vadd.f32 %v1848, %v1849
      %v1851 = vsel %vm1481, %v1838, 0.0
      %v1852 = vadd.f32 %v1850, %v1851
      %v1853 = vsel %vm1481, %v1839, 0.0
      %v1854 = vadd.f32 %v1852, %v1853
      %1855 = vadd.xlane.f32.xlu0 %v1854
      %v1856 = vpop.xlane.xlu0 %1855
      %v1857 = vmul.f32 %v1856, 0.001953125
      %v1858 = vsub.f32 %v1573, %v1857
      %v1859 = vsub.f32 %v1575, %v1857
      %v1860 = vsub.f32 %v1644, %v1857
      %v1861 = vsub.f32 %v1646, %v1857
      %v1862 = vsub.f32 %v1715, %v1857
      %v1863 = vsub.f32 %v1717, %v1857
      %v1864 = vsub.f32 %v1786, %v1857
      %v1865 = vsub.f32 %v1788, %v1857
      %v1866 = vmul.f32 %v1858, %v1795
      %v1867 = vmul.f32 %v1859, %v1799
      %v1868 = vmul.f32 %v1860, %v1803
      %v1869 = vmul.f32 %v1861, %v1807
      %v1870 = vmul.f32 %v1862, %v1811
      %v1871 = vmul.f32 %v1863, %v1815
      %v1872 = vmul.f32 %v1864, %v1819
      %v1873 = vmul.f32 %v1865, %v1823
      %v1874 = vmul.f32 %v1866, %v1866
      %v1875 = vmul.f32 %v1867, %v1867
      %v1876 = vmul.f32 %v1868, %v1868
      %v1877 = vmul.f32 %v1869, %v1869
      %v1878 = vmul.f32 %v1870, %v1870
      %v1879 = vmul.f32 %v1871, %v1871
      %v1880 = vmul.f32 %v1872, %v1872
      %v1881 = vmul.f32 %v1873, %v1873
      %v1882 = vsel %vm1481, %v1874, 0.0
      %v1883 = vsel %vm1481, %v1875, 0.0
      %v1884 = vadd.f32 %v1882, %v1883
      %v1885 = vsel %vm1481, %v1876, 0.0
      %v1886 = vadd.f32 %v1884, %v1885
      %v1887 = vsel %vm1481, %v1877, 0.0
      %v1888 = vadd.f32 %v1886, %v1887
      %v1889 = vsel %vm1481, %v1878, 0.0
      %v1890 = vadd.f32 %v1888, %v1889
      %v1891 = vsel %vm1481, %v1879, 0.0
      %v1892 = vadd.f32 %v1890, %v1891
      %v1893 = vsel %vm1481, %v1880, 0.0
      %v1894 = vadd.f32 %v1892, %v1893
      %v1895 = vsel %vm1481, %v1881, 0.0
      %v1896 = vadd.f32 %v1894, %v1895
      %1897 = vadd.xlane.f32.xlu0 %v1896
      %v1898 = vpop.xlane.xlu0 %1897
      %v1899 = vmul.f32 %v1898, 0.001953125
      %v1900 = vadd.f32 %v1899, 1e-05
      %v1901 = vrsqrt.pop %v1900
      %v1902 = vmul.f32 %v1858, %v1901
      %v1903 = vmul.f32 %v1859, %v1901
      %v1904 = vmul.f32 %v1860, %v1901
      %v1905 = vmul.f32 %v1861, %v1901
      %v1906 = vmul.f32 %v1862, %v1901
      %v1907 = vmul.f32 %v1863, %v1901
      %v1908 = vmul.f32 %v1864, %v1901
      %v1909 = vmul.f32 %v1865, %v1901
      %vm1910 = vcmp.ge.f32.partialorder %v1902, 0.0
      %vm1911 = vcmp.ge.f32.partialorder %v1903, 0.0
      %vm1912 = vcmp.ge.f32.partialorder %v1904, 0.0
      %vm1913 = vcmp.ge.f32.partialorder %v1905, 0.0
      %vm1914 = vcmp.ge.f32.partialorder %v1906, 0.0
      %vm1915 = vcmp.ge.f32.partialorder %v1907, 0.0
      %vm1916 = vcmp.ge.f32.partialorder %v1908, 0.0
      %vm1917 = vcmp.ge.f32.partialorder %v1909, 0.0
      %v1918 = vmul.f32 %v1902, 0.2
      %v1919 = vmul.f32 %v1903, 0.2
      %v1920 = vmul.f32 %v1904, 0.2
      %v1921 = vmul.f32 %v1905, 0.2
      %v1922 = vmul.f32 %v1906, 0.2
      %v1923 = vmul.f32 %v1907, 0.2
      %v1924 = vmul.f32 %v1908, 0.2
      %v1925 = vmul.f32 %v1909, 0.2
      %v1926 = vsel %vm1910, %v1902, %v1918
      %v1927 = vsel %vm1911, %v1903, %v1919
      %v1928 = vsel %vm1912, %v1904, %v1920
      %v1929 = vsel %vm1913, %v1905, %v1921
      %v1930 = vsel %vm1914, %v1906, %v1922
      %v1931 = vsel %vm1915, %v1907, %v1923
      %v1932 = vsel %vm1916, %v1908, %v1924
      %v1933 = vsel %vm1917, %v1909, %v1925
      %v1934 = vmul.f32 %v1926, %v1795
      %v1935 = vmul.f32 %v1927, %v1799
      %v1936 = vmul.f32 %v1928, %v1803
      %v1937 = vmul.f32 %v1929, %v1807
      %v1938 = vmul.f32 %v1930, %v1811
      %v1939 = vmul.f32 %v1931, %v1815
      %v1940 = vmul.f32 %v1932, %v1819
      %v1941 = vmul.f32 %v1933, %v1823
      %1942 = vst [vmem:[%s209] sm:$0xf] 0.0
      %v1951 = vcombine.low %v1934, %v1935
      %v1952 = vcombine.low %v1936, %v1937
      %v1953 = vcombine.low %v1938, %v1939
      %v1954 = vcombine.low %v1940, %v1941
      %1959 = vst [vmem:[%s209 + $0x4] sm:$0xff] %v1951
      %1960 = vst [vmem:[%s209 + $0xc] sm:$0xff] %v1952
      %1961 = vst [vmem:[%s209 + $0x14] sm:$0xff] %v1953
      %1962 = vst [vmem:[%s209 + $0x1c] sm:$0xff] %v1954
      %1963 = vst [vmem:[%s209 + $0x24] sm:$0xf] 0.0
      %p1964 = scmp.lt.s32.totalorder %s18, 1
      %s1965 = scalar_select %p1964, %s18, 1
      %p1966 = scmp.lt.s32.totalorder %s19, 0
      %s1967 = scalar_select %p1966, %s19, 0
      %s1968 = smul.addr %s1967, 10
      %s1969 = smul.addr %s1965, 10
      %s1970 = sadd.s32 %s1968, %s1969
      %s1971 = smul.addr %s1970, 4
      %s1972 = scalar_lea.vmem %s3, %s1971
      // Predicated region
      $region37: #{dense_block.2} parent=31 // pred_check
        %p1973 = pneg %p119
      $region38: #{dense_block.2} parent=31 // pred_check_branch
        %1975 = sbr.rel (%p1973) target = $region40
      $region39: #{dense_block.2} parent=31 // pred_region
        _
      $region40: #{dense_block.2} parent=31 // pred_fallthru
        _
    $region32: #{dense_block.2} parent=5 // pred_fallthru
      _
    %p1976 = scmp.le.s32.totalorder 2, %s9
    // Predicated region
    $region41: #{dense_block.2} parent=5 // pred_check
      %p1977 = pneg %p1976
    $region42: #{dense_block.2} parent=5 // pred_check_branch
      %1979 = sbr.rel (%p1977) target = $region44
    $region43: #{dense_block.2} parent=5 // pred_region
      %s1980 = ssub.s32 %s9, 2
      // Predicated region
      $region45: #{dense_block.2} parent=43 // pred_check
        %p1981 = pneg %p125
      $region46: #{dense_block.2} parent=43 // pred_check_branch
        %1983 = sbr.rel (%p1981) target = $region48
      $region47: #{dense_block.2} parent=43 // pred_region
        %p1984 = scmp.lt.s32.totalorder %s20, 1
        %s1985 = scalar_select %p1984, %s20, 1
        %p1986 = scmp.lt.s32.totalorder %s21, 0
        %s1987 = scalar_select %p1986, %s21, 0
        %s1988 = smul.addr %s1987, 10
        %s1989 = smul.addr %s1985, 10
        %s1990 = sadd.s32 %s1988, %s1989
        %s1991 = smul.addr %s1990, 4
        %s1992 = scalar_lea.vmem %s3, %s1991
      $region48: #{dense_block.2} parent=43 // pred_fallthru
        _
    $region44: #{dense_block.2} parent=5 // pred_fallthru
      _
  $region6: #{dense_block.2} parent=0 // loop_footer
    %s13 = sadd.s32 1, %s9
  $region7: #{dense_block.2} parent=0 // loop_footer_branch
    %8 = sbr.rel target = $region3
  $region8: #{dense_block.2} parent=0 // loop_exit
    _

// kernel: dense_block.3
$region0: #{dense_block.3}
  #allocation0 [shape = 'u32[]', space=smem, size = 0x4, offset = 0x4, fixed_abs, tag = 'smem constant byte address 0x4 - core index']
  #allocation1 [shape = 'u32[144,128]{1,0:T(1,128)}', space=vmem, size = 0x12000, scoped, tag = 'internal scratch']
  #allocation2 [shape = 'f32[216,1024]{1,0:T(8,128)}', space=vmem, size = 0xd8000, scoped, tag = 'scratch operand']
  %s0 = inlined_call_operand.vmem [shape: f32[2,8,1280], index: 0, kind: input, shape index: {}]
  %s1 = inlined_call_operand.vmem [shape: f32[4,216], index: 1, kind: input, shape index: {}]
  %s2 = inlined_call_operand.vmem [shape: f32[1,1024], index: 2, kind: input, shape index: {}]
  %s3 = inlined_call_operand.vmem [shape: f32[2,4,1280], index: 3, kind: output, shape index: {}]
  %s4 = sld [smem:[#allocation0]]
  $region49: #{dense_block.3} parent=0
    _
  %s6 = ssub.s32 1, %s4
  %s7 = scalar_select 0, %s6, %s4
  loop: start=0, step=1, limit=4
  $region2: #{dense_block.3} parent=0 // loop_pre_header
    _
  $region3: #{dense_block.3} parent=0 // loop_header
    %s9 = sphi 0, %s13
    %p10 = scmp.ge.s32.totalorder %s9, 4
    %s16 = sphi 0, %s28
    %s17 = sphi 0, %s24
    %s18 = sphi 0, %s16
    %s19 = sphi 0, %s17
    %s20 = sphi 0, %s18
    %s21 = sphi 0, %s19
    %s31 = sphi 0, %s33
    %s34 = sphi 0, %s31
    %s35 = sphi 0, %s34
    %s51 = sphi 0, %s35
    %s57 = sphi 0, %s59
    %s60 = sphi 0, %s57
    %s61 = sphi 0, %s60
    %s77 = sphi 0, %s61
    %s81 = sphi 0, %s81
    %s83 = sphi 0, %s81
    %s84 = sphi 0, %s83
    %s98 = sphi 0, %s84
    %s106 = sphi 0, %s108
    %s109 = sphi 0, %s106
    %s110 = sphi 0, %s109
    %s126 = sphi 0, %s110
  $region4: #{dense_block.3} parent=0 // loop_header_branch
    %12 = sbr.rel (%p10) target = $region8
  $region5: #{dense_block.3} parent=0 // loop_body
    %s14 = ssub.s32 %s9, 1
    %s15 = ssub.s32 %s9, 2
    %s22 = sadd.s32 1, %s17
    %p23 = scmp.ge.s32.totalorder %s22, 1
    %s24 = scalar_select %p23, 0, %s22
    %s25 = sadd.s32 1, %s16
    %s26 = scalar_select %p23, %s25, %s16
    %p27 = scmp.ge.s32.totalorder %s26, 2
    %s28 = scalar_select %p27, 0, %s26
    %s29 = ssub.s32 %s16, %s28
    %p30 = scmp.eq.s32.totalorder %s29, 0
    %s32 = sadd.s32 %s31, 1
    %s33 = scalar_select %p30, %s31, %s32
    %p36 = pneg %p30
    %p37 = scmp.eq.s32.totalorder %s9, 1
    %p38 = por %p36, %p37
    %p39 = scmp.ne.s32.totalorder %s31, %s34
    %p40 = scmp.eq.s32.totalorder %s9, 0
    %p41 = por %p39, %p40
    %p42 = scmp.ne.s32.totalorder %s31, %s34
    %p43 = scmp.eq.s32.totalorder %s14, 1
    %p44 = por %p42, %p43
    %p45 = scmp.ne.s32.totalorder %s34, %s35
    %p46 = scmp.eq.s32.totalorder %s14, 0
    %p47 = por %p45, %p46
    %p48 = scmp.ne.s32.totalorder %s34, %s35
    %p49 = scmp.eq.s32.totalorder %s15, 1
    %p50 = por %p48, %p49
    %p52 = scmp.ne.s32.totalorder %s35, %s51
    %p53 = scmp.eq.s32.totalorder %s15, 0
    %p54 = por %p52, %p53
    %s55 = ssub.s32 %s17, %s24
    %p56 = scmp.eq.s32.totalorder %s55, 0
    %s58 = sadd.s32 %s57, 1
    %s59 = scalar_select %p56, %s57, %s58
    %p62 = pneg %p56
    %p63 = scmp.eq.s32.totalorder %s9, 1
    %p64 = por %p62, %p63
    %p65 = scmp.ne.s32.totalorder %s57, %s60
    %p66 = scmp.eq.s32.totalorder %s9, 0
    %p67 = por %p65, %p66
    %p68 = scmp.ne.s32.totalorder %s57, %s60
    %p69 = scmp.eq.s32.totalorder %s14, 1
    %p70 = por %p68, %p69
    %p71 = scmp.ne.s32.totalorder %s60, %s61
    %p72 = scmp.eq.s32.totalorder %s14, 0
    %p73 = por %p71, %p72
    %p74 = scmp.ne.s32.totalorder %s60, %s61
    %p75 = scmp.eq.s32.totalorder %s15, 1
    %p76 = por %p74, %p75
    %p78 = scmp.ne.s32.totalorder %s61, %s77
    %p79 = scmp.eq.s32.totalorder %s15, 0
    %p80 = por %p78, %p79
    %s82 = sadd.s32 %s81, 1
    %p85 = scmp.eq.s32.totalorder %s9, 1
    %p86 = scmp.ne.s32.totalorder %s81, %s83
    %p87 = scmp.eq.s32.totalorder %s9, 0
    %p88 = por %p86, %p87
    %p89 = scmp.ne.s32.totalorder %s81, %s83
    %p90 = scmp.eq.s32.totalorder %s14, 1
    %p91 = por %p89, %p90
    %p92 = scmp.ne.s32.totalorder %s83, %s84
    %p93 = scmp.eq.s32.totalorder %s14, 0
    %p94 = por %p92, %p93
    %p95 = scmp.ne.s32.totalorder %s83, %s84
    %p96 = scmp.eq.s32.totalorder %s15, 1
    %p97 = por %p95, %p96
    %p99 = scmp.ne.s32.totalorder %s84, %s98
    %p100 = scmp.eq.s32.totalorder %s15, 0
    %p101 = por %p99, %p100
    %s102 = ssub.s32 %s16, %s28
    %s103 = ssub.s32 %s17, %s24
    %s104 = sor.u32 %s102, %s103
    %p105 = scmp.eq.s32.totalorder %s104, 0
    %s107 = sadd.s32 %s106, 1
    %s108 = scalar_select %p105, %s106, %s107
    %p111 = pneg %p105
    %p112 = scmp.eq.s32.totalorder %s9, 1
    %p113 = por %p111, %p112
    %p114 = scmp.ne.s32.totalorder %s106, %s109
    %p115 = scmp.eq.s32.totalorder %s9, 0
    %p116 = por %p114, %p115
    %p117 = scmp.ne.s32.totalorder %s106, %s109
    %p118 = scmp.eq.s32.totalorder %s14, 1
    %p119 = por %p117, %p118
    %p120 = scmp.ne.s32.totalorder %s109, %s110
    %p121 = scmp.eq.s32.totalorder %s14, 0
    %p122 = por %p120, %p121
    %p123 = scmp.ne.s32.totalorder %s109, %s110
    %p124 = scmp.eq.s32.totalorder %s15, 1
    %p125 = por %p123, %p124
    %p127 = scmp.ne.s32.totalorder %s110, %s126
    %p128 = scmp.eq.s32.totalorder %s15, 0
    %p129 = por %p127, %p128
    %p130 = scmp.le.s32.totalorder 1, %s9
    %p131 = scmp.lt.s32.totalorder %s9, 3
    %p132 = pnand %p130, %p131
    %p133 = pneg %p132
    // Predicated region
    $region9: #{dense_block.3} parent=5 // pred_check
      _
    $region10: #{dense_block.3} parent=5 // pred_check_branch
      %135 = sbr.rel (%p132) target = $region12
    $region11: #{dense_block.3} parent=5 // pred_region
      %s136 = ssub.s32 %s9, 1
      // Predicated region
      $region13: #{dense_block.3} parent=11 // pred_check
        %p137 = pneg %p73
      $region14: #{dense_block.3} parent=11 // pred_check_branch
        %139 = sbr.rel (%p137) target = $region16
      $region15: #{dense_block.3} parent=11 // pred_region
        %p140 = scmp.lt.s32.totalorder %s19, 0
        %s141 = scalar_select %p140, %s19, 0
        %s142 = smul.addr %s141, 2
        %s143 = smul.addr %s142, 4
        %s144 = scalar_lea.vmem %s1, %s143
      $region16: #{dense_block.3} parent=11 // pred_fallthru
        _
      // Predicated region
      $region17: #{dense_block.3} parent=11 // pred_check
        %p145 = pneg %p94
      $region18: #{dense_block.3} parent=11 // pred_check_branch
        %147 = sbr.rel (%p145) target = $region20
      $region19: #{dense_block.3} parent=11 // pred_region
        _
      $region20: #{dense_block.3} parent=11 // pred_fallthru
        _
    $region12: #{dense_block.3} parent=5 // pred_fallthru
      _
    %p148 = scmp.lt.s32.totalorder %s9, 2
    // Predicated region
    $region21: #{dense_block.3} parent=5 // pred_check
      %p149 = pneg %p148
    $region22: #{dense_block.3} parent=5 // pred_check_branch
      %151 = sbr.rel (%p149) target = $region24
    $region23: #{dense_block.3} parent=5 // pred_region
      // Predicated region
      $region25: #{dense_block.3} parent=23 // pred_check
        %p152 = pneg %p41
      $region26: #{dense_block.3} parent=23 // pred_check_branch
        %154 = sbr.rel (%p152) target = $region28
      $region27: #{dense_block.3} parent=23 // pred_region
        %p155 = scmp.lt.s32.totalorder %s16, 1
        %s156 = scalar_select %p155, %s16, 1
        %s157 = smul.addr %s156, 10
        %s158 = smul.addr %s157, 8
        %s159 = scalar_lea.vmem %s0, %s158
      $region28: #{dense_block.3} parent=23 // pred_fallthru
        _
    $region24: #{dense_block.3} parent=5 // pred_fallthru
      _
    %p160 = scmp.le.s32.totalorder 1, %s9
    %p161 = scmp.lt.s32.totalorder %s9, 3
    %p162 = pnand %p160, %p161
    %p163 = pneg %p162
    // Predicated region
    $region29: #{dense_block.3} parent=5 // pred_check
      _
    $region30: #{dense_block.3} parent=5 // pred_check_branch
      %165 = sbr.rel (%p162) target = $region32
    $region31: #{dense_block.3} parent=5 // pred_region
      %s166 = ssub.s32 %s9, 1
      %p167 = scmp.lt.s32.totalorder %s18, 1
      %s168 = scalar_select %p167, %s18, 1
      %s169 = smul.addr %s168, 10
      %s170 = smul.addr %s169, 8
      %s171 = scalar_lea.vmem %s0, %s170
      %p172 = pneg %p47
      %p173 = pneg %p44
      %p174 = scmp.lt.s32.totalorder %s19, 0
      %s175 = scalar_select %p174, %s19, 0
      %s176 = smul.addr %s175, 2
      %s177 = smul.addr %s176, 4
      %s178 = scalar_lea.vmem %s1, %s177
      %p179 = pneg %p73
      %p180 = pneg %p70
      %p181 = pneg %p94
      %p182 = pneg %p91
      %p183 = pneg %p122
      %p184 = pneg %p119
      %p185 = scmp.lt.s32.totalorder %s18, 1
      %s186 = scalar_select %p185, %s18, 1
      %p187 = scmp.lt.s32.totalorder %s19, 0
      %s188 = scalar_select %p187, %s19, 0
      %s189 = smul.addr %s188, 10
      %s190 = smul.addr %s186, 10
      %s191 = sadd.s32 %s189, %s190
      %s192 = smul.addr %s191, 4
      %s193 = scalar_lea.vmem %s3, %s192
      %p194 = scmp.lt.s32.totalorder %s18, 1
      %s195 = scalar_select %p194, %s18, 1
      %s196 = smul.addr %s195, 10
      %s197 = smul.addr %s196, 8
      %s198 = scalar_lea.vmem %s0, %s197
      %p199 = scmp.lt.s32.totalorder %s19, 0
      %s200 = scalar_select %p199, %s19, 0
      %s201 = smul.addr %s200, 2
      %s202 = smul.addr %s201, 4
      %s203 = scalar_lea.vmem %s1, %s202
      %p204 = scmp.lt.s32.totalorder %s18, 1
      %s205 = scalar_select %p204, %s18, 1
      %p206 = scmp.lt.s32.totalorder %s19, 0
      %s207 = scalar_select %p206, %s19, 0
      %s208 = smul.addr %s207, 10
      %s209 = smul.addr %s205, 10
      %s210 = sadd.s32 %s208, %s209
      %s211 = smul.addr %s210, 4
      %s212 = scalar_lea.vmem %s3, %s211
      %p213 = scmp.eq.s32.totalorder %s19, 0
      // Predicated region
      $region33: #{dense_block.3} parent=31 // pred_check
        %p214 = pneg %p213
      $region34: #{dense_block.3} parent=31 // pred_check_branch
        %216 = sbr.rel (%p214) target = $region36
      $region35: #{dense_block.3} parent=31 // pred_region
        %v217 = vld [vmem:[%s198] sm:$0xff]
        %v218 = vld [vmem:[%s198 + $0x8] sm:$0xff]
        %v219 = vld [vmem:[%s198 + $0x10] sm:$0xff]
        %v220 = vld [vmem:[%s198 + $0x18] sm:$0xff]
        %v221 = vld [vmem:[%s198 + $0x20] sm:$0xff]
        %v222 = vld [vmem:[%s198 + $0x28] sm:$0xff]
        %v223 = vld [vmem:[%s198 + $0x30] sm:$0xff]
        %v224 = vld [vmem:[%s198 + $0x38] sm:$0xff]
        %v225 = vld [vmem:[%s198 + $0x40] sm:$0xff]
        %v226 = vld [vmem:[%s198 + $0x48] sm:$0xff]
        %236 = vrot.lane.b32.xlu0 %v217, 111
        %v237 = vpop.permute.xlu0 %236
        %238 = vrot.lane.b32.xlu0 %v218, 111
        %v239 = vpop.permute.xlu0 %238
        %240 = vrot.lane.b32.xlu0 %v219, 111
        %v241 = vpop.permute.xlu0 %240
        %242 = vrot.lane.b32.xlu0 %v220, 111
        %v243 = vpop.permute.xlu0 %242
        %244 = vrot.lane.b32.xlu0 %v221, 111
        %v245 = vpop.permute.xlu0 %244
        %246 = vrot.lane.b32.xlu0 %v222, 111
        %v247 = vpop.permute.xlu0 %246
        %248 = vrot.lane.b32.xlu0 %v223, 111
        %v249 = vpop.permute.xlu0 %248
        %250 = vrot.lane.b32.xlu0 %v224, 111
        %v251 = vpop.permute.xlu0 %250
        %252 = vrot.lane.b32.xlu0 %v225, 111
        %v253 = vpop.permute.xlu0 %252
        %vm254 = vcmask 908288
        %v255 = vsel %vm254, %v237, %v239
        %v256 = vsel %vm254, %v239, %v241
        %v257 = vsel %vm254, %v241, %v243
        %v258 = vsel %vm254, %v243, %v245
        %v259 = vsel %vm254, %v245, %v247
        %v260 = vsel %vm254, %v247, %v249
        %v261 = vsel %vm254, %v249, %v251
        %v262 = vsel %vm254, %v251, %v253
        %271 = vst [vmem:[#allocation2] sm:$0xff] %v255
        %272 = vst [vmem:[#allocation2 + $0x8] sm:$0xff] %v256
        %273 = vst [vmem:[#allocation2 + $0x10] sm:$0xff] %v257
        %274 = vst [vmem:[#allocation2 + $0x18] sm:$0xff] %v258
        %275 = vst [vmem:[#allocation2 + $0x20] sm:$0xff] %v259
        %276 = vst [vmem:[#allocation2 + $0x28] sm:$0xff] %v260
        %277 = vst [vmem:[#allocation2 + $0x30] sm:$0xff] %v261
        %278 = vst [vmem:[#allocation2 + $0x38] sm:$0xff] %v262
        %279 = vrot.lane.b32.xlu0 %v217, 110
        %v280 = vpop.permute.xlu0 %279
        %281 = vrot.lane.b32.xlu0 %v218, 110
        %v282 = vpop.permute.xlu0 %281
        %283 = vrot.lane.b32.xlu0 %v219, 110
        %v284 = vpop.permute.xlu0 %283
        %285 = vrot.lane.b32.xlu0 %v220, 110
        %v286 = vpop.permute.xlu0 %285
        %287 = vrot.lane.b32.xlu0 %v221, 110
        %v288 = vpop.permute.xlu0 %287
        %289 = vrot.lane.b32.xlu0 %v222, 110
        %v290 = vpop.permute.xlu0 %289
        %291 = vrot.lane.b32.xlu0 %v223, 110
        %v292 = vpop.permute.xlu0 %291
        %293 = vrot.lane.b32.xlu0 %v224, 110
        %v294 = vpop.permute.xlu0 %293
        %295 = vrot.lane.b32.xlu0 %v225, 110
        %v296 = vpop.permute.xlu0 %295
        %vm297 = vcmask 900096
        %v298 = vsel %vm297, %v280, %v282
        %v299 = vsel %vm297, %v282, %v284
        %v300 = vsel %vm297, %v284, %v286
        %v301 = vsel %vm297, %v286, %v288
        %v302 = vsel %vm297, %v288, %v290
        %v303 = vsel %vm297, %v290, %v292
        %v304 = vsel %vm297, %v292, %v294
        %v305 = vsel %vm297, %v294, %v296
        %314 = vst [vmem:[#allocation2 + $0x40] sm:$0xff] %v298
        %315 = vst [vmem:[#allocation2 + $0x48] sm:$0xff] %v299
        %316 = vst [vmem:[#allocation2 + $0x50] sm:$0xff] %v300
        %317 = vst [vmem:[#allocation2 + $0x58] sm:$0xff] %v301
        %318 = vst [vmem:[#allocation2 + $0x60] sm:$0xff] %v302
        %319 = vst [vmem:[#allocation2 + $0x68] sm:$0xff] %v303
        %320 = vst [vmem:[#allocation2 + $0x70] sm:$0xff] %v304
        %321 = vst [vmem:[#allocation2 + $0x78] sm:$0xff] %v305
        %322 = vrot.lane.b32.xlu0 %v217, 109
        %v323 = vpop.permute.xlu0 %322
        %324 = vrot.lane.b32.xlu0 %v218, 109
        %v325 = vpop.permute.xlu0 %324
        %326 = vrot.lane.b32.xlu0 %v219, 109
        %v327 = vpop.permute.xlu0 %326
        %328 = vrot.lane.b32.xlu0 %v220, 109
        %v329 = vpop.permute.xlu0 %328
        %330 = vrot.lane.b32.xlu0 %v221, 109
        %v331 = vpop.permute.xlu0 %330
        %332 = vrot.lane.b32.xlu0 %v222, 109
        %v333 = vpop.permute.xlu0 %332
        %334 = vrot.lane.b32.xlu0 %v223, 109
        %v335 = vpop.permute.xlu0 %334
        %336 = vrot.lane.b32.xlu0 %v224, 109
        %v337 = vpop.permute.xlu0 %336
        %338 = vrot.lane.b32.xlu0 %v225, 109
        %v339 = vpop.permute.xlu0 %338
        %vm340 = vcmask 891904
        %v341 = vsel %vm340, %v323, %v325
        %v342 = vsel %vm340, %v325, %v327
        %v343 = vsel %vm340, %v327, %v329
        %v344 = vsel %vm340, %v329, %v331
        %v345 = vsel %vm340, %v331, %v333
        %v346 = vsel %vm340, %v333, %v335
        %v347 = vsel %vm340, %v335, %v337
        %v348 = vsel %vm340, %v337, %v339
        %357 = vst [vmem:[#allocation2 + $0x80] sm:$0xff] %v341
        %358 = vst [vmem:[#allocation2 + $0x88] sm:$0xff] %v342
        %359 = vst [vmem:[#allocation2 + $0x90] sm:$0xff] %v343
        %360 = vst [vmem:[#allocation2 + $0x98] sm:$0xff] %v344
        %361 = vst [vmem:[#allocation2 + $0xa0] sm:$0xff] %v345
        %362 = vst [vmem:[#allocation2 + $0xa8] sm:$0xff] %v346
        %363 = vst [vmem:[#allocation2 + $0xb0] sm:$0xff] %v347
        %364 = vst [vmem:[#allocation2 + $0xb8] sm:$0xff] %v348
        %365 = vrot.lane.b32.xlu0 %v217, 101
        %v366 = vpop.permute.xlu0 %365
        %367 = vrot.lane.b32.xlu0 %v218, 101
        %v368 = vpop.permute.xlu0 %367
        %369 = vrot.lane.b32.xlu0 %v219, 101
        %v370 = vpop.permute.xlu0 %369
        %371 = vrot.lane.b32.xlu0 %v220, 101
        %v372 = vpop.permute.xlu0 %371
        %373 = vrot.lane.b32.xlu0 %v221, 101
        %v374 = vpop.permute.xlu0 %373
        %375 = vrot.lane.b32.xlu0 %v222, 101
        %v376 = vpop.permute.xlu0 %375
        %377 = vrot.lane.b32.xlu0 %v223, 101
        %v378 = vpop.permute.xlu0 %377
        %379 = vrot.lane.b32.xlu0 %v224, 101
        %v380 = vpop.permute.xlu0 %379
        %381 = vrot.lane.b32.xlu0 %v225, 101
        %v382 = vpop.permute.xlu0 %381
        %vm383 = vcmask 826368
        %v384 = vsel %vm383, %v366, %v368
        %v385 = vsel %vm383, %v368, %v370
        %v386 = vsel %vm383, %v370, %v372
        %v387 = vsel %vm383, %v372, %v374
        %v388 = vsel %vm383, %v374, %v376
        %v389 = vsel %vm383, %v376, %v378
        %v390 = vsel %vm383, %v378, %v380
        %v391 = vsel %vm383, %v380, %v382
        %400 = vst [vmem:[#allocation2 + $0xc0] sm:$0xff] %v384
        %401 = vst [vmem:[#allocation2 + $0xc8] sm:$0xff] %v385
        %402 = vst [vmem:[#allocation2 + $0xd0] sm:$0xff] %v386
        %403 = vst [vmem:[#allocation2 + $0xd8] sm:$0xff] %v387
        %404 = vst [vmem:[#allocation2 + $0xe0] sm:$0xff] %v388
        %405 = vst [vmem:[#allocation2 + $0xe8] sm:$0xff] %v389
        %406 = vst [vmem:[#allocation2 + $0xf0] sm:$0xff] %v390
        %407 = vst [vmem:[#allocation2 + $0xf8] sm:$0xff] %v391
        %408 = vrot.lane.b32.xlu0 %v217, 100
        %v409 = vpop.permute.xlu0 %408
        %410 = vrot.lane.b32.xlu0 %v218, 100
        %v411 = vpop.permute.xlu0 %410
        %412 = vrot.lane.b32.xlu0 %v219, 100
        %v413 = vpop.permute.xlu0 %412
        %414 = vrot.lane.b32.xlu0 %v220, 100
        %v415 = vpop.permute.xlu0 %414
        %416 = vrot.lane.b32.xlu0 %v221, 100
        %v417 = vpop.permute.xlu0 %416
        %418 = vrot.lane.b32.xlu0 %v222, 100
        %v419 = vpop.permute.xlu0 %418
        %420 = vrot.lane.b32.xlu0 %v223, 100
        %v421 = vpop.permute.xlu0 %420
        %422 = vrot.lane.b32.xlu0 %v224, 100
        %v423 = vpop.permute.xlu0 %422
        %424 = vrot.lane.b32.xlu0 %v225, 100
        %v425 = vpop.permute.xlu0 %424
        %vm426 = vcmask 818176
        %v427 = vsel %vm426, %v409, %v411
        %v428 = vsel %vm426, %v411, %v413
        %v429 = vsel %vm426, %v413, %v415
        %v430 = vsel %vm426, %v415, %v417
        %v431 = vsel %vm426, %v417, %v419
        %v432 = vsel %vm426, %v419, %v421
        %v433 = vsel %vm426, %v421, %v423
        %v434 = vsel %vm426, %v423, %v425
        %443 = vst [vmem:[#allocation2 + $0x100] sm:$0xff] %v427
        %444 = vst [vmem:[#allocation2 + $0x108] sm:$0xff] %v428
        %445 = vst [vmem:[#allocation2 + $0x110] sm:$0xff] %v429
        %446 = vst [vmem:[#allocation2 + $0x118] sm:$0xff] %v430
        %447 = vst [vmem:[#allocation2 + $0x120] sm:$0xff] %v431
        %448 = vst [vmem:[#allocation2 + $0x128] sm:$0xff] %v432
        %449 = vst [vmem:[#allocation2 + $0x130] sm:$0xff] %v433
        %450 = vst [vmem:[#allocation2 + $0x138] sm:$0xff] %v434
        %451 = vrot.lane.b32.xlu0 %v217, 99
        %v452 = vpop.permute.xlu0 %451
        %453 = vrot.lane.b32.xlu0 %v218, 99
        %v454 = vpop.permute.xlu0 %453
        %455 = vrot.lane.b32.xlu0 %v219, 99
        %v456 = vpop.permute.xlu0 %455
        %457 = vrot.lane.b32.xlu0 %v220, 99
        %v458 = vpop.permute.xlu0 %457
        %459 = vrot.lane.b32.xlu0 %v221, 99
        %v460 = vpop.permute.xlu0 %459
        %461 = vrot.lane.b32.xlu0 %v222, 99
        %v462 = vpop.permute.xlu0 %461
        %463 = vrot.lane.b32.xlu0 %v223, 99
        %v464 = vpop.permute.xlu0 %463
        %465 = vrot.lane.b32.xlu0 %v224, 99
        %v466 = vpop.permute.xlu0 %465
        %467 = vrot.lane.b32.xlu0 %v225, 99
        %v468 = vpop.permute.xlu0 %467
        %vm469 = vcmask 809984
        %v470 = vsel %vm469, %v452, %v454
        %v471 = vsel %vm469, %v454, %v456
        %v472 = vsel %vm469, %v456, %v458
        %v473 = vsel %vm469, %v458, %v460
        %v474 = vsel %vm469, %v460, %v462
        %v475 = vsel %vm469, %v462, %v464
        %v476 = vsel %vm469, %v464, %v466
        %v477 = vsel %vm469, %v466, %v468
        %486 = vst [vmem:[#allocation2 + $0x140] sm:$0xff] %v470
        %487 = vst [vmem:[#allocation2 + $0x148] sm:$0xff] %v471
        %488 = vst [vmem:[#allocation2 + $0x150] sm:$0xff] %v472
        %489 = vst [vmem:[#allocation2 + $0x158] sm:$0xff] %v473
        %490 = vst [vmem:[#allocation2 + $0x160] sm:$0xff] %v474
        %491 = vst [vmem:[#allocation2 + $0x168] sm:$0xff] %v475
        %492 = vst [vmem:[#allocation2 + $0x170] sm:$0xff] %v476
        %493 = vst [vmem:[#allocation2 + $0x178] sm:$0xff] %v477
        %494 = vrot.lane.b32.xlu0 %v217, 91
        %v495 = vpop.permute.xlu0 %494
        %496 = vrot.lane.b32.xlu0 %v218, 91
        %v497 = vpop.permute.xlu0 %496
        %498 = vrot.lane.b32.xlu0 %v219, 91
        %v499 = vpop.permute.xlu0 %498
        %500 = vrot.lane.b32.xlu0 %v220, 91
        %v501 = vpop.permute.xlu0 %500
        %502 = vrot.lane.b32.xlu0 %v221, 91
        %v503 = vpop.permute.xlu0 %502
        %504 = vrot.lane.b32.xlu0 %v222, 91
        %v505 = vpop.permute.xlu0 %504
        %506 = vrot.lane.b32.xlu0 %v223, 91
        %v507 = vpop.permute.xlu0 %506
        %508 = vrot.lane.b32.xlu0 %v224, 91
        %v509 = vpop.permute.xlu0 %508
        %510 = vrot.lane.b32.xlu0 %v225, 91
        %v511 = vpop.permute.xlu0 %510
        %vm512 = vcmask 744448
        %v513 = vsel %vm512, %v495, %v497
        %v514 = vsel %vm512, %v497, %v499
        %v515 = vsel %vm512, %v499, %v501
        %v516 = vsel %vm512, %v501, %v503
        %v517 = vsel %vm512, %v503, %v505
        %v518 = vsel %vm512, %v505, %v507
        %v519 = vsel %vm512, %v507, %v509
        %v520 = vsel %vm512, %v509, %v511
        %529 = vst [vmem:[#allocation2 + $0x180] sm:$0xff] %v513
        %530 = vst [vmem:[#allocation2 + $0x188] sm:$0xff] %v514
        %531 = vst [vmem:[#allocation2 + $0x190] sm:$0xff] %v515
        %532 = vst [vmem:[#allocation2 + $0x198] sm:$0xff] %v516
        %533 = vst [vmem:[#allocation2 + $0x1a0] sm:$0xff] %v517
        %534 = vst [vmem:[#allocation2 + $0x1a8] sm:$0xff] %v518
        %535 = vst [vmem:[#allocation2 + $0x1b0] sm:$0xff] %v519
        %536 = vst [vmem:[#allocation2 + $0x1b8] sm:$0xff] %v520
        %537 = vrot.lane.b32.xlu0 %v217, 90
        %v538 = vpop.permute.xlu0 %537
        %539 = vrot.lane.b32.xlu0 %v218, 90
        %v540 = vpop.permute.xlu0 %539
        %541 = vrot.lane.b32.xlu0 %v219, 90
        %v542 = vpop.permute.xlu0 %541
        %543 = vrot.lane.b32.xlu0 %v220, 90
        %v544 = vpop.permute.xlu0 %543
        %545 = vrot.lane.b32.xlu0 %v221, 90
        %v546 = vpop.permute.xlu0 %545
        %547 = vrot.lane.b32.xlu0 %v222, 90
        %v548 = vpop.permute.xlu0 %547
        %549 = vrot.lane.b32.xlu0 %v223, 90
        %v550 = vpop.permute.xlu0 %549
        %551 = vrot.lane.b32.xlu0 %v224, 90
        %v552 = vpop.permute.xlu0 %551
        %553 = vrot.lane.b32.xlu0 %v225, 90
        %v554 = vpop.permute.xlu0 %553
        %vm555 = vcmask 736256
        %v556 = vsel %vm555, %v538, %v540
        %v557 = vsel %vm555, %v540, %v542
        %v558 = vsel %vm555, %v542, %v544
        %v559 = vsel %vm555, %v544, %v546
        %v560 = vsel %vm555, %v546, %v548
        %v561 = vsel %vm555, %v548, %v550
        %v562 = vsel %vm555, %v550, %v552
        %v563 = vsel %vm555, %v552, %v554
        %572 = vst [vmem:[#allocation2 + $0x1c0] sm:$0xff] %v556
        %573 = vst [vmem:[#allocation2 + $0x1c8] sm:$0xff] %v557
        %574 = vst [vmem:[#allocation2 + $0x1d0] sm:$0xff] %v558
        %575 = vst [vmem:[#allocation2 + $0x1d8] sm:$0xff] %v559
        %576 = vst [vmem:[#allocation2 + $0x1e0] sm:$0xff] %v560
        %577 = vst [vmem:[#allocation2 + $0x1e8] sm:$0xff] %v561
        %578 = vst [vmem:[#allocation2 + $0x1f0] sm:$0xff] %v562
        %579 = vst [vmem:[#allocation2 + $0x1f8] sm:$0xff] %v563
        %580 = vrot.lane.b32.xlu0 %v217, 89
        %v581 = vpop.permute.xlu0 %580
        %582 = vrot.lane.b32.xlu0 %v218, 89
        %v583 = vpop.permute.xlu0 %582
        %584 = vrot.lane.b32.xlu0 %v219, 89
        %v585 = vpop.permute.xlu0 %584
        %586 = vrot.lane.b32.xlu0 %v220, 89
        %v587 = vpop.permute.xlu0 %586
        %588 = vrot.lane.b32.xlu0 %v221, 89
        %v589 = vpop.permute.xlu0 %588
        %590 = vrot.lane.b32.xlu0 %v222, 89
        %v591 = vpop.permute.xlu0 %590
        %592 = vrot.lane.b32.xlu0 %v223, 89
        %v593 = vpop.permute.xlu0 %592
        %594 = vrot.lane.b32.xlu0 %v224, 89
        %v595 = vpop.permute.xlu0 %594
        %596 = vrot.lane.b32.xlu0 %v225, 89
        %v597 = vpop.permute.xlu0 %596
        %vm598 = vcmask 728064
        %v599 = vsel %vm598, %v581, %v583
        %v600 = vsel %vm598, %v583, %v585
        %v601 = vsel %vm598, %v585, %v587
        %v602 = vsel %vm598, %v587, %v589
        %v603 = vsel %vm598, %v589, %v591
        %v604 = vsel %vm598, %v591, %v593
        %v605 = vsel %vm598, %v593, %v595
        %v606 = vsel %vm598, %v595, %v597
        %615 = vst [vmem:[#allocation2 + $0x200] sm:$0xff] %v599
        %616 = vst [vmem:[#allocation2 + $0x208] sm:$0xff] %v600
        %617 = vst [vmem:[#allocation2 + $0x210] sm:$0xff] %v601
        %618 = vst [vmem:[#allocation2 + $0x218] sm:$0xff] %v602
        %619 = vst [vmem:[#allocation2 + $0x220] sm:$0xff] %v603
        %620 = vst [vmem:[#allocation2 + $0x228] sm:$0xff] %v604
        %621 = vst [vmem:[#allocation2 + $0x230] sm:$0xff] %v605
        %622 = vst [vmem:[#allocation2 + $0x238] sm:$0xff] %v606
        %623 = vrot.lane.b32.xlu0 %v217, 11
        %v624 = vpop.permute.xlu0 %623
        %625 = vrot.lane.b32.xlu0 %v218, 11
        %v626 = vpop.permute.xlu0 %625
        %627 = vrot.lane.b32.xlu0 %v219, 11
        %v628 = vpop.permute.xlu0 %627
        %629 = vrot.lane.b32.xlu0 %v220, 11
        %v630 = vpop.permute.xlu0 %629
        %631 = vrot.lane.b32.xlu0 %v221, 11
        %v632 = vpop.permute.xlu0 %631
        %633 = vrot.lane.b32.xlu0 %v222, 11
        %v634 = vpop.permute.xlu0 %633
        %635 = vrot.lane.b32.xlu0 %v223, 11
        %v636 = vpop.permute.xlu0 %635
        %637 = vrot.lane.b32.xlu0 %v224, 11
        %v638 = vpop.permute.xlu0 %637
        %639 = vrot.lane.b32.xlu0 %v225, 11
        %v640 = vpop.permute.xlu0 %639
        %vm641 = vcmask 89088
        %v642 = vsel %vm641, %v624, %v626
        %v643 = vsel %vm641, %v626, %v628
        %v644 = vsel %vm641, %v628, %v630
        %v645 = vsel %vm641, %v630, %v632
        %v646 = vsel %vm641, %v632, %v634
        %v647 = vsel %vm641, %v634, %v636
        %v648 = vsel %vm641, %v636, %v638
        %v649 = vsel %vm641, %v638, %v640
        %658 = vst [vmem:[#allocation2 + $0x240] sm:$0xff] %v642
        %659 = vst [vmem:[#allocation2 + $0x248] sm:$0xff] %v643
        %660 = vst [vmem:[#allocation2 + $0x250] sm:$0xff] %v644
        %661 = vst [vmem:[#allocation2 + $0x258] sm:$0xff] %v645
        %662 = vst [vmem:[#allocation2 + $0x260] sm:$0xff] %v646
        %663 = vst [vmem:[#allocation2 + $0x268] sm:$0xff] %v647
        %664 = vst [vmem:[#allocation2 + $0x270] sm:$0xff] %v648
        %665 = vst [vmem:[#allocation2 + $0x278] sm:$0xff] %v649
        %666 = vrot.lane.b32.xlu0 %v217, 10
        %v667 = vpop.permute.xlu0 %666
        %668 = vrot.lane.b32.xlu0 %v218, 10
        %v669 = vpop.permute.xlu0 %668
        %670 = vrot.lane.b32.xlu0 %v219, 10
        %v671 = vpop.permute.xlu0 %670
        %672 = vrot.lane.b32.xlu0 %v220, 10
        %v673 = vpop.permute.xlu0 %672
        %674 = vrot.lane.b32.xlu0 %v221, 10
        %v675 = vpop.permute.xlu0 %674
        %676 = vrot.lane.b32.xlu0 %v222, 10
        %v677 = vpop.permute.xlu0 %676
        %678 = vrot.lane.b32.xlu0 %v223, 10
        %v679 = vpop.permute.xlu0 %678
        %680 = vrot.lane.b32.xlu0 %v224, 10
        %v681 = vpop.permute.xlu0 %680
        %682 = vrot.lane.b32.xlu0 %v225, 10
        %v683 = vpop.permute.xlu0 %682
        %vm684 = vcmask 80896
        %v685 = vsel %vm684, %v667, %v669
        %v686 = vsel %vm684, %v669, %v671
        %v687 = vsel %vm684, %v671, %v673
        %v688 = vsel %vm684, %v673, %v675
        %v689 = vsel %vm684, %v675, %v677
        %v690 = vsel %vm684, %v677, %v679
        %v691 = vsel %vm684, %v679, %v681
        %v692 = vsel %vm684, %v681, %v683
        %701 = vst [vmem:[#allocation2 + $0x280] sm:$0xff] %v685
        %702 = vst [vmem:[#allocation2 + $0x288] sm:$0xff] %v686
        %703 = vst [vmem:[#allocation2 + $0x290] sm:$0xff] %v687
        %704 = vst [vmem:[#allocation2 + $0x298] sm:$0xff] %v688
        %705 = vst [vmem:[#allocation2 + $0x2a0] sm:$0xff] %v689
        %706 = vst [vmem:[#allocation2 + $0x2a8] sm:$0xff] %v690
        %707 = vst [vmem:[#allocation2 + $0x2b0] sm:$0xff] %v691
        %708 = vst [vmem:[#allocation2 + $0x2b8] sm:$0xff] %v692
        %709 = vrot.lane.b32.xlu0 %v217, 9
        %v710 = vpop.permute.xlu0 %709
        %711 = vrot.lane.b32.xlu0 %v218, 9
        %v712 = vpop.permute.xlu0 %711
        %713 = vrot.lane.b32.xlu0 %v219, 9
        %v714 = vpop.permute.xlu0 %713
        %715 = vrot.lane.b32.xlu0 %v220, 9
        %v716 = vpop.permute.xlu0 %715
        %717 = vrot.lane.b32.xlu0 %v221, 9
        %v718 = vpop.permute.xlu0 %717
        %719 = vrot.lane.b32.xlu0 %v222, 9
        %v720 = vpop.permute.xlu0 %719
        %721 = vrot.lane.b32.xlu0 %v223, 9
        %v722 = vpop.permute.xlu0 %721
        %723 = vrot.lane.b32.xlu0 %v224, 9
        %v724 = vpop.permute.xlu0 %723
        %725 = vrot.lane.b32.xlu0 %v225, 9
        %v726 = vpop.permute.xlu0 %725
        %vm727 = vcmask 72704
        %v728 = vsel %vm727, %v710, %v712
        %v729 = vsel %vm727, %v712, %v714
        %v730 = vsel %vm727, %v714, %v716
        %v731 = vsel %vm727, %v716, %v718
        %v732 = vsel %vm727, %v718, %v720
        %v733 = vsel %vm727, %v720, %v722
        %v734 = vsel %vm727, %v722, %v724
        %v735 = vsel %vm727, %v724, %v726
        %744 = vst [vmem:[#allocation2 + $0x2c0] sm:$0xff] %v728
        %745 = vst [vmem:[#allocation2 + $0x2c8] sm:$0xff] %v729
        %746 = vst [vmem:[#allocation2 + $0x2d0] sm:$0xff] %v730
        %747 = vst [vmem:[#allocation2 + $0x2d8] sm:$0xff] %v731
        %748 = vst [vmem:[#allocation2 + $0x2e0] sm:$0xff] %v732
        %749 = vst [vmem:[#allocation2 + $0x2e8] sm:$0xff] %v733
        %750 = vst [vmem:[#allocation2 + $0x2f0] sm:$0xff] %v734
        %751 = vst [vmem:[#allocation2 + $0x2f8] sm:$0xff] %v735
        %752 = vrot.lane.b32.xlu0 %v217, 1
        %v753 = vpop.permute.xlu0 %752
        %754 = vrot.lane.b32.xlu0 %v218, 1
        %v755 = vpop.permute.xlu0 %754
        %756 = vrot.lane.b32.xlu0 %v219, 1
        %v757 = vpop.permute.xlu0 %756
        %758 = vrot.lane.b32.xlu0 %v220, 1
        %v759 = vpop.permute.xlu0 %758
        %760 = vrot.lane.b32.xlu0 %v221, 1
        %v761 = vpop.permute.xlu0 %760
        %762 = vrot.lane.b32.xlu0 %v222, 1
        %v763 = vpop.permute.xlu0 %762
        %764 = vrot.lane.b32.xlu0 %v223, 1
        %v765 = vpop.permute.xlu0 %764
        %766 = vrot.lane.b32.xlu0 %v224, 1
        %v767 = vpop.permute.xlu0 %766
        %768 = vrot.lane.b32.xlu0 %v225, 1
        %v769 = vpop.permute.xlu0 %768
        %vm770 = vcmask 7168
        %v771 = vsel %vm770, %v753, %v755
        %v772 = vsel %vm770, %v755, %v757
        %v773 = vsel %vm770, %v757, %v759
        %v774 = vsel %vm770, %v759, %v761
        %v775 = vsel %vm770, %v761, %v763
        %v776 = vsel %vm770, %v763, %v765
        %v777 = vsel %vm770, %v765, %v767
        %v778 = vsel %vm770, %v767, %v769
        %787 = vst [vmem:[#allocation2 + $0x300] sm:$0xff] %v771
        %788 = vst [vmem:[#allocation2 + $0x308] sm:$0xff] %v772
        %789 = vst [vmem:[#allocation2 + $0x310] sm:$0xff] %v773
        %790 = vst [vmem:[#allocation2 + $0x318] sm:$0xff] %v774
        %791 = vst [vmem:[#allocation2 + $0x320] sm:$0xff] %v775
        %792 = vst [vmem:[#allocation2 + $0x328] sm:$0xff] %v776
        %793 = vst [vmem:[#allocation2 + $0x330] sm:$0xff] %v777
        %794 = vst [vmem:[#allocation2 + $0x338] sm:$0xff] %v778
        %795 = vst [vmem:[#allocation2 + $0x340] sm:$0xff] %v218
        %796 = vst [vmem:[#allocation2 + $0x348] sm:$0xff] %v219
        %797 = vst [vmem:[#allocation2 + $0x350] sm:$0xff] %v220
        %798 = vst [vmem:[#allocation2 + $0x358] sm:$0xff] %v221
        %799 = vst [vmem:[#allocation2 + $0x360] sm:$0xff] %v222
        %800 = vst [vmem:[#allocation2 + $0x368] sm:$0xff] %v223
        %801 = vst [vmem:[#allocation2 + $0x370] sm:$0xff] %v224
        %802 = vst [vmem:[#allocation2 + $0x378] sm:$0xff] %v225
        %804 = vrot.lane.b32.xlu0 %v218, 127
        %v805 = vpop.permute.xlu0 %804
        %806 = vrot.lane.b32.xlu0 %v219, 127
        %v807 = vpop.permute.xlu0 %806
        %808 = vrot.lane.b32.xlu0 %v220, 127
        %v809 = vpop.permute.xlu0 %808
        %810 = vrot.lane.b32.xlu0 %v221, 127
        %v811 = vpop.permute.xlu0 %810
        %812 = vrot.lane.b32.xlu0 %v222, 127
        %v813 = vpop.permute.xlu0 %812
        %814 = vrot.lane.b32.xlu0 %v223, 127
        %v815 = vpop.permute.xlu0 %814
        %816 = vrot.lane.b32.xlu0 %v224, 127
        %v817 = vpop.permute.xlu0 %816
        %818 = vrot.lane.b32.xlu0 %v225, 127
        %v819 = vpop.permute.xlu0 %818
        %820 = vrot.lane.b32.xlu0 %v226, 127
        %v821 = vpop.permute.xlu0 %820
        %vm822 = vcmask 1039360
        %v823 = vsel %vm822, %v805, %v807
        %v824 = vsel %vm822, %v807, %v809
        %v825 = vsel %vm822, %v809, %v811
        %v826 = vsel %vm822, %v811, %v813
        %v827 = vsel %vm822, %v813, %v815
        %v828 = vsel %vm822, %v815, %v817
        %v829 = vsel %vm822, %v817, %v819
        %v830 = vsel %vm822, %v819, %v821
        %839 = vst [vmem:[#allocation2 + $0x380] sm:$0xff] %v823
        %840 = vst [vmem:[#allocation2 + $0x388] sm:$0xff] %v824
        %841 = vst [vmem:[#allocation2 + $0x390] sm:$0xff] %v825
        %842 = vst [vmem:[#allocation2 + $0x398] sm:$0xff] %v826
        %843 = vst [vmem:[#allocation2 + $0x3a0] sm:$0xff] %v827
        %844 = vst [vmem:[#allocation2 + $0x3a8] sm:$0xff] %v828
        %845 = vst [vmem:[#allocation2 + $0x3b0] sm:$0xff] %v829
        %846 = vst [vmem:[#allocation2 + $0x3b8] sm:$0xff] %v830
        %847 = vrot.lane.b32.xlu0 %v218, 119
        %v848 = vpop.permute.xlu0 %847
        %849 = vrot.lane.b32.xlu0 %v219, 119
        %v850 = vpop.permute.xlu0 %849
        %851 = vrot.lane.b32.xlu0 %v220, 119
        %v852 = vpop.permute.xlu0 %851
        %853 = vrot.lane.b32.xlu0 %v221, 119
        %v854 = vpop.permute.xlu0 %853
        %855 = vrot.lane.b32.xlu0 %v222, 119
        %v856 = vpop.permute.xlu0 %855
        %857 = vrot.lane.b32.xlu0 %v223, 119
        %v858 = vpop.permute.xlu0 %857
        %859 = vrot.lane.b32.xlu0 %v224, 119
        %v860 = vpop.permute.xlu0 %859
        %861 = vrot.lane.b32.xlu0 %v225, 119
        %v862 = vpop.permute.xlu0 %861
        %863 = vrot.lane.b32.xlu0 %v226, 119
        %v864 = vpop.permute.xlu0 %863
        %vm865 = vcmask 973824
        %v866 = vsel %vm865, %v848, %v850
        %v867 = vsel %vm865, %v850, %v852
        %v868 = vsel %vm865, %v852, %v854
        %v869 = vsel %vm865, %v854, %v856
        %v870 = vsel %vm865, %v856, %v858
        %v871 = vsel %vm865, %v858, %v860
        %v872 = vsel %vm865, %v860, %v862
        %v873 = vsel %vm865, %v862, %v864
        %882 = vst [vmem:[#allocation2 + $0x3c0] sm:$0xff] %v866
        %883 = vst [vmem:[#allocation2 + $0x3c8] sm:$0xff] %v867
        %884 = vst [vmem:[#allocation2 + $0x3d0] sm:$0xff] %v868
        %885 = vst [vmem:[#allocation2 + $0x3d8] sm:$0xff] %v869
        %886 = vst [vmem:[#allocation2 + $0x3e0] sm:$0xff] %v870
        %887 = vst [vmem:[#allocation2 + $0x3e8] sm:$0xff] %v871
        %888 = vst [vmem:[#allocation2 + $0x3f0] sm:$0xff] %v872
        %889 = vst [vmem:[#allocation2 + $0x3f8] sm:$0xff] %v873
        %890 = vrot.lane.b32.xlu0 %v218, 118
        %v891 = vpop.permute.xlu0 %890
        %892 = vrot.lane.b32.xlu0 %v219, 118
        %v893 = vpop.permute.xlu0 %892
        %894 = vrot.lane.b32.xlu0 %v220, 118
        %v895 = vpop.permute.xlu0 %894
        %896 = vrot.lane.b32.xlu0 %v221, 118
        %v897 = vpop.permute.xlu0 %896
        %898 = vrot.lane.b32.xlu0 %v222, 118
        %v899 = vpop.permute.xlu0 %898
        %900 = vrot.lane.b32.xlu0 %v223, 118
        %v901 = vpop.permute.xlu0 %900
        %902 = vrot.lane.b32.xlu0 %v224, 118
        %v903 = vpop.permute.xlu0 %902
        %904 = vrot.lane.b32.xlu0 %v225, 118
        %v905 = vpop.permute.xlu0 %904
        %906 = vrot.lane.b32.xlu0 %v226, 118
        %v907 = vpop.permute.xlu0 %906
        %vm908 = vcmask 965632
        %v909 = vsel %vm908, %v891, %v893
        %v910 = vsel %vm908, %v893, %v895
        %v911 = vsel %vm908, %v895, %v897
        %v912 = vsel %vm908, %v897, %v899
        %v913 = vsel %vm908, %v899, %v901
        %v914 = vsel %vm908, %v901, %v903
        %v915 = vsel %vm908, %v903, %v905
        %v916 = vsel %vm908, %v905, %v907
        %925 = vst [vmem:[#allocation2 + $0x400] sm:$0xff] %v909
        %926 = vst [vmem:[#allocation2 + $0x408] sm:$0xff] %v910
        %927 = vst [vmem:[#allocation2 + $0x410] sm:$0xff] %v911
        %928 = vst [vmem:[#allocation2 + $0x418] sm:$0xff] %v912
        %929 = vst [vmem:[#allocation2 + $0x420] sm:$0xff] %v913
        %930 = vst [vmem:[#allocation2 + $0x428] sm:$0xff] %v914
        %931 = vst [vmem:[#allocation2 + $0x430] sm:$0xff] %v915
        %932 = vst [vmem:[#allocation2 + $0x438] sm:$0xff] %v916
        %933 = vrot.lane.b32.xlu0 %v218, 117
        %v934 = vpop.permute.xlu0 %933
        %935 = vrot.lane.b32.xlu0 %v219, 117
        %v936 = vpop.permute.xlu0 %935
        %937 = vrot.lane.b32.xlu0 %v220, 117
        %v938 = vpop.permute.xlu0 %937
        %939 = vrot.lane.b32.xlu0 %v221, 117
        %v940 = vpop.permute.xlu0 %939
        %941 = vrot.lane.b32.xlu0 %v222, 117
        %v942 = vpop.permute.xlu0 %941
        %943 = vrot.lane.b32.xlu0 %v223, 117
        %v944 = vpop.permute.xlu0 %943
        %945 = vrot.lane.b32.xlu0 %v224, 117
        %v946 = vpop.permute.xlu0 %945
        %947 = vrot.lane.b32.xlu0 %v225, 117
        %v948 = vpop.permute.xlu0 %947
        %949 = vrot.lane.b32.xlu0 %v226, 117
        %v950 = vpop.permute.xlu0 %949
        %vm951 = vcmask 957440
        %v952 = vsel %vm951, %v934, %v936
        %v953 = vsel %vm951, %v936, %v938
        %v954 = vsel %vm951, %v938, %v940
        %v955 = vsel %vm951, %v940, %v942
        %v956 = vsel %vm951, %v942, %v944
        %v957 = vsel %vm951, %v944, %v946
        %v958 = vsel %vm951, %v946, %v948
        %v959 = vsel %vm951, %v948, %v950
        %968 = vst [vmem:[#allocation2 + $0x440] sm:$0xff] %v952
        %969 = vst [vmem:[#allocation2 + $0x448] sm:$0xff] %v953
        %970 = vst [vmem:[#allocation2 + $0x450] sm:$0xff] %v954
        %971 = vst [vmem:[#allocation2 + $0x458] sm:$0xff] %v955
        %972 = vst [vmem:[#allocation2 + $0x460] sm:$0xff] %v956
        %973 = vst [vmem:[#allocation2 + $0x468] sm:$0xff] %v957
        %974 = vst [vmem:[#allocation2 + $0x470] sm:$0xff] %v958
        %975 = vst [vmem:[#allocation2 + $0x478] sm:$0xff] %v959
        %976 = vrot.lane.b32.xlu0 %v218, 39
        %v977 = vpop.permute.xlu0 %976
        %978 = vrot.lane.b32.xlu0 %v219, 39
        %v979 = vpop.permute.xlu0 %978
        %980 = vrot.lane.b32.xlu0 %v220, 39
        %v981 = vpop.permute.xlu0 %980
        %982 = vrot.lane.b32.xlu0 %v221, 39
        %v983 = vpop.permute.xlu0 %982
        %984 = vrot.lane.b32.xlu0 %v222, 39
        %v985 = vpop.permute.xlu0 %984
        %986 = vrot.lane.b32.xlu0 %v223, 39
        %v987 = vpop.permute.xlu0 %986
        %988 = vrot.lane.b32.xlu0 %v224, 39
        %v989 = vpop.permute.xlu0 %988
        %990 = vrot.lane.b32.xlu0 %v225, 39
        %v991 = vpop.permute.xlu0 %990
        %992 = vrot.lane.b32.xlu0 %v226, 39
        %v993 = vpop.permute.xlu0 %992
        %vm994 = vcmask 318464
        %v995 = vsel %vm994, %v977, %v979
        %v996 = vsel %vm994, %v979, %v981
        %v997 = vsel %vm994, %v981, %v983
        %v998 = vsel %vm994, %v983, %v985
        %v999 = vsel %vm994, %v985, %v987
        %v1000 = vsel %vm994, %v987, %v989
        %v1001 = vsel %vm994, %v989, %v991
        %v1002 = vsel %vm994, %v991, %v993
        %1011 = vst [vmem:[#allocation2 + $0x480] sm:$0xff] %v995
        %1012 = vst [vmem:[#allocation2 + $0x488] sm:$0xff] %v996
        %1013 = vst [vmem:[#allocation2 + $0x490] sm:$0xff] %v997
        %1014 = vst [vmem:[#allocation2 + $0x498] sm:$0xff] %v998
        %1015 = vst [vmem:[#allocation2 + $0x4a0] sm:$0xff] %v999
        %1016 = vst [vmem:[#allocation2 + $0x4a8] sm:$0xff] %v1000
        %1017 = vst [vmem:[#allocation2 + $0x4b0] sm:$0xff] %v1001
        %1018 = vst [vmem:[#allocation2 + $0x4b8] sm:$0xff] %v1002
        %1019 = vrot.lane.b32.xlu0 %v218, 38
        %v1020 = vpop.permute.xlu0 %1019
        %1021 = vrot.lane.b32.xlu0 %v219, 38
        %v1022 = vpop.permute.xlu0 %1021
        %1023 = vrot.lane.b32.xlu0 %v220, 38
        %v1024 = vpop.permute.xlu0 %1023
        %1025 = vrot.lane.b32.xlu0 %v221, 38
        %v1026 = vpop.permute.xlu0 %1025
        %1027 = vrot.lane.b32.xlu0 %v222, 38
        %v1028 = vpop.permute.xlu0 %1027
        %1029 = vrot.lane.b32.xlu0 %v223, 38
        %v1030 = vpop.permute.xlu0 %1029
        %1031 = vrot.lane.b32.xlu0 %v224, 38
        %v1032 = vpop.permute.xlu0 %1031
        %1033 = vrot.lane.b32.xlu0 %v225, 38
        %v1034 = vpop.permute.xlu0 %1033
        %1035 = vrot.lane.b32.xlu0 %v226, 38
        %v1036 = vpop.permute.xlu0 %1035
        %vm1037 = vcmask 310272
        %v1038 = vsel %vm1037, %v1020, %v1022
        %v1039 = vsel %vm1037, %v1022, %v1024
        %v1040 = vsel %vm1037, %v1024, %v1026
        %v1041 = vsel %vm1037, %v1026, %v1028
        %v1042 = vsel %vm1037, %v1028, %v1030
        %v1043 = vsel %vm1037, %v1030, %v1032
        %v1044 = vsel %vm1037, %v1032, %v1034
        %v1045 = vsel %vm1037, %v1034, %v1036
        %1054 = vst [vmem:[#allocation2 + $0x4c0] sm:$0xff] %v1038
        %1055 = vst [vmem:[#allocation2 + $0x4c8] sm:$0xff] %v1039
        %1056 = vst [vmem:[#allocation2 + $0x4d0] sm:$0xff] %v1040
        %1057 = vst [vmem:[#allocation2 + $0x4d8] sm:$0xff] %v1041
        %1058 = vst [vmem:[#allocation2 + $0x4e0] sm:$0xff] %v1042
        %1059 = vst [vmem:[#allocation2 + $0x4e8] sm:$0xff] %v1043
        %1060 = vst [vmem:[#allocation2 + $0x4f0] sm:$0xff] %v1044
        %1061 = vst [vmem:[#allocation2 + $0x4f8] sm:$0xff] %v1045
        %1062 = vrot.lane.b32.xlu0 %v218, 37
        %v1063 = vpop.permute.xlu0 %1062
        %1064 = vrot.lane.b32.xlu0 %v219, 37
        %v1065 = vpop.permute.xlu0 %1064
        %1066 = vrot.lane.b32.xlu0 %v220, 37
        %v1067 = vpop.permute.xlu0 %1066
        %1068 = vrot.lane.b32.xlu0 %v221, 37
        %v1069 = vpop.permute.xlu0 %1068
        %1070 = vrot.lane.b32.xlu0 %v222, 37
        %v1071 = vpop.permute.xlu0 %1070
        %1072 = vrot.lane.b32.xlu0 %v223, 37
        %v1073 = vpop.permute.xlu0 %1072
        %1074 = vrot.lane.b32.xlu0 %v224, 37
        %v1075 = vpop.permute.xlu0 %1074
        %1076 = vrot.lane.b32.xlu0 %v225, 37
        %v1077 = vpop.permute.xlu0 %1076
        %1078 = vrot.lane.b32.xlu0 %v226, 37
        %v1079 = vpop.permute.xlu0 %1078
        %vm1080 = vcmask 302080
        %v1081 = vsel %vm1080, %v1063, %v1065
        %v1082 = vsel %vm1080, %v1065, %v1067
        %v1083 = vsel %vm1080, %v1067, %v1069
        %v1084 = vsel %vm1080, %v1069, %v1071
        %v1085 = vsel %vm1080, %v1071, %v1073
        %v1086 = vsel %vm1080, %v1073, %v1075
        %v1087 = vsel %vm1080, %v1075, %v1077
        %v1088 = vsel %vm1080, %v1077, %v1079
        %1097 = vst [vmem:[#allocation2 + $0x500] sm:$0xff] %v1081
        %1098 = vst [vmem:[#allocation2 + $0x508] sm:$0xff] %v1082
        %1099 = vst [vmem:[#allocation2 + $0x510] sm:$0xff] %v1083
        %1100 = vst [vmem:[#allocation2 + $0x518] sm:$0xff] %v1084
        %1101 = vst [vmem:[#allocation2 + $0x520] sm:$0xff] %v1085
        %1102 = vst [vmem:[#allocation2 + $0x528] sm:$0xff] %v1086
        %1103 = vst [vmem:[#allocation2 + $0x530] sm:$0xff] %v1087
        %1104 = vst [vmem:[#allocation2 + $0x538] sm:$0xff] %v1088
        %1105 = vrot.lane.b32.xlu0 %v218, 29
        %v1106 = vpop.permute.xlu0 %1105
        %1107 = vrot.lane.b32.xlu0 %v219, 29
        %v1108 = vpop.permute.xlu0 %1107
        %1109 = vrot.lane.b32.xlu0 %v220, 29
        %v1110 = vpop.permute.xlu0 %1109
        %1111 = vrot.lane.b32.xlu0 %v221, 29
        %v1112 = vpop.permute.xlu0 %1111
        %1113 = vrot.lane.b32.xlu0 %v222, 29
        %v1114 = vpop.permute.xlu0 %1113
        %1115 = vrot.lane.b32.xlu0 %v223, 29
        %v1116 = vpop.permute.xlu0 %1115
        %1117 = vrot.lane.b32.xlu0 %v224, 29
        %v1118 = vpop.permute.xlu0 %1117
        %1119 = vrot.lane.b32.xlu0 %v225, 29
        %v1120 = vpop.permute.xlu0 %1119
        %1121 = vrot.lane.b32.xlu0 %v226, 29
        %v1122 = vpop.permute.xlu0 %1121
        %vm1123 = vcmask 236544
        %v1124 = vsel %vm1123, %v1106, %v1108
        %v1125 = vsel %vm1123, %v1108, %v1110
        %v1126 = vsel %vm1123, %v1110, %v1112
        %v1127 = vsel %vm1123, %v1112, %v1114
        %v1128 = vsel %vm1123, %v1114, %v1116
        %v1129 = vsel %vm1123, %v1116, %v1118
        %v1130 = vsel %vm1123, %v1118, %v1120
        %v1131 = vsel %vm1123, %v1120, %v1122
        %1140 = vst [vmem:[#allocation2 + $0x540] sm:$0xff] %v1124
        %1141 = vst [vmem:[#allocation2 + $0x548] sm:$0xff] %v1125
        %1142 = vst [vmem:[#allocation2 + $0x550] sm:$0xff] %v1126
        %1143 = vst [vmem:[#allocation2 + $0x558] sm:$0xff] %v1127
        %1144 = vst [vmem:[#allocation2 + $0x560] sm:$0xff] %v1128
        %1145 = vst [vmem:[#allocation2 + $0x568] sm:$0xff] %v1129
        %1146 = vst [vmem:[#allocation2 + $0x570] sm:$0xff] %v1130
        %1147 = vst [vmem:[#allocation2 + $0x578] sm:$0xff] %v1131
        %1148 = vrot.lane.b32.xlu0 %v218, 28
        %v1149 = vpop.permute.xlu0 %1148
        %1150 = vrot.lane.b32.xlu0 %v219, 28
        %v1151 = vpop.permute.xlu0 %1150
        %1152 = vrot.lane.b32.xlu0 %v220, 28
        %v1153 = vpop.permute.xlu0 %1152
        %1154 = vrot.lane.b32.xlu0 %v221, 28
        %v1155 = vpop.permute.xlu0 %1154
        %1156 = vrot.lane.b32.xlu0 %v222, 28
        %v1157 = vpop.permute.xlu0 %1156
        %1158 = vrot.lane.b32.xlu0 %v223, 28
        %v1159 = vpop.permute.xlu0 %1158
        %1160 = vrot.lane.b32.xlu0 %v224, 28
        %v1161 = vpop.permute.xlu0 %1160
        %1162 = vrot.lane.b32.xlu0 %v225, 28
        %v1163 = vpop.permute.xlu0 %1162
        %1164 = vrot.lane.b32.xlu0 %v226, 28
        %v1165 = vpop.permute.xlu0 %1164
        %vm1166 = vcmask 228352
        %v1167 = vsel %vm1166, %v1149, %v1151
        %v1168 = vsel %vm1166, %v1151, %v1153
        %v1169 = vsel %vm1166, %v1153, %v1155
        %v1170 = vsel %vm1166, %v1155, %v1157
        %v1171 = vsel %vm1166, %v1157, %v1159
        %v1172 = vsel %vm1166, %v1159, %v1161
        %v1173 = vsel %vm1166, %v1161, %v1163
        %v1174 = vsel %vm1166, %v1163, %v1165
        %1183 = vst [vmem:[#allocation2 + $0x580] sm:$0xff] %v1167
        %1184 = vst [vmem:[#allocation2 + $0x588] sm:$0xff] %v1168
        %1185 = vst [vmem:[#allocation2 + $0x590] sm:$0xff] %v1169
        %1186 = vst [vmem:[#allocation2 + $0x598] sm:$0xff] %v1170
        %1187 = vst [vmem:[#allocation2 + $0x5a0] sm:$0xff] %v1171
        %1188 = vst [vmem:[#allocation2 + $0x5a8] sm:$0xff] %v1172
        %1189 = vst [vmem:[#allocation2 + $0x5b0] sm:$0xff] %v1173
        %1190 = vst [vmem:[#allocation2 + $0x5b8] sm:$0xff] %v1174
        %1191 = vrot.lane.b32.xlu0 %v218, 27
        %v1192 = vpop.permute.xlu0 %1191
        %1193 = vrot.lane.b32.xlu0 %v219, 27
        %v1194 = vpop.permute.xlu0 %1193
        %1195 = vrot.lane.b32.xlu0 %v220, 27
        %v1196 = vpop.permute.xlu0 %1195
        %1197 = vrot.lane.b32.xlu0 %v221, 27
        %v1198 = vpop.permute.xlu0 %1197
        %1199 = vrot.lane.b32.xlu0 %v222, 27
        %v1200 = vpop.permute.xlu0 %1199
        %1201 = vrot.lane.b32.xlu0 %v223, 27
        %v1202 = vpop.permute.xlu0 %1201
        %1203 = vrot.lane.b32.xlu0 %v224, 27
        %v1204 = vpop.permute.xlu0 %1203
        %1205 = vrot.lane.b32.xlu0 %v225, 27
        %v1206 = vpop.permute.xlu0 %1205
        %1207 = vrot.lane.b32.xlu0 %v226, 27
        %v1208 = vpop.permute.xlu0 %1207
        %vm1209 = vcmask 220160
        %v1210 = vsel %vm1209, %v1192, %v1194
        %v1211 = vsel %vm1209, %v1194, %v1196
        %v1212 = vsel %vm1209, %v1196, %v1198
        %v1213 = vsel %vm1209, %v1198, %v1200
        %v1214 = vsel %vm1209, %v1200, %v1202
        %v1215 = vsel %vm1209, %v1202, %v1204
        %v1216 = vsel %vm1209, %v1204, %v1206
        %v1217 = vsel %vm1209, %v1206, %v1208
        %1226 = vst [vmem:[#allocation2 + $0x5c0] sm:$0xff] %v1210
        %1227 = vst [vmem:[#allocation2 + $0x5c8] sm:$0xff] %v1211
        %1228 = vst [vmem:[#allocation2 + $0x5d0] sm:$0xff] %v1212
        %1229 = vst [vmem:[#allocation2 + $0x5d8] sm:$0xff] %v1213
        %1230 = vst [vmem:[#allocation2 + $0x5e0] sm:$0xff] %v1214
        %1231 = vst [vmem:[#allocation2 + $0x5e8] sm:$0xff] %v1215
        %1232 = vst [vmem:[#allocation2 + $0x5f0] sm:$0xff] %v1216
        %1233 = vst [vmem:[#allocation2 + $0x5f8] sm:$0xff] %v1217
        %1234 = vrot.lane.b32.xlu0 %v218, 19
        %v1235 = vpop.permute.xlu0 %1234
        %1236 = vrot.lane.b32.xlu0 %v219, 19
        %v1237 = vpop.permute.xlu0 %1236
        %1238 = vrot.lane.b32.xlu0 %v220, 19
        %v1239 = vpop.permute.xlu0 %1238
        %1240 = vrot.lane.b32.xlu0 %v221, 19
        %v1241 = vpop.permute.xlu0 %1240
        %1242 = vrot.lane.b32.xlu0 %v222, 19
        %v1243 = vpop.permute.xlu0 %1242
        %1244 = vrot.lane.b32.xlu0 %v223, 19
        %v1245 = vpop.permute.xlu0 %1244
        %1246 = vrot.lane.b32.xlu0 %v224, 19
        %v1247 = vpop.permute.xlu0 %1246
        %1248 = vrot.lane.b32.xlu0 %v225, 19
        %v1249 = vpop.permute.xlu0 %1248
        %1250 = vrot.lane.b32.xlu0 %v226, 19
        %v1251 = vpop.permute.xlu0 %1250
        %vm1252 = vcmask 154624
        %v1253 = vsel %vm1252, %v1235, %v1237
        %v1254 = vsel %vm1252, %v1237, %v1239
        %v1255 = vsel %vm1252, %v1239, %v1241
        %v1256 = vsel %vm1252, %v1241, %v1243
        %v1257 = vsel %vm1252, %v1243, %v1245
        %v1258 = vsel %vm1252, %v1245, %v1247
        %v1259 = vsel %vm1252, %v1247, %v1249
        %v1260 = vsel %vm1252, %v1249, %v1251
        %1269 = vst [vmem:[#allocation2 + $0x600] sm:$0xff] %v1253
        %1270 = vst [vmem:[#allocation2 + $0x608] sm:$0xff] %v1254
        %1271 = vst [vmem:[#allocation2 + $0x610] sm:$0xff] %v1255
        %1272 = vst [vmem:[#allocation2 + $0x618] sm:$0xff] %v1256
        %1273 = vst [vmem:[#allocation2 + $0x620] sm:$0xff] %v1257
        %1274 = vst [vmem:[#allocation2 + $0x628] sm:$0xff] %v1258
        %1275 = vst [vmem:[#allocation2 + $0x630] sm:$0xff] %v1259
        %1276 = vst [vmem:[#allocation2 + $0x638] sm:$0xff] %v1260
        %1277 = vrot.lane.b32.xlu0 %v218, 18
        %v1278 = vpop.permute.xlu0 %1277
        %1279 = vrot.lane.b32.xlu0 %v219, 18
        %v1280 = vpop.permute.xlu0 %1279
        %1281 = vrot.lane.b32.xlu0 %v220, 18
        %v1282 = vpop.permute.xlu0 %1281
        %1283 = vrot.lane.b32.xlu0 %v221, 18
        %v1284 = vpop.permute.xlu0 %1283
        %1285 = vrot.lane.b32.xlu0 %v222, 18
        %v1286 = vpop.permute.xlu0 %1285
        %1287 = vrot.lane.b32.xlu0 %v223, 18
        %v1288 = vpop.permute.xlu0 %1287
        %1289 = vrot.lane.b32.xlu0 %v224, 18
        %v1290 = vpop.permute.xlu0 %1289
        %1291 = vrot.lane.b32.xlu0 %v225, 18
        %v1292 = vpop.permute.xlu0 %1291
        %1293 = vrot.lane.b32.xlu0 %v226, 18
        %v1294 = vpop.permute.xlu0 %1293
        %vm1295 = vcmask 146432
        %v1296 = vsel %vm1295, %v1278, %v1280
        %v1297 = vsel %vm1295, %v1280, %v1282
        %v1298 = vsel %vm1295, %v1282, %v1284
        %v1299 = vsel %vm1295, %v1284, %v1286
        %v1300 = vsel %vm1295, %v1286, %v1288
        %v1301 = vsel %vm1295, %v1288, %v1290
        %v1302 = vsel %vm1295, %v1290, %v1292
        %v1303 = vsel %vm1295, %v1292, %v1294
        %1312 = vst [vmem:[#allocation2 + $0x640] sm:$0xff] %v1296
        %1313 = vst [vmem:[#allocation2 + $0x648] sm:$0xff] %v1297
        %1314 = vst [vmem:[#allocation2 + $0x650] sm:$0xff] %v1298
        %1315 = vst [vmem:[#allocation2 + $0x658] sm:$0xff] %v1299
        %1316 = vst [vmem:[#allocation2 + $0x660] sm:$0xff] %v1300
        %1317 = vst [vmem:[#allocation2 + $0x668] sm:$0xff] %v1301
        %1318 = vst [vmem:[#allocation2 + $0x670] sm:$0xff] %v1302
        %1319 = vst [vmem:[#allocation2 + $0x678] sm:$0xff] %v1303
        %1320 = vrot.lane.b32.xlu0 %v218, 17
        %v1321 = vpop.permute.xlu0 %1320
        %1322 = vrot.lane.b32.xlu0 %v219, 17
        %v1323 = vpop.permute.xlu0 %1322
        %1324 = vrot.lane.b32.xlu0 %v220, 17
        %v1325 = vpop.permute.xlu0 %1324
        %1326 = vrot.lane.b32.xlu0 %v221, 17
        %v1327 = vpop.permute.xlu0 %1326
        %1328 = vrot.lane.b32.xlu0 %v222, 17
        %v1329 = vpop.permute.xlu0 %1328
        %1330 = vrot.lane.b32.xlu0 %v223, 17
        %v1331 = vpop.permute.xlu0 %1330
        %1332 = vrot.lane.b32.xlu0 %v224, 17
        %v1333 = vpop.permute.xlu0 %1332
        %1334 = vrot.lane.b32.xlu0 %v225, 17
        %v1335 = vpop.permute.xlu0 %1334
        %1336 = vrot.lane.b32.xlu0 %v226, 17
        %v1337 = vpop.permute.xlu0 %1336
        %vm1338 = vcmask 138240
        %v1339 = vsel %vm1338, %v1321, %v1323
        %v1340 = vsel %vm1338, %v1323, %v1325
        %v1341 = vsel %vm1338, %v1325, %v1327
        %v1342 = vsel %vm1338, %v1327, %v1329
        %v1343 = vsel %vm1338, %v1329, %v1331
        %v1344 = vsel %vm1338, %v1331, %v1333
        %v1345 = vsel %vm1338, %v1333, %v1335
        %v1346 = vsel %vm1338, %v1335, %v1337
        %1355 = vst [vmem:[#allocation2 + $0x680] sm:$0xff] %v1339
        %1356 = vst [vmem:[#allocation2 + $0x688] sm:$0xff] %v1340
        %1357 = vst [vmem:[#allocation2 + $0x690] sm:$0xff] %v1341
        %1358 = vst [vmem:[#allocation2 + $0x698] sm:$0xff] %v1342
        %1359 = vst [vmem:[#allocation2 + $0x6a0] sm:$0xff] %v1343
        %1360 = vst [vmem:[#allocation2 + $0x6a8] sm:$0xff] %v1344
        %1361 = vst [vmem:[#allocation2 + $0x6b0] sm:$0xff] %v1345
        %1362 = vst [vmem:[#allocation2 + $0x6b8] sm:$0xff] %v1346
      $region36: #{dense_block.3} parent=31 // pred_fallthru
        _
      %v1363 = vld [vmem:[%s203] sm:$0xff]
      %v1364 = vld [vmem:[#allocation2] sm:$0xff]
      %v1365 = vld [vmem:[#allocation2 + $0x8] sm:$0xff]
      %v1366 = vld [vmem:[#allocation2 + $0x10] sm:$0xff]
      %v1367 = vld [vmem:[#allocation2 + $0x18] sm:$0xff]
      %v1368 = vld [vmem:[#allocation2 + $0x20] sm:$0xff]
      %v1369 = vld [vmem:[#allocation2 + $0x28] sm:$0xff]
      %v1370 = vld [vmem:[#allocation2 + $0x30] sm:$0xff]
      %v1371 = vld [vmem:[#allocation2 + $0x38] sm:$0xff]
      %v1372 = vld [vmem:[#allocation2 + $0x40] sm:$0xff]
      %v1373 = vld [vmem:[#allocation2 + $0x48] sm:$0xff]
      %v1374 = vld [vmem:[#allocation2 + $0x50] sm:$0xff]
      %v1375 = vld [vmem:[#allocation2 + $0x58] sm:$0xff]
      %v1376 = vld [vmem:[#allocation2 + $0x60] sm:$0xff]
      %v1377 = vld [vmem:[#allocation2 + $0x68] sm:$0xff]
      %v1378 = vld [vmem:[#allocation2 + $0x70] sm:$0xff]
      %v1379 = vld [vmem:[#allocation2 + $0x78] sm:$0xff]
      %v1380 = vld [vmem:[#allocation2 + $0x80] sm:$0xff]
      %v1381 = vld [vmem:[#allocation2 + $0x88] sm:$0xff]
      %v1382 = vld [vmem:[#allocation2 + $0x90] sm:$0xff]
      %v1383 = vld [vmem:[#allocation2 + $0x98] sm:$0xff]
      %v1384 = vld [vmem:[#allocation2 + $0xa0] sm:$0xff]
      %v1385 = vld [vmem:[#allocation2 + $0xa8] sm:$0xff]
      %v1386 = vld [vmem:[#allocation2 + $0xb0] sm:$0xff]
      %v1387 = vld [vmem:[#allocation2 + $0xb8] sm:$0xff]
      %v1388 = vld [vmem:[#allocation2 + $0xc0] sm:$0xff]
      %v1389 = vld [vmem:[#allocation2 + $0xc8] sm:$0xff]
      %v1390 = vld [vmem:[#allocation2 + $0xd0] sm:$0xff]
      %v1391 = vld [vmem:[#allocation2 + $0xd8] sm:$0xff]
      %v1392 = vld [vmem:[#allocation2 + $0xe0] sm:$0xff]
      %v1393 = vld [vmem:[#allocation2 + $0xe8] sm:$0xff]
      %v1394 = vld [vmem:[#allocation2 + $0xf0] sm:$0xff]
      %v1395 = vld [vmem:[#allocation2 + $0xf8] sm:$0xff]
      %v1396 = vld [vmem:[#allocation2 + $0x100] sm:$0xff]
      %v1397 = vld [vmem:[#allocation2 + $0x108] sm:$0xff]
      %v1398 = vld [vmem:[#allocation2 + $0x110] sm:$0xff]
      %v1399 = vld [vmem:[#allocation2 + $0x118] sm:$0xff]
      %v1400 = vld [vmem:[#allocation2 + $0x120] sm:$0xff]
      %v1401 = vld [vmem:[#allocation2 + $0x128] sm:$0xff]
      %v1402 = vld [vmem:[#allocation2 + $0x130] sm:$0xff]
      %v1403 = vld [vmem:[#allocation2 + $0x138] sm:$0xff]
      %v1404 = vld [vmem:[#allocation2 + $0x140] sm:$0xff]
      %v1405 = vld [vmem:[#allocation2 + $0x148] sm:$0xff]
      %v1406 = vld [vmem:[#allocation2 + $0x150] sm:$0xff]
      %v1407 = vld [vmem:[#allocation2 + $0x158] sm:$0xff]
      %v1408 = vld [vmem:[#allocation2 + $0x160] sm:$0xff]
      %v1409 = vld [vmem:[#allocation2 + $0x168] sm:$0xff]
      %v1410 = vld [vmem:[#allocation2 + $0x170] sm:$0xff]
      %v1411 = vld [vmem:[#allocation2 + $0x178] sm:$0xff]
      %v1412 = vld [vmem:[#allocation2 + $0x180] sm:$0xff]
      %v1413 = vld [vmem:[#allocation2 + $0x188] sm:$0xff]
      %v1414 = vld [vmem:[#allocation2 + $0x190] sm:$0xff]
      %v1415 = vld [vmem:[#allocation2 + $0x198] sm:$0xff]
      %v1416 = vld [vmem:[#allocation2 + $0x1a0] sm:$0xff]
      %v1417 = vld [vmem:[#allocation2 + $0x1a8] sm:$0xff]
      %v1418 = vld [vmem:[#allocation2 + $0x1b0] sm:$0xff]
      %v1419 = vld [vmem:[#allocation2 + $0x1b8] sm:$0xff]
      %v1420 = vld [vmem:[#allocation2 + $0x1c0] sm:$0xff]
      %v1421 = vld [vmem:[#allocation2 + $0x1c8] sm:$0xff]
      %v1422 = vld [vmem:[#allocation2 + $0x1d0] sm:$0xff]
      %v1423 = vld [vmem:[#allocation2 + $0x1d8] sm:$0xff]
      %v1424 = vld [vmem:[#allocation2 + $0x1e0] sm:$0xff]
      %v1425 = vld [vmem:[#allocation2 + $0x1e8] sm:$0xff]
      %v1426 = vld [vmem:[#allocation2 + $0x1f0] sm:$0xff]
      %v1427 = vld [vmem:[#allocation2 + $0x1f8] sm:$0xff]
      %v1428 = vld [vmem:[#allocation2 + $0x200] sm:$0xff]
      %v1429 = vld [vmem:[#allocation2 + $0x208] sm:$0xff]
      %v1430 = vld [vmem:[#allocation2 + $0x210] sm:$0xff]
      %v1431 = vld [vmem:[#allocation2 + $0x218] sm:$0xff]
      %v1432 = vld [vmem:[#allocation2 + $0x220] sm:$0xff]
      %v1433 = vld [vmem:[#allocation2 + $0x228] sm:$0xff]
      %v1434 = vld [vmem:[#allocation2 + $0x230] sm:$0xff]
      %v1435 = vld [vmem:[#allocation2 + $0x238] sm:$0xff]
      %v1436 = vld [vmem:[#allocation2 + $0x240] sm:$0xff]
      %v1437 = vld [vmem:[#allocation2 + $0x248] sm:$0xff]
      %v1438 = vld [vmem:[#allocation2 + $0x250] sm:$0xff]
      %v1439 = vld [vmem:[#allocation2 + $0x258] sm:$0xff]
      %v1440 = vld [vmem:[#allocation2 + $0x260] sm:$0xff]
      %v1441 = vld [vmem:[#allocation2 + $0x268] sm:$0xff]
      %v1442 = vld [vmem:[#allocation2 + $0x270] sm:$0xff]
      %v1443 = vld [vmem:[#allocation2 + $0x278] sm:$0xff]
      %v1444 = vld [vmem:[#allocation2 + $0x280] sm:$0xff]
      %v1445 = vld [vmem:[#allocation2 + $0x288] sm:$0xff]
      %v1446 = vld [vmem:[#allocation2 + $0x290] sm:$0xff]
      %v1447 = vld [vmem:[#allocation2 + $0x298] sm:$0xff]
      %v1448 = vld [vmem:[#allocation2 + $0x2a0] sm:$0xff]
      %v1449 = vld [vmem:[#allocation2 + $0x2a8] sm:$0xff]
      %v1450 = vld [vmem:[#allocation2 + $0x2b0] sm:$0xff]
      %v1451 = vld [vmem:[#allocation2 + $0x2b8] sm:$0xff]
      %v1452 = vld [vmem:[#allocation2 + $0x2c0] sm:$0xff]
      %v1453 = vld [vmem:[#allocation2 + $0x2c8] sm:$0xff]
      %v1454 = vld [vmem:[#allocation2 + $0x2d0] sm:$0xff]
      %v1455 = vld [vmem:[#allocation2 + $0x2d8] sm:$0xff]
      %v1456 = vld [vmem:[#allocation2 + $0x2e0] sm:$0xff]
      %v1457 = vld [vmem:[#allocation2 + $0x2e8] sm:$0xff]
      %v1458 = vld [vmem:[#allocation2 + $0x2f0] sm:$0xff]
      %v1459 = vld [vmem:[#allocation2 + $0x2f8] sm:$0xff]
      %v1460 = vld [vmem:[#allocation2 + $0x300] sm:$0xff]
      %v1461 = vld [vmem:[#allocation2 + $0x308] sm:$0xff]
      %v1462 = vld [vmem:[#allocation2 + $0x310] sm:$0xff]
      %v1463 = vld [vmem:[#allocation2 + $0x318] sm:$0xff]
      %v1464 = vld [vmem:[#allocation2 + $0x320] sm:$0xff]
      %v1465 = vld [vmem:[#allocation2 + $0x328] sm:$0xff]
      %v1466 = vld [vmem:[#allocation2 + $0x330] sm:$0xff]
      %v1467 = vld [vmem:[#allocation2 + $0x338] sm:$0xff]
      %v1468 = vld [vmem:[#allocation2 + $0x340] sm:$0xff]
      %v1469 = vld [vmem:[#allocation2 + $0x348] sm:$0xff]
      %v1470 = vld [vmem:[#allocation2 + $0x350] sm:$0xff]
      %v1471 = vld [vmem:[#allocation2 + $0x358] sm:$0xff]
      %v1472 = vld [vmem:[#allocation2 + $0x360] sm:$0xff]
      %v1473 = vld [vmem:[#allocation2 + $0x368] sm:$0xff]
      %v1474 = vld [vmem:[#allocation2 + $0x370] sm:$0xff]
      %v1475 = vld [vmem:[#allocation2 + $0x378] sm:$0xff]
      %v1476 = vld [vmem:[#allocation2 + $0x380] sm:$0xff]
      %v1477 = vld [vmem:[#allocation2 + $0x388] sm:$0xff]
      %v1478 = vld [vmem:[#allocation2 + $0x390] sm:$0xff]
      %v1479 = vld [vmem:[#allocation2 + $0x398] sm:$0xff]
      %v1480 = vld [vmem:[#allocation2 + $0x3a0] sm:$0xff]
      %v1481 = vld [vmem:[#allocation2 + $0x3a8] sm:$0xff]
      %v1482 = vld [vmem:[#allocation2 + $0x3b0] sm:$0xff]
      %v1483 = vld [vmem:[#allocation2 + $0x3b8] sm:$0xff]
      %v1484 = vld [vmem:[#allocation2 + $0x3c0] sm:$0xff]
      %v1485 = vld [vmem:[#allocation2 + $0x3c8] sm:$0xff]
      %v1486 = vld [vmem:[#allocation2 + $0x3d0] sm:$0xff]
      %v1487 = vld [vmem:[#allocation2 + $0x3d8] sm:$0xff]
      %v1488 = vld [vmem:[#allocation2 + $0x3e0] sm:$0xff]
      %v1489 = vld [vmem:[#allocation2 + $0x3e8] sm:$0xff]
      %v1490 = vld [vmem:[#allocation2 + $0x3f0] sm:$0xff]
      %v1491 = vld [vmem:[#allocation2 + $0x3f8] sm:$0xff]
      %v1492 = vld [vmem:[#allocation2 + $0x400] sm:$0xff]
      %v1493 = vld [vmem:[#allocation2 + $0x408] sm:$0xff]
      %v1494 = vld [vmem:[#allocation2 + $0x410] sm:$0xff]
      %v1495 = vld [vmem:[#allocation2 + $0x418] sm:$0xff]
      %v1496 = vld [vmem:[#allocation2 + $0x420] sm:$0xff]
      %v1497 = vld [vmem:[#allocation2 + $0x428] sm:$0xff]
      %v1498 = vld [vmem:[#allocation2 + $0x430] sm:$0xff]
      %v1499 = vld [vmem:[#allocation2 + $0x438] sm:$0xff]
      %v1500 = vld [vmem:[#allocation2 + $0x440] sm:$0xff]
      %v1501 = vld [vmem:[#allocation2 + $0x448] sm:$0xff]
      %v1502 = vld [vmem:[#allocation2 + $0x450] sm:$0xff]
      %v1503 = vld [vmem:[#allocation2 + $0x458] sm:$0xff]
      %v1504 = vld [vmem:[#allocation2 + $0x460] sm:$0xff]
      %v1505 = vld [vmem:[#allocation2 + $0x468] sm:$0xff]
      %v1506 = vld [vmem:[#allocation2 + $0x470] sm:$0xff]
      %v1507 = vld [vmem:[#allocation2 + $0x478] sm:$0xff]
      %v1508 = vld [vmem:[#allocation2 + $0x480] sm:$0xff]
      %v1509 = vld [vmem:[#allocation2 + $0x488] sm:$0xff]
      %v1510 = vld [vmem:[#allocation2 + $0x490] sm:$0xff]
      %v1511 = vld [vmem:[#allocation2 + $0x498] sm:$0xff]
      %v1512 = vld [vmem:[#allocation2 + $0x4a0] sm:$0xff]
      %v1513 = vld [vmem:[#allocation2 + $0x4a8] sm:$0xff]
      %v1514 = vld [vmem:[#allocation2 + $0x4b0] sm:$0xff]
      %v1515 = vld [vmem:[#allocation2 + $0x4b8] sm:$0xff]
      %v1516 = vld [vmem:[#allocation2 + $0x4c0] sm:$0xff]
      %v1517 = vld [vmem:[#allocation2 + $0x4c8] sm:$0xff]
      %v1518 = vld [vmem:[#allocation2 + $0x4d0] sm:$0xff]
      %v1519 = vld [vmem:[#allocation2 + $0x4d8] sm:$0xff]
      %v1520 = vld [vmem:[#allocation2 + $0x4e0] sm:$0xff]
      %v1521 = vld [vmem:[#allocation2 + $0x4e8] sm:$0xff]
      %v1522 = vld [vmem:[#allocation2 + $0x4f0] sm:$0xff]
      %v1523 = vld [vmem:[#allocation2 + $0x4f8] sm:$0xff]
      %v1524 = vld [vmem:[#allocation2 + $0x500] sm:$0xff]
      %v1525 = vld [vmem:[#allocation2 + $0x508] sm:$0xff]
      %v1526 = vld [vmem:[#allocation2 + $0x510] sm:$0xff]
      %v1527 = vld [vmem:[#allocation2 + $0x518] sm:$0xff]
      %v1528 = vld [vmem:[#allocation2 + $0x520] sm:$0xff]
      %v1529 = vld [vmem:[#allocation2 + $0x528] sm:$0xff]
      %v1530 = vld [vmem:[#allocation2 + $0x530] sm:$0xff]
      %v1531 = vld [vmem:[#allocation2 + $0x538] sm:$0xff]
      %v1532 = vld [vmem:[#allocation2 + $0x540] sm:$0xff]
      %v1533 = vld [vmem:[#allocation2 + $0x548] sm:$0xff]
      %v1534 = vld [vmem:[#allocation2 + $0x550] sm:$0xff]
      %v1535 = vld [vmem:[#allocation2 + $0x558] sm:$0xff]
      %v1536 = vld [vmem:[#allocation2 + $0x560] sm:$0xff]
      %v1537 = vld [vmem:[#allocation2 + $0x568] sm:$0xff]
      %v1538 = vld [vmem:[#allocation2 + $0x570] sm:$0xff]
      %v1539 = vld [vmem:[#allocation2 + $0x578] sm:$0xff]
      %v1540 = vld [vmem:[#allocation2 + $0x580] sm:$0xff]
      %v1541 = vld [vmem:[#allocation2 + $0x588] sm:$0xff]
      %v1542 = vld [vmem:[#allocation2 + $0x590] sm:$0xff]
      %v1543 = vld [vmem:[#allocation2 + $0x598] sm:$0xff]
      %v1544 = vld [vmem:[#allocation2 + $0x5a0] sm:$0xff]
      %v1545 = vld [vmem:[#allocation2 + $0x5a8] sm:$0xff]
      %v1546 = vld [vmem:[#allocation2 + $0x5b0] sm:$0xff]
      %v1547 = vld [vmem:[#allocation2 + $0x5b8] sm:$0xff]
      %v1548 = vld [vmem:[#allocation2 + $0x5c0] sm:$0xff]
      %v1549 = vld [vmem:[#allocation2 + $0x5c8] sm:$0xff]
      %v1550 = vld [vmem:[#allocation2 + $0x5d0] sm:$0xff]
      %v1551 = vld [vmem:[#allocation2 + $0x5d8] sm:$0xff]
      %v1552 = vld [vmem:[#allocation2 + $0x5e0] sm:$0xff]
      %v1553 = vld [vmem:[#allocation2 + $0x5e8] sm:$0xff]
      %v1554 = vld [vmem:[#allocation2 + $0x5f0] sm:$0xff]
      %v1555 = vld [vmem:[#allocation2 + $0x5f8] sm:$0xff]
      %v1556 = vld [vmem:[#allocation2 + $0x600] sm:$0xff]
      %v1557 = vld [vmem:[#allocation2 + $0x608] sm:$0xff]
      %v1558 = vld [vmem:[#allocation2 + $0x610] sm:$0xff]
      %v1559 = vld [vmem:[#allocation2 + $0x618] sm:$0xff]
      %v1560 = vld [vmem:[#allocation2 + $0x620] sm:$0xff]
      %v1561 = vld [vmem:[#allocation2 + $0x628] sm:$0xff]
      %v1562 = vld [vmem:[#allocation2 + $0x630] sm:$0xff]
      %v1563 = vld [vmem:[#allocation2 + $0x638] sm:$0xff]
      %v1564 = vld [vmem:[#allocation2 + $0x640] sm:$0xff]
      %v1565 = vld [vmem:[#allocation2 + $0x648] sm:$0xff]
      %v1566 = vld [vmem:[#allocation2 + $0x650] sm:$0xff]
      %v1567 = vld [vmem:[#allocation2 + $0x658] sm:$0xff]
      %v1568 = vld [vmem:[#allocation2 + $0x660] sm:$0xff]
      %v1569 = vld [vmem:[#allocation2 + $0x668] sm:$0xff]
      %v1570 = vld [vmem:[#allocation2 + $0x670] sm:$0xff]
      %v1571 = vld [vmem:[#allocation2 + $0x678] sm:$0xff]
      %v1572 = vld [vmem:[#allocation2 + $0x680] sm:$0xff]
      %v1573 = vld [vmem:[#allocation2 + $0x688] sm:$0xff]
      %v1574 = vld [vmem:[#allocation2 + $0x690] sm:$0xff]
      %v1575 = vld [vmem:[#allocation2 + $0x698] sm:$0xff]
      %v1576 = vld [vmem:[#allocation2 + $0x6a0] sm:$0xff]
      %v1577 = vld [vmem:[#allocation2 + $0x6a8] sm:$0xff]
      %v1578 = vld [vmem:[#allocation2 + $0x6b0] sm:$0xff]
      %v1579 = vld [vmem:[#allocation2 + $0x6b8] sm:$0xff]
      %v1581 = vcombine.high %v1363, %v1363
      %vm1582 = vcmask 719872
      %v1583 = vsel %vm1582, %v1581, 0
      %1585 = vmatprep.subr.mxu0 %v1365
      %1586 = vmatpush1.msra.mxu0 %v1364
      %1587 = vmatprep.subr.mxu0 %v1373
      %1588 = vmatpush1.msra.mxu0 %v1372
      %1589 = vmatprep.subr.mxu0 %v1381
      %1590 = vmatpush1.msra.mxu0 %v1380
      %1591 = vmatprep.subr.mxu0 %v1389
      %1592 = vmatpush1.msra.mxu0 %v1388
      %1593 = vmatprep.subr.mxu0 %v1397
      %1594 = vmatpush1.msra.mxu0 %v1396
      %1595 = vmatprep.subr.mxu0 %v1405
      %1596 = vmatpush1.msra.mxu0 %v1404
      %1597 = vmatprep.subr.mxu0 %v1413
      %1598 = vmatpush1.msra.mxu0 %v1412
      %1599 = vmatprep.subr.mxu0 %v1421
      %1600 = vmatpush1.msra.mxu0 %v1420
      %1601 = vmatprep.subr.mxu0 %v1429
      %1602 = vmatpush1.msra.mxu0 %v1428
      %1603 = vmatprep.subr.mxu0 %v1437
      %1604 = vmatpush1.msra.mxu0 %v1436
      %1605 = vmatprep.subr.mxu0 %v1445
      %1606 = vmatpush1.msra.mxu0 %v1444
      %1607 = vmatprep.subr.mxu0 %v1453
      %1608 = vmatpush1.msra.mxu0 %v1452
      %1609 = vmatprep.subr.mxu0 %v1461
      %1610 = vmatpush1.msra.mxu0 %v1460
      %1611 = vmatprep.subr.mxu0 %v1469
      %1612 = vmatpush1.msra.mxu0 %v1468
      %1613 = vmatprep.subr.mxu0 %v1477
      %1614 = vmatpush1.msra.mxu0 %v1476
      %1615 = vmatprep.subr.mxu0 %v1485
      %1616 = vmatpush1.msra.mxu0 %v1484
      %1617 = vmatprep.subr.mxu0 %v1493
      %1618 = vmatpush1.msra.mxu0 %v1492
      %1619 = vmatprep.subr.mxu0 %v1501
      %1620 = vmatpush1.msra.mxu0 %v1500
      %1621 = vmatprep.subr.mxu0 %v1509
      %1622 = vmatpush1.msra.mxu0 %v1508
      %1623 = vmatprep.subr.mxu0 %v1517
      %1624 = vmatpush1.msra.mxu0 %v1516
      %1625 = vmatprep.subr.mxu0 %v1525
      %1626 = vmatpush1.msra.mxu0 %v1524
      %1627 = vmatprep.subr.mxu0 %v1533
      %1628 = vmatpush1.msra.mxu0 %v1532
      %1629 = vmatprep.subr.mxu0 %v1541
      %1630 = vmatpush1.msra.mxu0 %v1540
      %1631 = vmatprep.subr.mxu0 %v1549
      %1632 = vmatpush1.msra.mxu0 %v1548
      %1633 = vmatprep.subr.mxu0 %v1557
      %1634 = vmatpush1.msra.mxu0 %v1556
      %1635 = vmatprep.subr.mxu0 %v1565
      %1636 = vmatpush1.msra.mxu0 %v1564
      %1637 = vmatprep.subr.mxu0 %v1573
      %1638 = vmatpush1.msra.mxu0 %v1572
      %1639 = vmatprep.subr.mxu0 0.0
      %1640 = vmatpush1.msra.mxu0 0.0
      %1641 = vmatprep.subr.mxu0 0.0
      %1642 = vmatpush1.msra.mxu0 0.0
      %1643 = vmatprep.subr.mxu0 0.0
      %1644 = vmatpush1.msra.mxu0 0.0
      %1645 = vmatprep.subr.mxu0 0.0
      %1646 = vmatpush1.msra.mxu0 0.0
      %1647 = vmatprep.subr.mxu0 0.0
      %1648 = vmatpush1.msra.mxu0 0.0
      %1649 = vmatprep.mubr.f32.mxu0 %v1583
      %1650 = vmatmul.mubr.f32.gmra.mrb[0].mxu0 %v1363
      %v1651 = vpop.f32.mrb[0].mxu0
      %v1652 = vadd.f32 0.0, %v1651
      %v1653 = vpop.f32.mrb[0].mxu0
      %v1654 = vadd.f32 0.0, %v1653
      %1655 = vdwg.mxu0
      %1656 = vmatprep.subr.mxu0 %v1367
      %1657 = vmatpush1.msra.mxu0 %v1366
      %1658 = vmatprep.subr.mxu0 %v1375
      %1659 = vmatpush1.msra.mxu0 %v1374
      %1660 = vmatprep.subr.mxu0 %v1383
      %1661 = vmatpush1.msra.mxu0 %v1382
      %1662 = vmatprep.subr.mxu0 %v1391
      %1663 = vmatpush1.msra.mxu0 %v1390
      %1664 = vmatprep.subr.mxu0 %v1399
      %1665 = vmatpush1.msra.mxu0 %v1398
      %1666 = vmatprep.subr.mxu0 %v1407
      %1667 = vmatpush1.msra.mxu0 %v1406
      %1668 = vmatprep.subr.mxu0 %v1415
      %1669 = vmatpush1.msra.mxu0 %v1414
      %1670 = vmatprep.subr.mxu0 %v1423
      %1671 = vmatpush1.msra.mxu0 %v1422
      %1672 = vmatprep.subr.mxu0 %v1431
      %1673 = vmatpush1.msra.mxu0 %v1430
      %1674 = vmatprep.subr.mxu0 %v1439
      %1675 = vmatpush1.msra.mxu0 %v1438
      %1676 = vmatprep.subr.mxu0 %v1447
      %1677 = vmatpush1.msra.mxu0 %v1446
      %1678 = vmatprep.subr.mxu0 %v1455
      %1679 = vmatpush1.msra.mxu0 %v1454
      %1680 = vmatprep.subr.mxu0 %v1463
      %1681 = vmatpush1.msra.mxu0 %v1462
      %1682 = vmatprep.subr.mxu0 %v1471
      %1683 = vmatpush1.msra.mxu0 %v1470
      %1684 = vmatprep.subr.mxu0 %v1479
      %1685 = vmatpush1.msra.mxu0 %v1478
      %1686 = vmatprep.subr.mxu0 %v1487
      %1687 = vmatpush1.msra.mxu0 %v1486
      %1688 = vmatprep.subr.mxu0 %v1495
      %1689 = vmatpush1.msra.mxu0 %v1494
      %1690 = vmatprep.subr.mxu0 %v1503
      %1691 = vmatpush1.msra.mxu0 %v1502
      %1692 = vmatprep.subr.mxu0 %v1511
      %1693 = vmatpush1.msra.mxu0 %v1510
      %1694 = vmatprep.subr.mxu0 %v1519
      %1695 = vmatpush1.msra.mxu0 %v1518
      %1696 = vmatprep.subr.mxu0 %v1527
      %1697 = vmatpush1.msra.mxu0 %v1526
      %1698 = vmatprep.subr.mxu0 %v1535
      %1699 = vmatpush1.msra.mxu0 %v1534
      %1700 = vmatprep.subr.mxu0 %v1543
      %1701 = vmatpush1.msra.mxu0 %v1542
      %1702 = vmatprep.subr.mxu0 %v1551
      %1703 = vmatpush1.msra.mxu0 %v1550
      %1704 = vmatprep.subr.mxu0 %v1559
      %1705 = vmatpush1.msra.mxu0 %v1558
      %1706 = vmatprep.subr.mxu0 %v1567
      %1707 = vmatpush1.msra.mxu0 %v1566
      %1708 = vmatprep.subr.mxu0 %v1575
      %1709 = vmatpush1.msra.mxu0 %v1574
      %1710 = vmatprep.subr.mxu0 0.0
      %1711 = vmatpush1.msra.mxu0 0.0
      %1712 = vmatprep.subr.mxu0 0.0
      %1713 = vmatpush1.msra.mxu0 0.0
      %1714 = vmatprep.subr.mxu0 0.0
      %1715 = vmatpush1.msra.mxu0 0.0
      %1716 = vmatprep.subr.mxu0 0.0
      %1717 = vmatpush1.msra.mxu0 0.0
      %1718 = vmatprep.subr.mxu0 0.0
      %1719 = vmatpush1.msra.mxu0 0.0
      %1720 = vmatprep.mubr.f32.mxu0 %v1583
      %1721 = vmatmul.mubr.f32.gmra.mrb[0].mxu0 %v1363
      %v1722 = vpop.f32.mrb[0].mxu0
      %v1723 = vadd.f32 0.0, %v1722
      %v1724 = vpop.f32.mrb[0].mxu0
      %v1725 = vadd.f32 0.0, %v1724
      %1726 = vdwg.mxu0
      %1727 = vmatprep.subr.mxu0 %v1369
      %1728 = vmatpush1.msra.mxu0 %v1368
      %1729 = vmatprep.subr.mxu0 %v1377
      %1730 = vmatpush1.msra.mxu0 %v1376
      %1731 = vmatprep.subr.mxu0 %v1385
      %1732 = vmatpush1.msra.mxu0 %v1384
      %1733 = vmatprep.subr.mxu0 %v1393
      %1734 = vmatpush1.msra.mxu0 %v1392
      %1735 = vmatprep.subr.mxu0 %v1401
      %1736 = vmatpush1.msra.mxu0 %v1400
      %1737 = vmatprep.subr.mxu0 %v1409
      %1738 = vmatpush1.msra.mxu0 %v1408
      %1739 = vmatprep.subr.mxu0 %v1417
      %1740 = vmatpush1.msra.mxu0 %v1416
      %1741 = vmatprep.subr.mxu0 %v1425
      %1742 = vmatpush1.msra.mxu0 %v1424
      %1743 = vmatprep.subr.mxu0 %v1433
      %1744 = vmatpush1.msra.mxu0 %v1432
      %1745 = vmatprep.subr.mxu0 %v1441
      %1746 = vmatpush1.msra.mxu0 %v1440
      %1747 = vmatprep.subr.mxu0 %v1449
      %1748 = vmatpush1.msra.mxu0 %v1448
      %1749 = vmatprep.subr.mxu0 %v1457
      %1750 = vmatpush1.msra.mxu0 %v1456
      %1751 = vmatprep.subr.mxu0 %v1465
      %1752 = vmatpush1.msra.mxu0 %v1464
      %1753 = vmatprep.subr.mxu0 %v1473
      %1754 = vmatpush1.msra.mxu0 %v1472
      %1755 = vmatprep.subr.mxu0 %v1481
      %1756 = vmatpush1.msra.mxu0 %v1480
      %1757 = vmatprep.subr.mxu0 %v1489
      %1758 = vmatpush1.msra.mxu0 %v1488
      %1759 = vmatprep.subr.mxu0 %v1497
      %1760 = vmatpush1.msra.mxu0 %v1496
      %1761 = vmatprep.subr.mxu0 %v1505
      %1762 = vmatpush1.msra.mxu0 %v1504
      %1763 = vmatprep.subr.mxu0 %v1513
      %1764 = vmatpush1.msra.mxu0 %v1512
      %1765 = vmatprep.subr.mxu0 %v1521
      %1766 = vmatpush1.msra.mxu0 %v1520
      %1767 = vmatprep.subr.mxu0 %v1529
      %1768 = vmatpush1.msra.mxu0 %v1528
      %1769 = vmatprep.subr.mxu0 %v1537
      %1770 = vmatpush1.msra.mxu0 %v1536
      %1771 = vmatprep.subr.mxu0 %v1545
      %1772 = vmatpush1.msra.mxu0 %v1544
      %1773 = vmatprep.subr.mxu0 %v1553
      %1774 = vmatpush1.msra.mxu0 %v1552
      %1775 = vmatprep.subr.mxu0 %v1561
      %1776 = vmatpush1.msra.mxu0 %v1560
      %1777 = vmatprep.subr.mxu0 %v1569
      %1778 = vmatpush1.msra.mxu0 %v1568
      %1779 = vmatprep.subr.mxu0 %v1577
      %1780 = vmatpush1.msra.mxu0 %v1576
      %1781 = vmatprep.subr.mxu0 0.0
      %1782 = vmatpush1.msra.mxu0 0.0
      %1783 = vmatprep.subr.mxu0 0.0
      %1784 = vmatpush1.msra.mxu0 0.0
      %1785 = vmatprep.subr.mxu0 0.0
      %1786 = vmatpush1.msra.mxu0 0.0
      %1787 = vmatprep.subr.mxu0 0.0
      %1788 = vmatpush1.msra.mxu0 0.0
      %1789 = vmatprep.subr.mxu0 0.0
      %1790 = vmatpush1.msra.mxu0 0.0
      %1791 = vmatprep.mubr.f32.mxu0 %v1583
      %1792 = vmatmul.mubr.f32.gmra.mrb[0].mxu0 %v1363
      %v1793 = vpop.f32.mrb[0].mxu0
      %v1794 = vadd.f32 0.0, %v1793
      %v1795 = vpop.f32.mrb[0].mxu0
      %v1796 = vadd.f32 0.0, %v1795
      %1797 = vdwg.mxu0
      %1798 = vmatprep.subr.mxu0 %v1371
      %1799 = vmatpush1.msra.mxu0 %v1370
      %1800 = vmatprep.subr.mxu0 %v1379
      %1801 = vmatpush1.msra.mxu0 %v1378
      %1802 = vmatprep.subr.mxu0 %v1387
      %1803 = vmatpush1.msra.mxu0 %v1386
      %1804 = vmatprep.subr.mxu0 %v1395
      %1805 = vmatpush1.msra.mxu0 %v1394
      %1806 = vmatprep.subr.mxu0 %v1403
      %1807 = vmatpush1.msra.mxu0 %v1402
      %1808 = vmatprep.subr.mxu0 %v1411
      %1809 = vmatpush1.msra.mxu0 %v1410
      %1810 = vmatprep.subr.mxu0 %v1419
      %1811 = vmatpush1.msra.mxu0 %v1418
      %1812 = vmatprep.subr.mxu0 %v1427
      %1813 = vmatpush1.msra.mxu0 %v1426
      %1814 = vmatprep.subr.mxu0 %v1435
      %1815 = vmatpush1.msra.mxu0 %v1434
      %1816 = vmatprep.subr.mxu0 %v1443
      %1817 = vmatpush1.msra.mxu0 %v1442
      %1818 = vmatprep.subr.mxu0 %v1451
      %1819 = vmatpush1.msra.mxu0 %v1450
      %1820 = vmatprep.subr.mxu0 %v1459
      %1821 = vmatpush1.msra.mxu0 %v1458
      %1822 = vmatprep.subr.mxu0 %v1467
      %1823 = vmatpush1.msra.mxu0 %v1466
      %1824 = vmatprep.subr.mxu0 %v1475
      %1825 = vmatpush1.msra.mxu0 %v1474
      %1826 = vmatprep.subr.mxu0 %v1483
      %1827 = vmatpush1.msra.mxu0 %v1482
      %1828 = vmatprep.subr.mxu0 %v1491
      %1829 = vmatpush1.msra.mxu0 %v1490
      %1830 = vmatprep.subr.mxu0 %v1499
      %1831 = vmatpush1.msra.mxu0 %v1498
      %1832 = vmatprep.subr.mxu0 %v1507
      %1833 = vmatpush1.msra.mxu0 %v1506
      %1834 = vmatprep.subr.mxu0 %v1515
      %1835 = vmatpush1.msra.mxu0 %v1514
      %1836 = vmatprep.subr.mxu0 %v1523
      %1837 = vmatpush1.msra.mxu0 %v1522
      %1838 = vmatprep.subr.mxu0 %v1531
      %1839 = vmatpush1.msra.mxu0 %v1530
      %1840 = vmatprep.subr.mxu0 %v1539
      %1841 = vmatpush1.msra.mxu0 %v1538
      %1842 = vmatprep.subr.mxu0 %v1547
      %1843 = vmatpush1.msra.mxu0 %v1546
      %1844 = vmatprep.subr.mxu0 %v1555
      %1845 = vmatpush1.msra.mxu0 %v1554
      %1846 = vmatprep.subr.mxu0 %v1563
      %1847 = vmatpush1.msra.mxu0 %v1562
      %1848 = vmatprep.subr.mxu0 %v1571
      %1849 = vmatpush1.msra.mxu0 %v1570
      %1850 = vmatprep.subr.mxu0 %v1579
      %1851 = vmatpush1.msra.mxu0 %v1578
      %1852 = vmatprep.subr.mxu0 0.0
      %1853 = vmatpush1.msra.mxu0 0.0
      %1854 = vmatprep.subr.mxu0 0.0
      %1855 = vmatpush1.msra.mxu0 0.0
      %1856 = vmatprep.subr.mxu0 0.0
      %1857 = vmatpush1.msra.mxu0 0.0
      %1858 = vmatprep.subr.mxu0 0.0
      %1859 = vmatpush1.msra.mxu0 0.0
      %1860 = vmatprep.subr.mxu0 0.0
      %1861 = vmatpush1.msra.mxu0 0.0
      %1862 = vmatprep.mubr.f32.mxu0 %v1583
      %1863 = vmatmul.mubr.f32.gmra.mrb[0].mxu0 %v1363
      %v1864 = vpop.f32.mrb[0].mxu0
      %v1865 = vadd.f32 0.0, %v1864
      %v1866 = vpop.f32.mrb[0].mxu0
      %v1867 = vadd.f32 0.0, %v1866
      %1868 = vdwg.mxu0
      %v1869 = vld [vmem:[%s2] sm:$0xff]
      %v1871 = vlaneseq
      %v1872 = vshrl.u32 %v1871, 7
      %v1873 = vsub.s32 0, %v1872
      %v1874 = vrot.slane %v1869, %v1873
      %v1875 = vlaneseq
      %v1876 = vshrl.u32 %v1875, 7
      %v1877 = vsub.s32 1, %v1876
      %v1878 = vrot.slane %v1869, %v1877
      %v1879 = vlaneseq
      %v1880 = vshrl.u32 %v1879, 7
      %v1881 = vsub.s32 2, %v1880
      %v1882 = vrot.slane %v1869, %v1881
      %v1883 = vlaneseq
      %v1884 = vshrl.u32 %v1883, 7
      %v1885 = vsub.s32 3, %v1884
      %v1886 = vrot.slane %v1869, %v1885
      %v1887 = vlaneseq
      %v1888 = vshrl.u32 %v1887, 7
      %v1889 = vsub.s32 4, %v1888
      %v1890 = vrot.slane %v1869, %v1889
      %v1891 = vlaneseq
      %v1892 = vshrl.u32 %v1891, 7
      %v1893 = vsub.s32 5, %v1892
      %v1894 = vrot.slane %v1869, %v1893
      %v1895 = vlaneseq
      %v1896 = vshrl.u32 %v1895, 7
      %v1897 = vsub.s32 6, %v1896
      %v1898 = vrot.slane %v1869, %v1897
      %v1899 = vlaneseq
      %v1900 = vshrl.u32 %v1899, 7
      %v1901 = vsub.s32 7, %v1900
      %v1902 = vrot.slane %v1869, %v1901
      %v1911 = vmul.f32 %v1652, %v1874
      %v1912 = vmul.f32 %v1654, %v1878
      %v1913 = vmul.f32 %v1723, %v1882
      %v1914 = vmul.f32 %v1725, %v1886
      %v1915 = vmul.f32 %v1794, %v1890
      %v1916 = vmul.f32 %v1796, %v1894
      %v1917 = vmul.f32 %v1865, %v1898
      %v1918 = vmul.f32 %v1867, %v1902
      %vm1919 = vcmask 1043456
      %v1920 = vsel %vm1919, %v1911, 0.0
      %v1921 = vsel %vm1919, %v1912, 0.0
      %v1922 = vadd.f32 %v1920, %v1921
      %v1923 = vsel %vm1919, %v1913, 0.0
      %v1924 = vadd.f32 %v1922, %v1923
      %v1925 = vsel %vm1919, %v1914, 0.0
      %v1926 = vadd.f32 %v1924, %v1925
      %v1927 = vsel %vm1919, %v1915, 0.0
      %v1928 = vadd.f32 %v1926, %v1927
      %v1929 = vsel %vm1919, %v1916, 0.0
      %v1930 = vadd.f32 %v1928, %v1929
      %v1931 = vsel %vm1919, %v1917, 0.0
      %v1932 = vadd.f32 %v1930, %v1931
      %v1933 = vsel %vm1919, %v1918, 0.0
      %v1934 = vadd.f32 %v1932, %v1933
      %1935 = vadd.xlane.f32.xlu0 %v1934
      %v1936 = vpop.xlane.xlu0 %1935
      %v1937 = vmul.f32 %v1936, 0.001953125
      %v1938 = vsub.f32 %v1652, %v1937
      %v1939 = vsub.f32 %v1654, %v1937
      %v1940 = vsub.f32 %v1723, %v1937
      %v1941 = vsub.f32 %v1725, %v1937
      %v1942 = vsub.f32 %v1794, %v1937
      %v1943 = vsub.f32 %v1796, %v1937
      %v1944 = vsub.f32 %v1865, %v1937
      %v1945 = vsub.f32 %v1867, %v1937
      %v1946 = vmul.f32 %v1938, %v1874
      %v1947 = vmul.f32 %v1939, %v1878
      %v1948 = vmul.f32 %v1940, %v1882
      %v1949 = vmul.f32 %v1941, %v1886
      %v1950 = vmul.f32 %v1942, %v1890
      %v1951 = vmul.f32 %v1943, %v1894
      %v1952 = vmul.f32 %v1944, %v1898
      %v1953 = vmul.f32 %v1945, %v1902
      %v1954 = vmul.f32 %v1946, %v1946
      %v1955 = vmul.f32 %v1947, %v1947
      %v1956 = vmul.f32 %v1948, %v1948
      %v1957 = vmul.f32 %v1949, %v1949
      %v1958 = vmul.f32 %v1950, %v1950
      %v1959 = vmul.f32 %v1951, %v1951
      %v1960 = vmul.f32 %v1952, %v1952
      %v1961 = vmul.f32 %v1953, %v1953
      %v1962 = vsel %vm1919, %v1954, 0.0
      %v1963 = vsel %vm1919, %v1955, 0.0
      %v1964 = vadd.f32 %v1962, %v1963
      %v1965 = vsel %vm1919, %v1956, 0.0
      %v1966 = vadd.f32 %v1964, %v1965
      %v1967 = vsel %vm1919, %v1957, 0.0
      %v1968 = vadd.f32 %v1966, %v1967
      %v1969 = vsel %vm1919, %v1958, 0.0
      %v1970 = vadd.f32 %v1968, %v1969
      %v1971 = vsel %vm1919, %v1959, 0.0
      %v1972 = vadd.f32 %v1970, %v1971
      %v1973 = vsel %vm1919, %v1960, 0.0
      %v1974 = vadd.f32 %v1972, %v1973
      %v1975 = vsel %vm1919, %v1961, 0.0
      %v1976 = vadd.f32 %v1974, %v1975
      %1977 = vadd.xlane.f32.xlu0 %v1976
      %v1978 = vpop.xlane.xlu0 %1977
      %v1979 = vmul.f32 %v1978, 0.001953125
      %v1980 = vadd.f32 %v1979, 1e-05
      %v1981 = vrsqrt.pop %v1980
      %v1982 = vmul.f32 %v1938, %v1981
      %v1983 = vmul.f32 %v1939, %v1981
      %v1984 = vmul.f32 %v1940, %v1981
      %v1985 = vmul.f32 %v1941, %v1981
      %v1986 = vmul.f32 %v1942, %v1981
      %v1987 = vmul.f32 %v1943, %v1981
      %v1988 = vmul.f32 %v1944, %v1981
      %v1989 = vmul.f32 %v1945, %v1981
      %vm1990 = vcmp.ge.f32.partialorder %v1982, 0.0
      %vm1991 = vcmp.ge.f32.partialorder %v1983, 0.0
      %vm1992 = vcmp.ge.f32.partialorder %v1984, 0.0
      %vm1993 = vcmp.ge.f32.partialorder %v1985, 0.0
      %vm1994 = vcmp.ge.f32.partialorder %v1986, 0.0
      %vm1995 = vcmp.ge.f32.partialorder %v1987, 0.0
      %vm1996 = vcmp.ge.f32.partialorder %v1988, 0.0
      %vm1997 = vcmp.ge.f32.partialorder %v1989, 0.0
      %v1998 = vmul.f32 %v1982, 0.2
      %v1999 = vmul.f32 %v1983, 0.2
      %v2000 = vmul.f32 %v1984, 0.2
      %v2001 = vmul.f32 %v1985, 0.2
      %v2002 = vmul.f32 %v1986, 0.2
      %v2003 = vmul.f32 %v1987, 0.2
      %v2004 = vmul.f32 %v1988, 0.2
      %v2005 = vmul.f32 %v1989, 0.2
      %v2006 = vsel %vm1990, %v1982, %v1998
      %v2007 = vsel %vm1991, %v1983, %v1999
      %v2008 = vsel %vm1992, %v1984, %v2000
      %v2009 = vsel %vm1993, %v1985, %v2001
      %v2010 = vsel %vm1994, %v1986, %v2002
      %v2011 = vsel %vm1995, %v1987, %v2003
      %v2012 = vsel %vm1996, %v1988, %v2004
      %v2013 = vsel %vm1997, %v1989, %v2005
      %v2014 = vmul.f32 %v2006, %v1874
      %v2015 = vmul.f32 %v2007, %v1878
      %v2016 = vmul.f32 %v2008, %v1882
      %v2017 = vmul.f32 %v2009, %v1886
      %v2018 = vmul.f32 %v2010, %v1890
      %v2019 = vmul.f32 %v2011, %v1894
      %v2020 = vmul.f32 %v2012, %v1898
      %v2021 = vmul.f32 %v2013, %v1902
      %2022 = vst [vmem:[%s212] sm:$0xf] 0.0
      %v2031 = vcombine.low %v2014, %v2015
      %v2032 = vcombine.low %v2016, %v2017
      %v2033 = vcombine.low %v2018, %v2019
      %v2034 = vcombine.low %v2020, %v2021
      %2039 = vst [vmem:[%s212 + $0x4] sm:$0xff] %v2031
      %2040 = vst [vmem:[%s212 + $0xc] sm:$0xff] %v2032
      %2041 = vst [vmem:[%s212 + $0x14] sm:$0xff] %v2033
      %2042 = vst [vmem:[%s212 + $0x1c] sm:$0xff] %v2034
      %2043 = vst [vmem:[%s212 + $0x24] sm:$0xf] 0.0
      %p2044 = scmp.lt.s32.totalorder %s18, 1
      %s2045 = scalar_select %p2044, %s18, 1
      %p2046 = scmp.lt.s32.totalorder %s19, 0
      %s2047 = scalar_select %p2046, %s19, 0
      %s2048 = smul.addr %s2047, 10
      %s2049 = smul.addr %s2045, 10
      %s2050 = sadd.s32 %s2048, %s2049
      %s2051 = smul.addr %s2050, 4
      %s2052 = scalar_lea.vmem %s3, %s2051
      // Predicated region
      $region37: #{dense_block.3} parent=31 // pred_check
        %p2053 = pneg %p119
      $region38: #{dense_block.3} parent=31 // pred_check_branch
        %2055 = sbr.rel (%p2053) target = $region40
      $region39: #{dense_block.3} parent=31 // pred_region
        _
      $region40: #{dense_block.3} parent=31 // pred_fallthru
        _
    $region32: #{dense_block.3} parent=5 // pred_fallthru
      _
    %p2056 = scmp.le.s32.totalorder 2, %s9
    // Predicated region
    $region41: #{dense_block.3} parent=5 // pred_check
      %p2057 = pneg %p2056
    $region42: #{dense_block.3} parent=5 // pred_check_branch
      %2059 = sbr.rel (%p2057) target = $region44
    $region43: #{dense_block.3} parent=5 // pred_region
      %s2060 = ssub.s32 %s9, 2
      // Predicated region
      $region45: #{dense_block.3} parent=43 // pred_check
        %p2061 = pneg %p125
      $region46: #{dense_block.3} parent=43 // pred_check_branch
        %2063 = sbr.rel (%p2061) target = $region48
      $region47: #{dense_block.3} parent=43 // pred_region
        %p2064 = scmp.lt.s32.totalorder %s20, 1
        %s2065 = scalar_select %p2064, %s20, 1
        %p2066 = scmp.lt.s32.totalorder %s21, 0
        %s2067 = scalar_select %p2066, %s21, 0
        %s2068 = smul.addr %s2067, 10
        %s2069 = smul.addr %s2065, 10
        %s2070 = sadd.s32 %s2068, %s2069
        %s2071 = smul.addr %s2070, 4
        %s2072 = scalar_lea.vmem %s3, %s2071
      $region48: #{dense_block.3} parent=43 // pred_fallthru
        _
    $region44: #{dense_block.3} parent=5 // pred_fallthru
      _
  $region6: #{dense_block.3} parent=0 // loop_footer
    %s13 = sadd.s32 1, %s9
  $region7: #{dense_block.3} parent=0 // loop_footer_branch
    %8 = sbr.rel target = $region3
  $region8: #{dense_block.3} parent=0 // loop_exit
    _

</llo_original>
